<compile_context>
chip_gen: v6e
topology: v6e:2x2x1
jax: 0.10.0
libtpu: 0.0.40
codegen_flags: <defaults>
</compile_context>

<pallas_src>
import functools
import math

import numpy as np
import jax
import jax.numpy as jnp
from jax import lax
from jax.experimental import pallas as pl
from jax.experimental.pallas import tpu as pltpu

_LN_EPS = 1e-6
_BN_EPS = 1e-5


# --------------------------------------------------------------------------
# Fused ConvMod kernel: one (rows = n_img*H*W, C) block per grid step.
# --------------------------------------------------------------------------
def _convmod_kernel(x_ref, yy_ref, xx_ref, g1_ref, b1_ref, g2_ref, b2_ref,
                    w1_ref, b1c_ref, w2e_ref, b2e_ref, wdw_ref, bdw_ref,
                    wv_ref, bv_ref, wproj_ref, bproj_ref, o_ref,
                    *, K, H, W, eps):
    KK = K * K
    pad = (K - 1) // 2
    rows = x_ref.shape[0]

    x = x_ref[...].astype(jnp.float32)                    # (rows, C)
    yy = yy_ref[...]                                      # (rows, C) int32: y
    xx = xx_ref[...]                                      # (rows, C) int32: x

    # ---- LayerNorm (channels_first == per-pixel over the lane axis).
    #      norm1 / norm2 see the same tensor -> share mean / var. ----
    mu = jnp.mean(x, axis=-1, keepdims=True)
    xc = x - mu
    var = jnp.mean(xc * xc, axis=-1, keepdims=True)
    inv = lax.rsqrt(var + eps)
    n1 = xc * inv * g1_ref[...] + b1_ref[...]
    n2 = xc * inv * g2_ref[...] + b2_ref[...]
    n1_bf = n1.astype(jnp.bfloat16)

    def shift_tap(val, oy, ox):
        # val[r] <- val[r + oy*W + ox], zero outside the image ('same' pad).
        # XLU roll + VPU mask; no padded VMEM scratch / unaligned slices.
        off = oy * W + ox
        src = pltpu.roll(val, shift=(-off) % rows, axis=0) if off else val
        conds = []
        if oy < 0:
            conds.append(yy >= -oy)
        elif oy > 0:
            conds.append(yy < H - oy)
        if ox < 0:
            conds.append(xx >= -ox)
        elif ox > 0:
            conds.append(xx < W - ox)
        if conds:
            m = conds[0]
            for c in conds[1:]:
                m = jnp.logical_and(m, c)
            src = jnp.where(m, src, 0.0)
        return src

    # ---- involution weight generation: reduce conv + folded BN + ReLU ----
    h1 = jnp.maximum(
        jnp.dot(n1_bf, w1_ref[...], preferred_element_type=jnp.float32)
        + b1c_ref[...], 0.0)                              # (rows, Cr) f32
    h1_bf = h1.astype(jnp.bfloat16)

    # ---- involution aggregation: the per-tap expand-conv slice is produced
    #      on the MXU inside the loop, so the (rows, K*K*C) tensor is never
    #      live (no vreg spills / VMEM blow-up at larger H, W). ----
    acc = jnp.zeros(x.shape, jnp.float32)
    for t in range(KK):
        oy, ox = t // K - pad, t % K - pad
        wt = (jnp.dot(h1_bf, w2e_ref[t], preferred_element_type=jnp.float32)
              + b2e_ref[t])                               # (rows, C)
        acc = acc + shift_tap(n1, oy, ox) * wt

    # ---- depthwise KxK conv (layer_scale_1 folded into weights/bias) ----
    a = jnp.zeros(x.shape, jnp.float32)
    for t in range(KK):
        oy, ox = t // K - pad, t % K - pad
        a = a + shift_tap(acc, oy, ox) * wdw_ref[t]
    a = a + bdw_ref[...]

    # ---- v branch (LN2 + 1x1 conv, ls2 folded), combine, 1x1 projection ----
    v = (jnp.dot(n2.astype(jnp.bfloat16), wv_ref[...],
                 preferred_element_type=jnp.float32) + bv_ref[...])
    xa = (a * v).astype(jnp.bfloat16)
    y = (jnp.dot(xa, wproj_ref[...], preferred_element_type=jnp.float32)
         + bproj_ref[...])
    o_ref[...] = y.astype(o_ref.dtype)


def _pick_imgs_per_block(B, HW, row_target=512):
    """Images per grid block: ~row_target rows, but keep >=2 blocks (v7x has
    2 TensorCores sharing 'parallel' grid axes) and 8-row alignment."""
    candidates = []
    for n in range(1, B + 1):
        if B % n:
            continue
        rows, blocks = n * HW, B // n
        if rows % 8 != 0 and blocks != 1:
            continue
        if blocks < min(2, B):
            continue
        if n > 1 and rows > row_target:
            continue
        candidates.append(n)
    return max(candidates) if candidates else B


# --------------------------------------------------------------------------
# ConvMod forward (host wrapper: folds, layout, one pallas_call)
# --------------------------------------------------------------------------
def conv_mod_forward(x_nchw, p, K, G):
    B, C, H, W = x_nchw.shape
    GC = C // G                      # involution group_channels (=16)
    KK = K * K
    HW = H * W
    M = B * HW
    Cr = p['w1'].shape[1]

    # NCHW -> NHWC (channels on the 128-lane axis), flattened to (M, C).
    x2d = jnp.transpose(x_nchw, (0, 2, 3, 1)).reshape(M, C)

    # ---- host-side parameter folds (tiny, done once) ----
    bn_scale = 1.0 / math.sqrt(1.0 + _BN_EPS)   # BN eval, default running stats
    w1f = (p['w1'] * bn_scale).astype(jnp.bfloat16)
    b1f = (p['b1c'] * bn_scale).reshape(1, Cr)
    wvf = (p['wv'] * p['ls2'][None, :]).astype(jnp.bfloat16)   # ls2 into v conv
    bvf = (p['bv'] * p['ls2']).reshape(1, C)
    wdwf = p['wdw'] * p['ls1'][None, :]                        # ls1 into dw conv
    bdwf = (p['bdw'] * p['ls1']).reshape(1, C)
    wprojf = p['wproj'].astype(jnp.bfloat16)

    # Fold the involution expand conv (Cr -> G*K*K, group-major g*KK + t) and
    # the group->channel broadcast into a (KK, Cr, C) tensor so each tap's
    # per-channel weights come straight off one small MXU matmul.
    c_idx = np.arange(C)
    col_map = (c_idx // GC)[None, :] * KK + np.arange(KK)[:, None]     # (KK, C)
    w2e = jnp.transpose(p['w2'][:, col_map], (1, 0, 2)).astype(jnp.bfloat16)
    b2e = p['b2c'][col_map]                                            # (KK, C)

    n_img = _pick_imgs_per_block(B, HW)
    rows = n_img * HW
    grid = (B // n_img,)

    # Per-row (y, x) coordinates for the boundary masks (identical for every
    # block -> resident in VMEM, DMA'd once).
    yv = np.repeat(np.arange(H, dtype=np.int32), W)
    xv = np.tile(np.arange(W, dtype=np.int32), H)
    yy = jnp.asarray(np.ascontiguousarray(
        np.broadcast_to(np.tile(yv, n_img)[:, None], (rows, C))))
    xx = jnp.asarray(np.ascontiguousarray(
        np.broadcast_to(np.tile(xv, n_img)[:, None], (rows, C))))

    rep = lambda i: (0, 0)
    rep3 = lambda i: (0, 0, 0)
    kern = functools.partial(_convmod_kernel, K=K, H=H, W=W, eps=_LN_EPS)

    out2d = pl.pallas_call(
        kern,
        out_shape=jax.ShapeDtypeStruct((M, C), x2d.dtype),
        grid=grid,
        in_specs=[
            pl.BlockSpec((rows, C), lambda i: (i, 0)),    # x      (per block)
            pl.BlockSpec((rows, C), rep),                 # yy coords
            pl.BlockSpec((rows, C), rep),                 # xx coords
            pl.BlockSpec((1, C), rep),                    # ln1 gamma
            pl.BlockSpec((1, C), rep),                    # ln1 beta
            pl.BlockSpec((1, C), rep),                    # ln2 gamma
            pl.BlockSpec((1, C), rep),                    # ln2 beta
            pl.BlockSpec((C, Cr), rep),                   # w1 (BN folded, bf16)
            pl.BlockSpec((1, Cr), rep),                   # b1 (BN folded)
            pl.BlockSpec((KK, Cr, C), rep3),              # expand conv, per tap
            pl.BlockSpec((KK, C), rep),                   # expand bias, per tap
            pl.BlockSpec((KK, C), rep),                   # dw weights * ls1
            pl.BlockSpec((1, C), rep),                    # dw bias * ls1
            pl.BlockSpec((C, C), rep),                    # wv * ls2 (bf16)
            pl.BlockSpec((1, C), rep),                    # bv * ls2
            pl.BlockSpec((C, C), rep),                    # wproj (bf16)
            pl.BlockSpec((1, C), rep),                    # bproj
        ],
        out_specs=pl.BlockSpec((rows, C), lambda i: (i, 0)),
        compiler_params=pltpu.CompilerParams(
            dimension_semantics=("parallel",)),
    )(x2d, yy, xx,
      p['g1'].reshape(1, C), p['b1'].reshape(1, C),
      p['g2'].reshape(1, C), p['b2'].reshape(1, C),
      w1f, b1f, w2e, b2e, wdwf, bdwf, wvf, bvf, wprojf,
      p['bproj'].reshape(1, C))

    return jnp.transpose(out2d.reshape(B, H, W, C), (0, 3, 1, 2))   # NCHW


# --------------------------------------------------------------------------
# Pure-JAX reference (NCHW, fp32, HIGHEST precision)
# --------------------------------------------------------------------------
def reference_forward(x, p, K, G):
    B, C, H, W = x.shape
    GC = C // G
    pad = (K - 1) // 2
    hi = lax.Precision.HIGHEST

    def ln_cf(t, g, b):
        u = jnp.mean(t, axis=1, keepdims=True)
        s = jnp.mean((t - u) ** 2, axis=1, keepdims=True)
        th = (t - u) / jnp.sqrt(s + _LN_EPS)
        return g[None, :, None, None] * th + b[None, :, None, None]

    n1 = ln_cf(x, p['g1'], p['b1'])
    n2 = ln_cf(x, p['g2'], p['b2'])

    v = jnp.einsum('bchw,cd->bdhw', n2, p['wv'], precision=hi) \
        + p['bv'][None, :, None, None]
    v = p['ls2'][None, :, None, None] * v

    bn_scale = 1.0 / math.sqrt(1.0 + _BN_EPS)
    h1 = jnp.einsum('bchw,cd->bdhw', n1, p['w1'], precision=hi) * bn_scale \
        + (p['b1c'] * bn_scale)[None, :, None, None]
    h1 = jnp.maximum(h1, 0.0)
    wgen = jnp.einsum('bchw,cd->bdhw', h1, p['w2'], precision=hi) \
        + p['b2c'][None, :, None, None]                # (B, G*K*K, H, W)

    n1p = jnp.pad(n1, ((0, 0), (0, 0), (pad, pad), (pad, pad)))
    patches = jnp.stack([n1p[:, :, dy:dy + H, dx:dx + W]
                         for dy in range(K) for dx in range(K)], axis=2)
    wgen_r = wgen.reshape(B, G, K * K, H, W)
    patches_r = patches.reshape(B, G, GC, K * K, H, W)
    inv_out = (wgen_r[:, :, None] * patches_r).sum(axis=3).reshape(B, C, H, W)

    inv_p = jnp.pad(inv_out, ((0, 0), (0, 0), (pad, pad), (pad, pad)))
    dw = jnp.zeros_like(inv_out)
    for dy in range(K):
        for dx in range(K):
            dw = dw + inv_p[:, :, dy:dy + H, dx:dx + W] \
                * p['wdw'][dy * K + dx][None, :, None, None]
    dw = dw + p['bdw'][None, :, None, None]
    a = p['ls1'][None, :, None, None] * dw

    xo = a * v
    out = jnp.einsum('bchw,cd->bdhw', xo, p['wproj'], precision=hi) \
        + p['bproj'][None, :, None, None]
    return out


# --------------------------------------------------------------------------
if __name__ == "__main__":
    B, C, H, W = 2, 64, 8, 8         # dim=64, spatial 8x8
    K = 3                            # kernel_size
    G = C // 16                      # involution groups (group_channels=16)
    Cr = C // 4                      # involution reduction channels

    key = jax.random.PRNGKey(0)
    ks = jax.random.split(key, 16)

    def nrm(k, shape, std):
        return (std * jax.random.normal(k, shape)).astype(jnp.float32)

    params = {
        # LayerNorm (channels_first) weights/biases (perturbed from the 1/0
        # init so a norm1/norm2 mix-up would be caught by the check).
        'g1': 1.0 + nrm(ks[11], (C,), 0.1), 'b1': nrm(ks[12], (C,), 0.05),
        'g2': 1.0 + nrm(ks[13], (C,), 0.1), 'b2': nrm(ks[14], (C,), 0.05),
        # 1x1 convs stored as (Cin, Cout)
        'wv': nrm(ks[0], (C, C), math.sqrt(2.0 / C)),
        'bv': nrm(ks[1], (C,), 0.02),
        'wproj': nrm(ks[2], (C, C), math.sqrt(2.0 / C)),
        'bproj': nrm(ks[3], (C,), 0.02),
        # involution: conv1 (C -> Cr), conv2 (Cr -> G*K*K)
        'w1': nrm(ks[4], (C, Cr), math.sqrt(2.0 / Cr)),
        'b1c': nrm(ks[5], (Cr,), 0.02),
        'w2': nrm(ks[6], (Cr, G * K * K), math.sqrt(2.0 / (G * K * K))),
        'b2c': nrm(ks[7], (G * K * K,), 0.02),
        # depthwise KxK conv weights laid out as (K*K, C)
        'wdw': nrm(ks[8], (K * K, C), math.sqrt(2.0 / (K * K))),
        'bdw': nrm(ks[9], (C,), 0.02),
        # layer scales (init_value = 0.01)
        'ls1': 0.01 * jnp.ones((C,), jnp.float32),
        'ls2': 0.01 * jnp.ones((C,), jnp.float32),
    }

    x = jax.random.normal(ks[10], (B, C, H, W), jnp.float32)

    fwd = jax.jit(conv_mod_forward, static_argnums=(2, 3))
    out = jax.block_until_ready(fwd(x, params, K, G))
    assert out.shape == (B, C, H, W)

    ref = reference_forward(x, params, K, G)
    # Kernel uses bf16 matmul operands with f32 accumulation (native MXU
    # rate), so compare against the fp32/HIGHEST reference at bf16 tolerance.
    np.testing.assert_allclose(np.asarray(out), np.asarray(ref),
                               rtol=5e-2, atol=1e-3)

    print("KERNEL_OK")
</pallas_src>

<mosaic_0001>
module attributes {stable_mosaic.version = 11 : i64} {
  func.func @_convmod_kernel(%arg0: i32, %arg1: memref<64x64xf32, #tpu.memory_space<vmem>>, %arg2: memref<64x64xi32, #tpu.memory_space<vmem>>, %arg3: memref<64x64xi32, #tpu.memory_space<vmem>>, %arg4: memref<1x64xf32, #tpu.memory_space<vmem>>, %arg5: memref<1x64xf32, #tpu.memory_space<vmem>>, %arg6: memref<1x64xf32, #tpu.memory_space<vmem>>, %arg7: memref<1x64xf32, #tpu.memory_space<vmem>>, %arg8: memref<64x16xbf16, #tpu.memory_space<vmem>>, %arg9: memref<1x16xf32, #tpu.memory_space<vmem>>, %arg10: memref<9x16x64xbf16, #tpu.memory_space<vmem>>, %arg11: memref<9x64xf32, #tpu.memory_space<vmem>>, %arg12: memref<9x64xf32, #tpu.memory_space<vmem>>, %arg13: memref<1x64xf32, #tpu.memory_space<vmem>>, %arg14: memref<64x64xbf16, #tpu.memory_space<vmem>>, %arg15: memref<1x64xf32, #tpu.memory_space<vmem>>, %arg16: memref<64x64xbf16, #tpu.memory_space<vmem>>, %arg17: memref<1x64xf32, #tpu.memory_space<vmem>>, %arg18: memref<64x64xf32, #tpu.memory_space<vmem>>) attributes {dimension_semantics = [#tpu.dimension_semantics<parallel>], iteration_bounds = array<i64: 2>, scalar_prefetch = 0 : i64, scratch_operands = 0 : i64, tpu.core_type = #tpu.core_type<tc>, window_params = [{transform_indices = @transform_0, window_bounds = array<i64: 64, 64>}, {pipeline_mode = #tpu.pipeline_mode<synchronous>, transform_indices = @transform_1, window_bounds = array<i64: 64, 64>}, {pipeline_mode = #tpu.pipeline_mode<synchronous>, transform_indices = @transform_2, window_bounds = array<i64: 64, 64>}, {pipeline_mode = #tpu.pipeline_mode<synchronous>, transform_indices = @transform_3, window_bounds = array<i64: 1, 64>}, {pipeline_mode = #tpu.pipeline_mode<synchronous>, transform_indices = @transform_4, window_bounds = array<i64: 1, 64>}, {pipeline_mode = #tpu.pipeline_mode<synchronous>, transform_indices = @transform_5, window_bounds = array<i64: 1, 64>}, {pipeline_mode = #tpu.pipeline_mode<synchronous>, transform_indices = @transform_6, window_bounds = array<i64: 1, 64>}, {pipeline_mode = #tpu.pipeline_mode<synchronous>, transform_indices = @transform_7, window_bounds = array<i64: 64, 16>}, {pipeline_mode = #tpu.pipeline_mode<synchronous>, transform_indices = @transform_8, window_bounds = array<i64: 1, 16>}, {pipeline_mode = #tpu.pipeline_mode<synchronous>, transform_indices = @transform_9, window_bounds = array<i64: 9, 16, 64>}, {pipeline_mode = #tpu.pipeline_mode<synchronous>, transform_indices = @transform_10, window_bounds = array<i64: 9, 64>}, {pipeline_mode = #tpu.pipeline_mode<synchronous>, transform_indices = @transform_11, window_bounds = array<i64: 9, 64>}, {pipeline_mode = #tpu.pipeline_mode<synchronous>, transform_indices = @transform_12, window_bounds = array<i64: 1, 64>}, {pipeline_mode = #tpu.pipeline_mode<synchronous>, transform_indices = @transform_13, window_bounds = array<i64: 64, 64>}, {pipeline_mode = #tpu.pipeline_mode<synchronous>, transform_indices = @transform_14, window_bounds = array<i64: 1, 64>}, {pipeline_mode = #tpu.pipeline_mode<synchronous>, transform_indices = @transform_15, window_bounds = array<i64: 64, 64>}, {pipeline_mode = #tpu.pipeline_mode<synchronous>, transform_indices = @transform_16, window_bounds = array<i64: 1, 64>}, {transform_indices = @transform_17, window_bounds = array<i64: 64, 64>}]} {
    %c0 = arith.constant 0 : index
    %c0_0 = arith.constant 0 : index
    %0 = vector.load %arg1[%c0, %c0_0] : memref<64x64xf32, #tpu.memory_space<vmem>>, vector<64x64xf32>
    %c0_1 = arith.constant 0 : index
    %c0_2 = arith.constant 0 : index
    %1 = vector.load %arg2[%c0_1, %c0_2] : memref<64x64xi32, #tpu.memory_space<vmem>>, vector<64x64xi32>
    %c0_3 = arith.constant 0 : index
    %c0_4 = arith.constant 0 : index
    %2 = vector.load %arg3[%c0_3, %c0_4] : memref<64x64xi32, #tpu.memory_space<vmem>>, vector<64x64xi32>
    %cst = arith.constant dense<0.000000e+00> : vector<64xf32>
    %3 = vector.multi_reduction <add>, %0, %cst [1] : vector<64x64xf32> to vector<64xf32>
    %4 = vector.shape_cast %3 : vector<64xf32> to vector<64x1xf32>
    %cst_5 = arith.constant 6.400000e+01 : f32
    %5 = vector.broadcast %cst_5 : f32 to vector<64x1xf32>
    %6 = arith.divf %4, %5 : vector<64x1xf32>
    %7 = vector.broadcast %6 : vector<64x1xf32> to vector<64x64xf32>
    %8 = arith.subf %0, %7 : vector<64x64xf32>
    %9 = arith.mulf %8, %8 : vector<64x64xf32>
    %cst_6 = arith.constant dense<0.000000e+00> : vector<64xf32>
    %10 = vector.multi_reduction <add>, %9, %cst_6 [1] : vector<64x64xf32> to vector<64xf32>
    %11 = vector.shape_cast %10 : vector<64xf32> to vector<64x1xf32>
    %cst_7 = arith.constant 6.400000e+01 : f32
    %12 = vector.broadcast %cst_7 : f32 to vector<64x1xf32>
    %13 = arith.divf %11, %12 : vector<64x1xf32>
    %cst_8 = arith.constant 9.99999997E-7 : f32
    %14 = vector.broadcast %cst_8 : f32 to vector<64x1xf32>
    %15 = arith.addf %13, %14 : vector<64x1xf32>
    %16 = math.rsqrt %15 : vector<64x1xf32>
    %17 = vector.broadcast %16 : vector<64x1xf32> to vector<64x64xf32>
    %18 = arith.mulf %8, %17 : vector<64x64xf32>
    %c0_9 = arith.constant 0 : index
    %c0_10 = arith.constant 0 : index
    %19 = vector.load %arg4[%c0_9, %c0_10] : memref<1x64xf32, #tpu.memory_space<vmem>>, vector<1x64xf32>
    %20 = vector.broadcast %19 : vector<1x64xf32> to vector<64x64xf32>
    %21 = arith.mulf %18, %20 : vector<64x64xf32>
    %c0_11 = arith.constant 0 : index
    %c0_12 = arith.constant 0 : index
    %22 = vector.load %arg5[%c0_11, %c0_12] : memref<1x64xf32, #tpu.memory_space<vmem>>, vector<1x64xf32>
    %23 = vector.broadcast %22 : vector<1x64xf32> to vector<64x64xf32>
    %24 = arith.addf %21, %23 : vector<64x64xf32>
    %25 = vector.broadcast %16 : vector<64x1xf32> to vector<64x64xf32>
    %26 = arith.mulf %8, %25 : vector<64x64xf32>
    %c0_13 = arith.constant 0 : index
    %c0_14 = arith.constant 0 : index
    %27 = vector.load %arg6[%c0_13, %c0_14] : memref<1x64xf32, #tpu.memory_space<vmem>>, vector<1x64xf32>
    %28 = vector.broadcast %27 : vector<1x64xf32> to vector<64x64xf32>
    %29 = arith.mulf %26, %28 : vector<64x64xf32>
    %c0_15 = arith.constant 0 : index
    %c0_16 = arith.constant 0 : index
    %30 = vector.load %arg7[%c0_15, %c0_16] : memref<1x64xf32, #tpu.memory_space<vmem>>, vector<1x64xf32>
    %31 = vector.broadcast %30 : vector<1x64xf32> to vector<64x64xf32>
    %32 = arith.addf %29, %31 : vector<64x64xf32>
    %33 = arith.truncf %24 : vector<64x64xf32> to vector<64x64xbf16>
    %c0_17 = arith.constant 0 : index
    %c0_18 = arith.constant 0 : index
    %34 = vector.load %arg8[%c0_17, %c0_18] : memref<64x16xbf16, #tpu.memory_space<vmem>>, vector<64x16xbf16>
    %cst_19 = arith.constant dense<0.000000e+00> : vector<64x16xf32>
    %35 = tpu.matmul %33, %34, %cst_19 {dimension_numbers = #tpu.dot_dimension_numbers<[1], [0], [0], [1], [0, 0, 1, 1], [], []>} : vector<64x64xbf16>, vector<64x16xbf16>, vector<64x16xf32> -> vector<64x16xf32>
    %c0_20 = arith.constant 0 : index
    %c0_21 = arith.constant 0 : index
    %36 = vector.load %arg9[%c0_20, %c0_21] : memref<1x16xf32, #tpu.memory_space<vmem>>, vector<1x16xf32>
    %37 = vector.broadcast %36 : vector<1x16xf32> to vector<64x16xf32>
    %38 = arith.addf %35, %37 : vector<64x16xf32>
    %cst_22 = arith.constant 0.000000e+00 : f32
    %39 = vector.broadcast %cst_22 : f32 to vector<64x16xf32>
    %40 = arith.maximumf %38, %39 : vector<64x16xf32>
    %41 = arith.truncf %40 : vector<64x16xf32> to vector<64x16xbf16>
    %cst_23 = arith.constant 0.000000e+00 : f32
    %42 = vector.broadcast %cst_23 : f32 to vector<64x64xf32>
    %c0_24 = arith.constant 0 : index
    %c0_25 = arith.constant 0 : index
    %c0_26 = arith.constant 0 : index
    %43 = vector.load %arg10[%c0_24, %c0_25, %c0_26] : memref<9x16x64xbf16, #tpu.memory_space<vmem>>, vector<1x16x64xbf16>
    %44 = vector.shape_cast %43 : vector<1x16x64xbf16> to vector<16x64xbf16>
    %cst_27 = arith.constant dense<0.000000e+00> : vector<64x64xf32>
    %45 = tpu.matmul %41, %44, %cst_27 {dimension_numbers = #tpu.dot_dimension_numbers<[1], [0], [0], [1], [0, 0, 1, 1], [], []>} : vector<64x16xbf16>, vector<16x64xbf16>, vector<64x64xf32> -> vector<64x64xf32>
    %c0_28 = arith.constant 0 : index
    %c0_29 = arith.constant 0 : index
    %46 = vector.load %arg11[%c0_28, %c0_29] : memref<9x64xf32, #tpu.memory_space<vmem>>, vector<1x64xf32>
    %47 = vector.shape_cast %46 : vector<1x64xf32> to vector<64xf32>
    %48 = vector.shape_cast %47 : vector<64xf32> to vector<1x64xf32>
    %49 = vector.broadcast %48 : vector<1x64xf32> to vector<64x64xf32>
    %50 = arith.addf %45, %49 : vector<64x64xf32>
    %c9_i32 = arith.constant 9 : i32
    %51 = tpu.dynamic_rotate %24 by %c9_i32 dim 0 : vector<64x64xf32>, i32 -> vector<64x64xf32>
    %c1_i32 = arith.constant 1 : i32
    %52 = vector.broadcast %c1_i32 : i32 to vector<64x64xi32>
    %53 = arith.cmpi sge, %1, %52 : vector<64x64xi32>
    %c1_i32_30 = arith.constant 1 : i32
    %54 = vector.broadcast %c1_i32_30 : i32 to vector<64x64xi32>
    %55 = arith.cmpi sge, %2, %54 : vector<64x64xi32>
    %56 = arith.andi %53, %55 : vector<64x64xi1>
    %cst_31 = arith.constant 0.000000e+00 : f32
    %57 = vector.broadcast %cst_31 : f32 to vector<64x64xf32>
    %58 = arith.select %56, %51, %57 : vector<64x64xi1>, vector<64x64xf32>
    %59 = arith.mulf %58, %50 : vector<64x64xf32>
    %60 = arith.addf %42, %59 : vector<64x64xf32>
    %c1 = arith.constant 1 : index
    %c0_32 = arith.constant 0 : index
    %c0_33 = arith.constant 0 : index
    %61 = vector.load %arg10[%c1, %c0_32, %c0_33] : memref<9x16x64xbf16, #tpu.memory_space<vmem>>, vector<1x16x64xbf16>
    %62 = vector.shape_cast %61 : vector<1x16x64xbf16> to vector<16x64xbf16>
    %cst_34 = arith.constant dense<0.000000e+00> : vector<64x64xf32>
    %63 = tpu.matmul %41, %62, %cst_34 {dimension_numbers = #tpu.dot_dimension_numbers<[1], [0], [0], [1], [0, 0, 1, 1], [], []>} : vector<64x16xbf16>, vector<16x64xbf16>, vector<64x64xf32> -> vector<64x64xf32>
    %c1_35 = arith.constant 1 : index
    %c0_36 = arith.constant 0 : index
    %64 = vector.load %arg11[%c1_35, %c0_36] : memref<9x64xf32, #tpu.memory_space<vmem>>, vector<1x64xf32>
    %65 = vector.shape_cast %64 : vector<1x64xf32> to vector<64xf32>
    %66 = vector.shape_cast %65 : vector<64xf32> to vector<1x64xf32>
    %67 = vector.broadcast %66 : vector<1x64xf32> to vector<64x64xf32>
    %68 = arith.addf %63, %67 : vector<64x64xf32>
    %c8_i32 = arith.constant 8 : i32
    %69 = tpu.dynamic_rotate %24 by %c8_i32 dim 0 : vector<64x64xf32>, i32 -> vector<64x64xf32>
    %c1_i32_37 = arith.constant 1 : i32
    %70 = vector.broadcast %c1_i32_37 : i32 to vector<64x64xi32>
    %71 = arith.cmpi sge, %1, %70 : vector<64x64xi32>
    %cst_38 = arith.constant 0.000000e+00 : f32
    %72 = vector.broadcast %cst_38 : f32 to vector<64x64xf32>
    %73 = arith.select %71, %69, %72 : vector<64x64xi1>, vector<64x64xf32>
    %74 = arith.mulf %73, %68 : vector<64x64xf32>
    %75 = arith.addf %60, %74 : vector<64x64xf32>
    %c2 = arith.constant 2 : index
    %c0_39 = arith.constant 0 : index
    %c0_40 = arith.constant 0 : index
    %76 = vector.load %arg10[%c2, %c0_39, %c0_40] : memref<9x16x64xbf16, #tpu.memory_space<vmem>>, vector<1x16x64xbf16>
    %77 = vector.shape_cast %76 : vector<1x16x64xbf16> to vector<16x64xbf16>
    %cst_41 = arith.constant dense<0.000000e+00> : vector<64x64xf32>
    %78 = tpu.matmul %41, %77, %cst_41 {dimension_numbers = #tpu.dot_dimension_numbers<[1], [0], [0], [1], [0, 0, 1, 1], [], []>} : vector<64x16xbf16>, vector<16x64xbf16>, vector<64x64xf32> -> vector<64x64xf32>
    %c2_42 = arith.constant 2 : index
    %c0_43 = arith.constant 0 : index
    %79 = vector.load %arg11[%c2_42, %c0_43] : memref<9x64xf32, #tpu.memory_space<vmem>>, vector<1x64xf32>
    %80 = vector.shape_cast %79 : vector<1x64xf32> to vector<64xf32>
    %81 = vector.shape_cast %80 : vector<64xf32> to vector<1x64xf32>
    %82 = vector.broadcast %81 : vector<1x64xf32> to vector<64x64xf32>
    %83 = arith.addf %78, %82 : vector<64x64xf32>
    %c7_i32 = arith.constant 7 : i32
    %84 = tpu.dynamic_rotate %24 by %c7_i32 dim 0 : vector<64x64xf32>, i32 -> vector<64x64xf32>
    %c1_i32_44 = arith.constant 1 : i32
    %85 = vector.broadcast %c1_i32_44 : i32 to vector<64x64xi32>
    %86 = arith.cmpi sge, %1, %85 : vector<64x64xi32>
    %c7_i32_45 = arith.constant 7 : i32
    %87 = vector.broadcast %c7_i32_45 : i32 to vector<64x64xi32>
    %88 = arith.cmpi slt, %2, %87 : vector<64x64xi32>
    %89 = arith.andi %86, %88 : vector<64x64xi1>
    %cst_46 = arith.constant 0.000000e+00 : f32
    %90 = vector.broadcast %cst_46 : f32 to vector<64x64xf32>
    %91 = arith.select %89, %84, %90 : vector<64x64xi1>, vector<64x64xf32>
    %92 = arith.mulf %91, %83 : vector<64x64xf32>
    %93 = arith.addf %75, %92 : vector<64x64xf32>
    %c3 = arith.constant 3 : index
    %c0_47 = arith.constant 0 : index
    %c0_48 = arith.constant 0 : index
    %94 = vector.load %arg10[%c3, %c0_47, %c0_48] : memref<9x16x64xbf16, #tpu.memory_space<vmem>>, vector<1x16x64xbf16>
    %95 = vector.shape_cast %94 : vector<1x16x64xbf16> to vector<16x64xbf16>
    %cst_49 = arith.constant dense<0.000000e+00> : vector<64x64xf32>
    %96 = tpu.matmul %41, %95, %cst_49 {dimension_numbers = #tpu.dot_dimension_numbers<[1], [0], [0], [1], [0, 0, 1, 1], [], []>} : vector<64x16xbf16>, vector<16x64xbf16>, vector<64x64xf32> -> vector<64x64xf32>
    %c3_50 = arith.constant 3 : index
    %c0_51 = arith.constant 0 : index
    %97 = vector.load %arg11[%c3_50, %c0_51] : memref<9x64xf32, #tpu.memory_space<vmem>>, vector<1x64xf32>
    %98 = vector.shape_cast %97 : vector<1x64xf32> to vector<64xf32>
    %99 = vector.shape_cast %98 : vector<64xf32> to vector<1x64xf32>
    %100 = vector.broadcast %99 : vector<1x64xf32> to vector<64x64xf32>
    %101 = arith.addf %96, %100 : vector<64x64xf32>
    %c1_i32_52 = arith.constant 1 : i32
    %102 = tpu.dynamic_rotate %24 by %c1_i32_52 dim 0 : vector<64x64xf32>, i32 -> vector<64x64xf32>
    %c1_i32_53 = arith.constant 1 : i32
    %103 = vector.broadcast %c1_i32_53 : i32 to vector<64x64xi32>
    %104 = arith.cmpi sge, %2, %103 : vector<64x64xi32>
    %cst_54 = arith.constant 0.000000e+00 : f32
    %105 = vector.broadcast %cst_54 : f32 to vector<64x64xf32>
    %106 = arith.select %104, %102, %105 : vector<64x64xi1>, vector<64x64xf32>
    %107 = arith.mulf %106, %101 : vector<64x64xf32>
    %108 = arith.addf %93, %107 : vector<64x64xf32>
    %c4 = arith.constant 4 : index
    %c0_55 = arith.constant 0 : index
    %c0_56 = arith.constant 0 : index
    %109 = vector.load %arg10[%c4, %c0_55, %c0_56] : memref<9x16x64xbf16, #tpu.memory_space<vmem>>, vector<1x16x64xbf16>
    %110 = vector.shape_cast %109 : vector<1x16x64xbf16> to vector<16x64xbf16>
    %cst_57 = arith.constant dense<0.000000e+00> : vector<64x64xf32>
    %111 = tpu.matmul %41, %110, %cst_57 {dimension_numbers = #tpu.dot_dimension_numbers<[1], [0], [0], [1], [0, 0, 1, 1], [], []>} : vector<64x16xbf16>, vector<16x64xbf16>, vector<64x64xf32> -> vector<64x64xf32>
    %c4_58 = arith.constant 4 : index
    %c0_59 = arith.constant 0 : index
    %112 = vector.load %arg11[%c4_58, %c0_59] : memref<9x64xf32, #tpu.memory_space<vmem>>, vector<1x64xf32>
    %113 = vector.shape_cast %112 : vector<1x64xf32> to vector<64xf32>
    %114 = vector.shape_cast %113 : vector<64xf32> to vector<1x64xf32>
    %115 = vector.broadcast %114 : vector<1x64xf32> to vector<64x64xf32>
    %116 = arith.addf %111, %115 : vector<64x64xf32>
    %117 = arith.mulf %24, %116 : vector<64x64xf32>
    %118 = arith.addf %108, %117 : vector<64x64xf32>
    %c5 = arith.constant 5 : index
    %c0_60 = arith.constant 0 : index
    %c0_61 = arith.constant 0 : index
    %119 = vector.load %arg10[%c5, %c0_60, %c0_61] : memref<9x16x64xbf16, #tpu.memory_space<vmem>>, vector<1x16x64xbf16>
    %120 = vector.shape_cast %119 : vector<1x16x64xbf16> to vector<16x64xbf16>
    %cst_62 = arith.constant dense<0.000000e+00> : vector<64x64xf32>
    %121 = tpu.matmul %41, %120, %cst_62 {dimension_numbers = #tpu.dot_dimension_numbers<[1], [0], [0], [1], [0, 0, 1, 1], [], []>} : vector<64x16xbf16>, vector<16x64xbf16>, vector<64x64xf32> -> vector<64x64xf32>
    %c5_63 = arith.constant 5 : index
    %c0_64 = arith.constant 0 : index
    %122 = vector.load %arg11[%c5_63, %c0_64] : memref<9x64xf32, #tpu.memory_space<vmem>>, vector<1x64xf32>
    %123 = vector.shape_cast %122 : vector<1x64xf32> to vector<64xf32>
    %124 = vector.shape_cast %123 : vector<64xf32> to vector<1x64xf32>
    %125 = vector.broadcast %124 : vector<1x64xf32> to vector<64x64xf32>
    %126 = arith.addf %121, %125 : vector<64x64xf32>
    %c63_i32 = arith.constant 63 : i32
    %127 = tpu.dynamic_rotate %24 by %c63_i32 dim 0 : vector<64x64xf32>, i32 -> vector<64x64xf32>
    %c7_i32_65 = arith.constant 7 : i32
    %128 = vector.broadcast %c7_i32_65 : i32 to vector<64x64xi32>
    %129 = arith.cmpi slt, %2, %128 : vector<64x64xi32>
    %cst_66 = arith.constant 0.000000e+00 : f32
    %130 = vector.broadcast %cst_66 : f32 to vector<64x64xf32>
    %131 = arith.select %129, %127, %130 : vector<64x64xi1>, vector<64x64xf32>
    %132 = arith.mulf %131, %126 : vector<64x64xf32>
    %133 = arith.addf %118, %132 : vector<64x64xf32>
    %c6 = arith.constant 6 : index
    %c0_67 = arith.constant 0 : index
    %c0_68 = arith.constant 0 : index
    %134 = vector.load %arg10[%c6, %c0_67, %c0_68] : memref<9x16x64xbf16, #tpu.memory_space<vmem>>, vector<1x16x64xbf16>
    %135 = vector.shape_cast %134 : vector<1x16x64xbf16> to vector<16x64xbf16>
    %cst_69 = arith.constant dense<0.000000e+00> : vector<64x64xf32>
    %136 = tpu.matmul %41, %135, %cst_69 {dimension_numbers = #tpu.dot_dimension_numbers<[1], [0], [0], [1], [0, 0, 1, 1], [], []>} : vector<64x16xbf16>, vector<16x64xbf16>, vector<64x64xf32> -> vector<64x64xf32>
    %c6_70 = arith.constant 6 : index
    %c0_71 = arith.constant 0 : index
    %137 = vector.load %arg11[%c6_70, %c0_71] : memref<9x64xf32, #tpu.memory_space<vmem>>, vector<1x64xf32>
    %138 = vector.shape_cast %137 : vector<1x64xf32> to vector<64xf32>
    %139 = vector.shape_cast %138 : vector<64xf32> to vector<1x64xf32>
    %140 = vector.broadcast %139 : vector<1x64xf32> to vector<64x64xf32>
    %141 = arith.addf %136, %140 : vector<64x64xf32>
    %c57_i32 = arith.constant 57 : i32
    %142 = tpu.dynamic_rotate %24 by %c57_i32 dim 0 : vector<64x64xf32>, i32 -> vector<64x64xf32>
    %c7_i32_72 = arith.constant 7 : i32
    %143 = vector.broadcast %c7_i32_72 : i32 to vector<64x64xi32>
    %144 = arith.cmpi slt, %1, %143 : vector<64x64xi32>
    %c1_i32_73 = arith.constant 1 : i32
    %145 = vector.broadcast %c1_i32_73 : i32 to vector<64x64xi32>
    %146 = arith.cmpi sge, %2, %145 : vector<64x64xi32>
    %147 = arith.andi %144, %146 : vector<64x64xi1>
    %cst_74 = arith.constant 0.000000e+00 : f32
    %148 = vector.broadcast %cst_74 : f32 to vector<64x64xf32>
    %149 = arith.select %147, %142, %148 : vector<64x64xi1>, vector<64x64xf32>
    %150 = arith.mulf %149, %141 : vector<64x64xf32>
    %151 = arith.addf %133, %150 : vector<64x64xf32>
    %c7 = arith.constant 7 : index
    %c0_75 = arith.constant 0 : index
    %c0_76 = arith.constant 0 : index
    %152 = vector.load %arg10[%c7, %c0_75, %c0_76] : memref<9x16x64xbf16, #tpu.memory_space<vmem>>, vector<1x16x64xbf16>
    %153 = vector.shape_cast %152 : vector<1x16x64xbf16> to vector<16x64xbf16>
    %cst_77 = arith.constant dense<0.000000e+00> : vector<64x64xf32>
    %154 = tpu.matmul %41, %153, %cst_77 {dimension_numbers = #tpu.dot_dimension_numbers<[1], [0], [0], [1], [0, 0, 1, 1], [], []>} : vector<64x16xbf16>, vector<16x64xbf16>, vector<64x64xf32> -> vector<64x64xf32>
    %c7_78 = arith.constant 7 : index
    %c0_79 = arith.constant 0 : index
    %155 = vector.load %arg11[%c7_78, %c0_79] : memref<9x64xf32, #tpu.memory_space<vmem>>, vector<1x64xf32>
    %156 = vector.shape_cast %155 : vector<1x64xf32> to vector<64xf32>
    %157 = vector.shape_cast %156 : vector<64xf32> to vector<1x64xf32>
    %158 = vector.broadcast %157 : vector<1x64xf32> to vector<64x64xf32>
    %159 = arith.addf %154, %158 : vector<64x64xf32>
    %c56_i32 = arith.constant 56 : i32
    %160 = tpu.dynamic_rotate %24 by %c56_i32 dim 0 : vector<64x64xf32>, i32 -> vector<64x64xf32>
    %c7_i32_80 = arith.constant 7 : i32
    %161 = vector.broadcast %c7_i32_80 : i32 to vector<64x64xi32>
    %162 = arith.cmpi slt, %1, %161 : vector<64x64xi32>
    %cst_81 = arith.constant 0.000000e+00 : f32
    %163 = vector.broadcast %cst_81 : f32 to vector<64x64xf32>
    %164 = arith.select %162, %160, %163 : vector<64x64xi1>, vector<64x64xf32>
    %165 = arith.mulf %164, %159 : vector<64x64xf32>
    %166 = arith.addf %151, %165 : vector<64x64xf32>
    %c8 = arith.constant 8 : index
    %c0_82 = arith.constant 0 : index
    %c0_83 = arith.constant 0 : index
    %167 = vector.load %arg10[%c8, %c0_82, %c0_83] : memref<9x16x64xbf16, #tpu.memory_space<vmem>>, vector<1x16x64xbf16>
    %168 = vector.shape_cast %167 : vector<1x16x64xbf16> to vector<16x64xbf16>
    %cst_84 = arith.constant dense<0.000000e+00> : vector<64x64xf32>
    %169 = tpu.matmul %41, %168, %cst_84 {dimension_numbers = #tpu.dot_dimension_numbers<[1], [0], [0], [1], [0, 0, 1, 1], [], []>} : vector<64x16xbf16>, vector<16x64xbf16>, vector<64x64xf32> -> vector<64x64xf32>
    %c8_85 = arith.constant 8 : index
    %c0_86 = arith.constant 0 : index
    %170 = vector.load %arg11[%c8_85, %c0_86] : memref<9x64xf32, #tpu.memory_space<vmem>>, vector<1x64xf32>
    %171 = vector.shape_cast %170 : vector<1x64xf32> to vector<64xf32>
    %172 = vector.shape_cast %171 : vector<64xf32> to vector<1x64xf32>
    %173 = vector.broadcast %172 : vector<1x64xf32> to vector<64x64xf32>
    %174 = arith.addf %169, %173 : vector<64x64xf32>
    %c55_i32 = arith.constant 55 : i32
    %175 = tpu.dynamic_rotate %24 by %c55_i32 dim 0 : vector<64x64xf32>, i32 -> vector<64x64xf32>
    %c7_i32_87 = arith.constant 7 : i32
    %176 = vector.broadcast %c7_i32_87 : i32 to vector<64x64xi32>
    %177 = arith.cmpi slt, %1, %176 : vector<64x64xi32>
    %c7_i32_88 = arith.constant 7 : i32
    %178 = vector.broadcast %c7_i32_88 : i32 to vector<64x64xi32>
    %179 = arith.cmpi slt, %2, %178 : vector<64x64xi32>
    %180 = arith.andi %177, %179 : vector<64x64xi1>
    %cst_89 = arith.constant 0.000000e+00 : f32
    %181 = vector.broadcast %cst_89 : f32 to vector<64x64xf32>
    %182 = arith.select %180, %175, %181 : vector<64x64xi1>, vector<64x64xf32>
    %183 = arith.mulf %182, %174 : vector<64x64xf32>
    %184 = arith.addf %166, %183 : vector<64x64xf32>
    %cst_90 = arith.constant 0.000000e+00 : f32
    %185 = vector.broadcast %cst_90 : f32 to vector<64x64xf32>
    %c9_i32_91 = arith.constant 9 : i32
    %186 = tpu.dynamic_rotate %184 by %c9_i32_91 dim 0 : vector<64x64xf32>, i32 -> vector<64x64xf32>
    %c1_i32_92 = arith.constant 1 : i32
    %187 = vector.broadcast %c1_i32_92 : i32 to vector<64x64xi32>
    %188 = arith.cmpi sge, %1, %187 : vector<64x64xi32>
    %c1_i32_93 = arith.constant 1 : i32
    %189 = vector.broadcast %c1_i32_93 : i32 to vector<64x64xi32>
    %190 = arith.cmpi sge, %2, %189 : vector<64x64xi32>
    %191 = arith.andi %188, %190 : vector<64x64xi1>
    %cst_94 = arith.constant 0.000000e+00 : f32
    %192 = vector.broadcast %cst_94 : f32 to vector<64x64xf32>
    %193 = arith.select %191, %186, %192 : vector<64x64xi1>, vector<64x64xf32>
    %c0_95 = arith.constant 0 : index
    %c0_96 = arith.constant 0 : index
    %194 = vector.load %arg12[%c0_95, %c0_96] : memref<9x64xf32, #tpu.memory_space<vmem>>, vector<1x64xf32>
    %195 = vector.shape_cast %194 : vector<1x64xf32> to vector<64xf32>
    %196 = vector.shape_cast %195 : vector<64xf32> to vector<1x64xf32>
    %197 = vector.broadcast %196 : vector<1x64xf32> to vector<64x64xf32>
    %198 = arith.mulf %193, %197 : vector<64x64xf32>
    %199 = arith.addf %185, %198 : vector<64x64xf32>
    %c8_i32_97 = arith.constant 8 : i32
    %200 = tpu.dynamic_rotate %184 by %c8_i32_97 dim 0 : vector<64x64xf32>, i32 -> vector<64x64xf32>
    %c1_i32_98 = arith.constant 1 : i32
    %201 = vector.broadcast %c1_i32_98 : i32 to vector<64x64xi32>
    %202 = arith.cmpi sge, %1, %201 : vector<64x64xi32>
    %cst_99 = arith.constant 0.000000e+00 : f32
    %203 = vector.broadcast %cst_99 : f32 to vector<64x64xf32>
    %204 = arith.select %202, %200, %203 : vector<64x64xi1>, vector<64x64xf32>
    %c1_100 = arith.constant 1 : index
    %c0_101 = arith.constant 0 : index
    %205 = vector.load %arg12[%c1_100, %c0_101] : memref<9x64xf32, #tpu.memory_space<vmem>>, vector<1x64xf32>
    %206 = vector.shape_cast %205 : vector<1x64xf32> to vector<64xf32>
    %207 = vector.shape_cast %206 : vector<64xf32> to vector<1x64xf32>
    %208 = vector.broadcast %207 : vector<1x64xf32> to vector<64x64xf32>
    %209 = arith.mulf %204, %208 : vector<64x64xf32>
    %210 = arith.addf %199, %209 : vector<64x64xf32>
    %c7_i32_102 = arith.constant 7 : i32
    %211 = tpu.dynamic_rotate %184 by %c7_i32_102 dim 0 : vector<64x64xf32>, i32 -> vector<64x64xf32>
    %c1_i32_103 = arith.constant 1 : i32
    %212 = vector.broadcast %c1_i32_103 : i32 to vector<64x64xi32>
    %213 = arith.cmpi sge, %1, %212 : vector<64x64xi32>
    %c7_i32_104 = arith.constant 7 : i32
    %214 = vector.broadcast %c7_i32_104 : i32 to vector<64x64xi32>
    %215 = arith.cmpi slt, %2, %214 : vector<64x64xi32>
    %216 = arith.andi %213, %215 : vector<64x64xi1>
    %cst_105 = arith.constant 0.000000e+00 : f32
    %217 = vector.broadcast %cst_105 : f32 to vector<64x64xf32>
    %218 = arith.select %216, %211, %217 : vector<64x64xi1>, vector<64x64xf32>
    %c2_106 = arith.constant 2 : index
    %c0_107 = arith.constant 0 : index
    %219 = vector.load %arg12[%c2_106, %c0_107] : memref<9x64xf32, #tpu.memory_space<vmem>>, vector<1x64xf32>
    %220 = vector.shape_cast %219 : vector<1x64xf32> to vector<64xf32>
    %221 = vector.shape_cast %220 : vector<64xf32> to vector<1x64xf32>
    %222 = vector.broadcast %221 : vector<1x64xf32> to vector<64x64xf32>
    %223 = arith.mulf %218, %222 : vector<64x64xf32>
    %224 = arith.addf %210, %223 : vector<64x64xf32>
    %c1_i32_108 = arith.constant 1 : i32
    %225 = tpu.dynamic_rotate %184 by %c1_i32_108 dim 0 : vector<64x64xf32>, i32 -> vector<64x64xf32>
    %c1_i32_109 = arith.constant 1 : i32
    %226 = vector.broadcast %c1_i32_109 : i32 to vector<64x64xi32>
    %227 = arith.cmpi sge, %2, %226 : vector<64x64xi32>
    %cst_110 = arith.constant 0.000000e+00 : f32
    %228 = vector.broadcast %cst_110 : f32 to vector<64x64xf32>
    %229 = arith.select %227, %225, %228 : vector<64x64xi1>, vector<64x64xf32>
    %c3_111 = arith.constant 3 : index
    %c0_112 = arith.constant 0 : index
    %230 = vector.load %arg12[%c3_111, %c0_112] : memref<9x64xf32, #tpu.memory_space<vmem>>, vector<1x64xf32>
    %231 = vector.shape_cast %230 : vector<1x64xf32> to vector<64xf32>
    %232 = vector.shape_cast %231 : vector<64xf32> to vector<1x64xf32>
    %233 = vector.broadcast %232 : vector<1x64xf32> to vector<64x64xf32>
    %234 = arith.mulf %229, %233 : vector<64x64xf32>
    %235 = arith.addf %224, %234 : vector<64x64xf32>
    %c4_113 = arith.constant 4 : index
    %c0_114 = arith.constant 0 : index
    %236 = vector.load %arg12[%c4_113, %c0_114] : memref<9x64xf32, #tpu.memory_space<vmem>>, vector<1x64xf32>
    %237 = vector.shape_cast %236 : vector<1x64xf32> to vector<64xf32>
    %238 = vector.shape_cast %237 : vector<64xf32> to vector<1x64xf32>
    %239 = vector.broadcast %238 : vector<1x64xf32> to vector<64x64xf32>
    %240 = arith.mulf %184, %239 : vector<64x64xf32>
    %241 = arith.addf %235, %240 : vector<64x64xf32>
    %c63_i32_115 = arith.constant 63 : i32
    %242 = tpu.dynamic_rotate %184 by %c63_i32_115 dim 0 : vector<64x64xf32>, i32 -> vector<64x64xf32>
    %c7_i32_116 = arith.constant 7 : i32
    %243 = vector.broadcast %c7_i32_116 : i32 to vector<64x64xi32>
    %244 = arith.cmpi slt, %2, %243 : vector<64x64xi32>
    %cst_117 = arith.constant 0.000000e+00 : f32
    %245 = vector.broadcast %cst_117 : f32 to vector<64x64xf32>
    %246 = arith.select %244, %242, %245 : vector<64x64xi1>, vector<64x64xf32>
    %c5_118 = arith.constant 5 : index
    %c0_119 = arith.constant 0 : index
    %247 = vector.load %arg12[%c5_118, %c0_119] : memref<9x64xf32, #tpu.memory_space<vmem>>, vector<1x64xf32>
    %248 = vector.shape_cast %247 : vector<1x64xf32> to vector<64xf32>
    %249 = vector.shape_cast %248 : vector<64xf32> to vector<1x64xf32>
    %250 = vector.broadcast %249 : vector<1x64xf32> to vector<64x64xf32>
    %251 = arith.mulf %246, %250 : vector<64x64xf32>
    %252 = arith.addf %241, %251 : vector<64x64xf32>
    %c57_i32_120 = arith.constant 57 : i32
    %253 = tpu.dynamic_rotate %184 by %c57_i32_120 dim 0 : vector<64x64xf32>, i32 -> vector<64x64xf32>
    %c7_i32_121 = arith.constant 7 : i32
    %254 = vector.broadcast %c7_i32_121 : i32 to vector<64x64xi32>
    %255 = arith.cmpi slt, %1, %254 : vector<64x64xi32>
    %c1_i32_122 = arith.constant 1 : i32
    %256 = vector.broadcast %c1_i32_122 : i32 to vector<64x64xi32>
    %257 = arith.cmpi sge, %2, %256 : vector<64x64xi32>
    %258 = arith.andi %255, %257 : vector<64x64xi1>
    %cst_123 = arith.constant 0.000000e+00 : f32
    %259 = vector.broadcast %cst_123 : f32 to vector<64x64xf32>
    %260 = arith.select %258, %253, %259 : vector<64x64xi1>, vector<64x64xf32>
    %c6_124 = arith.constant 6 : index
    %c0_125 = arith.constant 0 : index
    %261 = vector.load %arg12[%c6_124, %c0_125] : memref<9x64xf32, #tpu.memory_space<vmem>>, vector<1x64xf32>
    %262 = vector.shape_cast %261 : vector<1x64xf32> to vector<64xf32>
    %263 = vector.shape_cast %262 : vector<64xf32> to vector<1x64xf32>
    %264 = vector.broadcast %263 : vector<1x64xf32> to vector<64x64xf32>
    %265 = arith.mulf %260, %264 : vector<64x64xf32>
    %266 = arith.addf %252, %265 : vector<64x64xf32>
    %c56_i32_126 = arith.constant 56 : i32
    %267 = tpu.dynamic_rotate %184 by %c56_i32_126 dim 0 : vector<64x64xf32>, i32 -> vector<64x64xf32>
    %c7_i32_127 = arith.constant 7 : i32
    %268 = vector.broadcast %c7_i32_127 : i32 to vector<64x64xi32>
    %269 = arith.cmpi slt, %1, %268 : vector<64x64xi32>
    %cst_128 = arith.constant 0.000000e+00 : f32
    %270 = vector.broadcast %cst_128 : f32 to vector<64x64xf32>
    %271 = arith.select %269, %267, %270 : vector<64x64xi1>, vector<64x64xf32>
    %c7_129 = arith.constant 7 : index
    %c0_130 = arith.constant 0 : index
    %272 = vector.load %arg12[%c7_129, %c0_130] : memref<9x64xf32, #tpu.memory_space<vmem>>, vector<1x64xf32>
    %273 = vector.shape_cast %272 : vector<1x64xf32> to vector<64xf32>
    %274 = vector.shape_cast %273 : vector<64xf32> to vector<1x64xf32>
    %275 = vector.broadcast %274 : vector<1x64xf32> to vector<64x64xf32>
    %276 = arith.mulf %271, %275 : vector<64x64xf32>
    %277 = arith.addf %266, %276 : vector<64x64xf32>
    %c55_i32_131 = arith.constant 55 : i32
    %278 = tpu.dynamic_rotate %184 by %c55_i32_131 dim 0 : vector<64x64xf32>, i32 -> vector<64x64xf32>
    %c7_i32_132 = arith.constant 7 : i32
    %279 = vector.broadcast %c7_i32_132 : i32 to vector<64x64xi32>
    %280 = arith.cmpi slt, %1, %279 : vector<64x64xi32>
    %c7_i32_133 = arith.constant 7 : i32
    %281 = vector.broadcast %c7_i32_133 : i32 to vector<64x64xi32>
    %282 = arith.cmpi slt, %2, %281 : vector<64x64xi32>
    %283 = arith.andi %280, %282 : vector<64x64xi1>
    %cst_134 = arith.constant 0.000000e+00 : f32
    %284 = vector.broadcast %cst_134 : f32 to vector<64x64xf32>
    %285 = arith.select %283, %278, %284 : vector<64x64xi1>, vector<64x64xf32>
    %c8_135 = arith.constant 8 : index
    %c0_136 = arith.constant 0 : index
    %286 = vector.load %arg12[%c8_135, %c0_136] : memref<9x64xf32, #tpu.memory_space<vmem>>, vector<1x64xf32>
    %287 = vector.shape_cast %286 : vector<1x64xf32> to vector<64xf32>
    %288 = vector.shape_cast %287 : vector<64xf32> to vector<1x64xf32>
    %289 = vector.broadcast %288 : vector<1x64xf32> to vector<64x64xf32>
    %290 = arith.mulf %285, %289 : vector<64x64xf32>
    %291 = arith.addf %277, %290 : vector<64x64xf32>
    %c0_137 = arith.constant 0 : index
    %c0_138 = arith.constant 0 : index
    %292 = vector.load %arg13[%c0_137, %c0_138] : memref<1x64xf32, #tpu.memory_space<vmem>>, vector<1x64xf32>
    %293 = vector.broadcast %292 : vector<1x64xf32> to vector<64x64xf32>
    %294 = arith.addf %291, %293 : vector<64x64xf32>
    %295 = arith.truncf %32 : vector<64x64xf32> to vector<64x64xbf16>
    %c0_139 = arith.constant 0 : index
    %c0_140 = arith.constant 0 : index
    %296 = vector.load %arg14[%c0_139, %c0_140] : memref<64x64xbf16, #tpu.memory_space<vmem>>, vector<64x64xbf16>
    %cst_141 = arith.constant dense<0.000000e+00> : vector<64x64xf32>
    %297 = tpu.matmul %295, %296, %cst_141 {dimension_numbers = #tpu.dot_dimension_numbers<[1], [0], [0], [1], [0, 0, 1, 1], [], []>} : vector<64x64xbf16>, vector<64x64xbf16>, vector<64x64xf32> -> vector<64x64xf32>
    %c0_142 = arith.constant 0 : index
    %c0_143 = arith.constant 0 : index
    %298 = vector.load %arg15[%c0_142, %c0_143] : memref<1x64xf32, #tpu.memory_space<vmem>>, vector<1x64xf32>
    %299 = vector.broadcast %298 : vector<1x64xf32> to vector<64x64xf32>
    %300 = arith.addf %297, %299 : vector<64x64xf32>
    %301 = arith.mulf %294, %300 : vector<64x64xf32>
    %302 = arith.truncf %301 : vector<64x64xf32> to vector<64x64xbf16>
    %c0_144 = arith.constant 0 : index
    %c0_145 = arith.constant 0 : index
    %303 = vector.load %arg16[%c0_144, %c0_145] : memref<64x64xbf16, #tpu.memory_space<vmem>>, vector<64x64xbf16>
    %cst_146 = arith.constant dense<0.000000e+00> : vector<64x64xf32>
    %304 = tpu.matmul %302, %303, %cst_146 {dimension_numbers = #tpu.dot_dimension_numbers<[1], [0], [0], [1], [0, 0, 1, 1], [], []>} : vector<64x64xbf16>, vector<64x64xbf16>, vector<64x64xf32> -> vector<64x64xf32>
    %c0_147 = arith.constant 0 : index
    %c0_148 = arith.constant 0 : index
    %305 = vector.load %arg17[%c0_147, %c0_148] : memref<1x64xf32, #tpu.memory_space<vmem>>, vector<1x64xf32>
    %306 = vector.broadcast %305 : vector<1x64xf32> to vector<64x64xf32>
    %307 = arith.addf %304, %306 : vector<64x64xf32>
    %c0_149 = arith.constant 0 : index
    %c0_150 = arith.constant 0 : index
    %308 = vector.load %arg18[%c0_149, %c0_150] : memref<64x64xf32, #tpu.memory_space<vmem>>, vector<64x64xf32>
    tpu.vector_store %arg18[%c0_149, %c0_150], %307 {strides = array<i32>} : memref<64x64xf32, #tpu.memory_space<vmem>>, vector<64x64xf32>,
    return
  }
  func.func @transform_0(%arg0: i32) -> (i32, i32) {
    %c0_i32 = arith.constant 0 : i32
    %c0_i32_0 = arith.constant 0 : i32
    return %arg0, %c0_i32 : i32, i32
  }
  func.func @transform_1(%arg0: i32) -> (i32, i32) {
    %c0_i32 = arith.constant 0 : i32
    %c0_i32_0 = arith.constant 0 : i32
    %c0_i32_1 = arith.constant 0 : i32
    return %c0_i32, %c0_i32_0 : i32, i32
  }
  func.func @transform_2(%arg0: i32) -> (i32, i32) {
    %c0_i32 = arith.constant 0 : i32
    %c0_i32_0 = arith.constant 0 : i32
    %c0_i32_1 = arith.constant 0 : i32
    return %c0_i32, %c0_i32_0 : i32, i32
  }
  func.func @transform_3(%arg0: i32) -> (i32, i32) {
    %c0_i32 = arith.constant 0 : i32
    %c0_i32_0 = arith.constant 0 : i32
    %c0_i32_1 = arith.constant 0 : i32
    return %c0_i32, %c0_i32_0 : i32, i32
  }
  func.func @transform_4(%arg0: i32) -> (i32, i32) {
    %c0_i32 = arith.constant 0 : i32
    %c0_i32_0 = arith.constant 0 : i32
    %c0_i32_1 = arith.constant 0 : i32
    return %c0_i32, %c0_i32_0 : i32, i32
  }
  func.func @transform_5(%arg0: i32) -> (i32, i32) {
    %c0_i32 = arith.constant 0 : i32
    %c0_i32_0 = arith.constant 0 : i32
    %c0_i32_1 = arith.constant 0 : i32
    return %c0_i32, %c0_i32_0 : i32, i32
  }
  func.func @transform_6(%arg0: i32) -> (i32, i32) {
    %c0_i32 = arith.constant 0 : i32
    %c0_i32_0 = arith.constant 0 : i32
    %c0_i32_1 = arith.constant 0 : i32
    return %c0_i32, %c0_i32_0 : i32, i32
  }
  func.func @transform_7(%arg0: i32) -> (i32, i32) {
    %c0_i32 = arith.constant 0 : i32
    %c0_i32_0 = arith.constant 0 : i32
    %c0_i32_1 = arith.constant 0 : i32
    return %c0_i32, %c0_i32_0 : i32, i32
  }
  func.func @transform_8(%arg0: i32) -> (i32, i32) {
    %c0_i32 = arith.constant 0 : i32
    %c0_i32_0 = arith.constant 0 : i32
    %c0_i32_1 = arith.constant 0 : i32
    return %c0_i32, %c0_i32_0 : i32, i32
  }
  func.func @transform_9(%arg0: i32) -> (i32, i32, i32) {
    %c0_i32 = arith.constant 0 : i32
    %c0_i32_0 = arith.constant 0 : i32
    %c0_i32_1 = arith.constant 0 : i32
    %c0_i32_2 = arith.constant 0 : i32
    return %c0_i32, %c0_i32_0, %c0_i32_1 : i32, i32, i32
  }
  func.func @transform_10(%arg0: i32) -> (i32, i32) {
    %c0_i32 = arith.constant 0 : i32
    %c0_i32_0 = arith.constant 0 : i32
    %c0_i32_1 = arith.constant 0 : i32
    return %c0_i32, %c0_i32_0 : i32, i32
  }
  func.func @transform_11(%arg0: i32) -> (i32, i32) {
    %c0_i32 = arith.constant 0 : i32
    %c0_i32_0 = arith.constant 0 : i32
    %c0_i32_1 = arith.constant 0 : i32
    return %c0_i32, %c0_i32_0 : i32, i32
  }
  func.func @transform_12(%arg0: i32) -> (i32, i32) {
    %c0_i32 = arith.constant 0 : i32
    %c0_i32_0 = arith.constant 0 : i32
    %c0_i32_1 = arith.constant 0 : i32
    return %c0_i32, %c0_i32_0 : i32, i32
  }
  func.func @transform_13(%arg0: i32) -> (i32, i32) {
    %c0_i32 = arith.constant 0 : i32
    %c0_i32_0 = arith.constant 0 : i32
    %c0_i32_1 = arith.constant 0 : i32
    return %c0_i32, %c0_i32_0 : i32, i32
  }
  func.func @transform_14(%arg0: i32) -> (i32, i32) {
    %c0_i32 = arith.constant 0 : i32
    %c0_i32_0 = arith.constant 0 : i32
    %c0_i32_1 = arith.constant 0 : i32
    return %c0_i32, %c0_i32_0 : i32, i32
  }
  func.func @transform_15(%arg0: i32) -> (i32, i32) {
    %c0_i32 = arith.constant 0 : i32
    %c0_i32_0 = arith.constant 0 : i32
    %c0_i32_1 = arith.constant 0 : i32
    return %c0_i32, %c0_i32_0 : i32, i32
  }
  func.func @transform_16(%arg0: i32) -> (i32, i32) {
    %c0_i32 = arith.constant 0 : i32
    %c0_i32_0 = arith.constant 0 : i32
    %c0_i32_1 = arith.constant 0 : i32
    return %c0_i32, %c0_i32_0 : i32, i32
  }
  func.func @transform_17(%arg0: i32) -> (i32, i32) {
    %c0_i32 = arith.constant 0 : i32
    %c0_i32_0 = arith.constant 0 : i32
    return %arg0, %c0_i32 : i32, i32
  }
}

</mosaic_0001>

<llo_original>
// kernel: conv_mod_forward.1
$region0: #{conv_mod_forward.1}
  #allocation0 [shape = 'u32[]', space=smem, size = 0x4, offset = 0x4, fixed_abs, tag = 'smem constant byte address 0x4 - core index']
  #allocation1 [shape = 'u32[144,128]{1,0:T(1,128)}', space=vmem, size = 0x12000, scoped, tag = 'internal scratch']
  %s0 = inlined_call_operand.vmem [shape: f32[128,64], index: 0, kind: input, shape index: {}]
  %s1 = inlined_call_operand.vmem [shape: s32[64,64], index: 1, kind: input, shape index: {}]
  %s2 = inlined_call_operand.vmem [shape: s32[64,64], index: 2, kind: input, shape index: {}]
  %s3 = inlined_call_operand.vmem [shape: f32[1,64], index: 3, kind: input, shape index: {}]
  %s4 = inlined_call_operand.vmem [shape: f32[1,64], index: 4, kind: input, shape index: {}]
  %s5 = inlined_call_operand.vmem [shape: f32[1,64], index: 5, kind: input, shape index: {}]
  %s6 = inlined_call_operand.vmem [shape: f32[1,64], index: 6, kind: input, shape index: {}]
  %s7 = inlined_call_operand.vmem [shape: bf16[64,16], index: 7, kind: input, shape index: {}]
  %s8 = inlined_call_operand.vmem [shape: f32[1,16], index: 8, kind: input, shape index: {}]
  %s9 = inlined_call_operand.vmem [shape: bf16[9,16,64], index: 9, kind: input, shape index: {}]
  %s10 = inlined_call_operand.vmem [shape: f32[9,64], index: 10, kind: input, shape index: {}]
  %s11 = inlined_call_operand.vmem [shape: f32[9,64], index: 11, kind: input, shape index: {}]
  %s12 = inlined_call_operand.vmem [shape: f32[1,64], index: 12, kind: input, shape index: {}]
  %s13 = inlined_call_operand.vmem [shape: bf16[64,64], index: 13, kind: input, shape index: {}]
  %s14 = inlined_call_operand.vmem [shape: f32[1,64], index: 14, kind: input, shape index: {}]
  %s15 = inlined_call_operand.vmem [shape: bf16[64,64], index: 15, kind: input, shape index: {}]
  %s16 = inlined_call_operand.vmem [shape: f32[1,64], index: 16, kind: input, shape index: {}]
  %s17 = inlined_call_operand.hbm [shape: f32[128,64], index: 17, kind: output, shape index: {}]
  %s18 = sld [smem:[#allocation0]]
  $region101: #{conv_mod_forward.1} parent=0
    _
  %s20 = ssub.s32 1, %s18
  %s21 = scalar_select 0, %s20, %s18
  $region1: #{conv_mod_forward.1} parent=0
    #allocation2 [shape = 'u8[65536]{0}', space=vmem, size = 0x10000, scoped, tag = 'output window, operand 0']
    #allocation3 [shape = 's32[2]{0}', space=sflag, size = 0x8, scoped, tag = 'scoped memory for conv_mod_forward.1']
    %22 = vsyncpa [#allocation3], 0
    %s23 = scalar_lea.sflag [#allocation3], 1
    %24 = vsyncpa %s23, 0
    loop: start=0, step=1, limit=4
    $region2: #{conv_mod_forward.1} parent=1 // loop_pre_header
      _
    $region3: #{conv_mod_forward.1} parent=1 // loop_header
      %s26 = sphi 0, %s30
      %p27 = scmp.ge.s32.totalorder %s26, 4
      %s36 = sphi 0, %s38
      %s39 = sphi 0, %s36
      %s40 = sphi 0, %s39
      %s56 = sphi 0, %s40
      %s60 = sphi 0, %s60
      %s62 = sphi 0, %s60
      %s63 = sphi 0, %s62
      %s77 = sphi 0, %s63
      %s81 = sphi 0, %s81
      %s83 = sphi 0, %s81
      %s84 = sphi 0, %s83
      %s98 = sphi 0, %s84
      %s102 = sphi 0, %s102
      %s104 = sphi 0, %s102
      %s105 = sphi 0, %s104
      %s119 = sphi 0, %s105
      %s123 = sphi 0, %s123
      %s125 = sphi 0, %s123
      %s126 = sphi 0, %s125
      %s140 = sphi 0, %s126
      %s144 = sphi 0, %s144
      %s146 = sphi 0, %s144
      %s147 = sphi 0, %s146
      %s161 = sphi 0, %s147
      %s165 = sphi 0, %s165
      %s167 = sphi 0, %s165
      %s168 = sphi 0, %s167
      %s182 = sphi 0, %s168
      %s186 = sphi 0, %s186
      %s188 = sphi 0, %s186
      %s189 = sphi 0, %s188
      %s203 = sphi 0, %s189
      %s207 = sphi 0, %s207
      %s209 = sphi 0, %s207
      %s210 = sphi 0, %s209
      %s224 = sphi 0, %s210
      %s228 = sphi 0, %s228
      %s230 = sphi 0, %s228
      %s231 = sphi 0, %s230
      %s245 = sphi 0, %s231
      %s249 = sphi 0, %s249
      %s251 = sphi 0, %s249
      %s252 = sphi 0, %s251
      %s266 = sphi 0, %s252
      %s270 = sphi 0, %s270
      %s272 = sphi 0, %s270
      %s273 = sphi 0, %s272
      %s287 = sphi 0, %s273
      %s291 = sphi 0, %s291
      %s293 = sphi 0, %s291
      %s294 = sphi 0, %s293
      %s308 = sphi 0, %s294
      %s312 = sphi 0, %s312
      %s314 = sphi 0, %s312
      %s315 = sphi 0, %s314
      %s329 = sphi 0, %s315
      %s333 = sphi 0, %s333
      %s335 = sphi 0, %s333
      %s336 = sphi 0, %s335
      %s350 = sphi 0, %s336
      %s354 = sphi 0, %s354
      %s356 = sphi 0, %s354
      %s357 = sphi 0, %s356
      %s371 = sphi 0, %s357
      %s375 = sphi 0, %s375
      %s377 = sphi 0, %s375
      %s378 = sphi 0, %s377
      %s392 = sphi 0, %s378
      %s398 = sphi 0, %s400
      %s401 = sphi 0, %s398
      %s402 = sphi 0, %s401
      %s418 = sphi 0, %s402
    $region4: #{conv_mod_forward.1} parent=1 // loop_header_branch
      %29 = sbr.rel (%p27) target = $region8
    $region5: #{conv_mod_forward.1} parent=1 // loop_body
      %s31 = ssub.s32 %s26, 1
      %s32 = ssub.s32 %s26, 2
      %s33 = sadd.s32 %s26, 1
      %s34 = ssub.s32 %s26, %s33
      %p35 = scmp.eq.s32.totalorder %s34, 0
      %s37 = sadd.s32 %s36, 1
      %s38 = scalar_select %p35, %s36, %s37
      %p41 = pneg %p35
      %p42 = scmp.eq.s32.totalorder %s26, 1
      %p43 = por %p41, %p42
      %p44 = scmp.ne.s32.totalorder %s36, %s39
      %p45 = scmp.eq.s32.totalorder %s26, 0
      %p46 = por %p44, %p45
      %p47 = scmp.ne.s32.totalorder %s36, %s39
      %p48 = scmp.eq.s32.totalorder %s31, 1
      %p49 = por %p47, %p48
      %p50 = scmp.ne.s32.totalorder %s39, %s40
      %p51 = scmp.eq.s32.totalorder %s31, 0
      %p52 = por %p50, %p51
      %p53 = scmp.ne.s32.totalorder %s39, %s40
      %p54 = scmp.eq.s32.totalorder %s32, 1
      %p55 = por %p53, %p54
      %p57 = scmp.ne.s32.totalorder %s40, %s56
      %p58 = scmp.eq.s32.totalorder %s32, 0
      %p59 = por %p57, %p58
      %s61 = sadd.s32 %s60, 1
      %p64 = scmp.eq.s32.totalorder %s26, 1
      %p65 = scmp.ne.s32.totalorder %s60, %s62
      %p66 = scmp.eq.s32.totalorder %s26, 0
      %p67 = por %p65, %p66
      %p68 = scmp.ne.s32.totalorder %s60, %s62
      %p69 = scmp.eq.s32.totalorder %s31, 1
      %p70 = por %p68, %p69
      %p71 = scmp.ne.s32.totalorder %s62, %s63
      %p72 = scmp.eq.s32.totalorder %s31, 0
      %p73 = por %p71, %p72
      %p74 = scmp.ne.s32.totalorder %s62, %s63
      %p75 = scmp.eq.s32.totalorder %s32, 1
      %p76 = por %p74, %p75
      %p78 = scmp.ne.s32.totalorder %s63, %s77
      %p79 = scmp.eq.s32.totalorder %s32, 0
      %p80 = por %p78, %p79
      %s82 = sadd.s32 %s81, 1
      %p85 = scmp.eq.s32.totalorder %s26, 1
      %p86 = scmp.ne.s32.totalorder %s81, %s83
      %p87 = scmp.eq.s32.totalorder %s26, 0
      %p88 = por %p86, %p87
      %p89 = scmp.ne.s32.totalorder %s81, %s83
      %p90 = scmp.eq.s32.totalorder %s31, 1
      %p91 = por %p89, %p90
      %p92 = scmp.ne.s32.totalorder %s83, %s84
      %p93 = scmp.eq.s32.totalorder %s31, 0
      %p94 = por %p92, %p93
      %p95 = scmp.ne.s32.totalorder %s83, %s84
      %p96 = scmp.eq.s32.totalorder %s32, 1
      %p97 = por %p95, %p96
      %p99 = scmp.ne.s32.totalorder %s84, %s98
      %p100 = scmp.eq.s32.totalorder %s32, 0
      %p101 = por %p99, %p100
      %s103 = sadd.s32 %s102, 1
      %p106 = scmp.eq.s32.totalorder %s26, 1
      %p107 = scmp.ne.s32.totalorder %s102, %s104
      %p108 = scmp.eq.s32.totalorder %s26, 0
      %p109 = por %p107, %p108
      %p110 = scmp.ne.s32.totalorder %s102, %s104
      %p111 = scmp.eq.s32.totalorder %s31, 1
      %p112 = por %p110, %p111
      %p113 = scmp.ne.s32.totalorder %s104, %s105
      %p114 = scmp.eq.s32.totalorder %s31, 0
      %p115 = por %p113, %p114
      %p116 = scmp.ne.s32.totalorder %s104, %s105
      %p117 = scmp.eq.s32.totalorder %s32, 1
      %p118 = por %p116, %p117
      %p120 = scmp.ne.s32.totalorder %s105, %s119
      %p121 = scmp.eq.s32.totalorder %s32, 0
      %p122 = por %p120, %p121
      %s124 = sadd.s32 %s123, 1
      %p127 = scmp.eq.s32.totalorder %s26, 1
      %p128 = scmp.ne.s32.totalorder %s123, %s125
      %p129 = scmp.eq.s32.totalorder %s26, 0
      %p130 = por %p128, %p129
      %p131 = scmp.ne.s32.totalorder %s123, %s125
      %p132 = scmp.eq.s32.totalorder %s31, 1
      %p133 = por %p131, %p132
      %p134 = scmp.ne.s32.totalorder %s125, %s126
      %p135 = scmp.eq.s32.totalorder %s31, 0
      %p136 = por %p134, %p135
      %p137 = scmp.ne.s32.totalorder %s125, %s126
      %p138 = scmp.eq.s32.totalorder %s32, 1
      %p139 = por %p137, %p138
      %p141 = scmp.ne.s32.totalorder %s126, %s140
      %p142 = scmp.eq.s32.totalorder %s32, 0
      %p143 = por %p141, %p142
      %s145 = sadd.s32 %s144, 1
      %p148 = scmp.eq.s32.totalorder %s26, 1
      %p149 = scmp.ne.s32.totalorder %s144, %s146
      %p150 = scmp.eq.s32.totalorder %s26, 0
      %p151 = por %p149, %p150
      %p152 = scmp.ne.s32.totalorder %s144, %s146
      %p153 = scmp.eq.s32.totalorder %s31, 1
      %p154 = por %p152, %p153
      %p155 = scmp.ne.s32.totalorder %s146, %s147
      %p156 = scmp.eq.s32.totalorder %s31, 0
      %p157 = por %p155, %p156
      %p158 = scmp.ne.s32.totalorder %s146, %s147
      %p159 = scmp.eq.s32.totalorder %s32, 1
      %p160 = por %p158, %p159
      %p162 = scmp.ne.s32.totalorder %s147, %s161
      %p163 = scmp.eq.s32.totalorder %s32, 0
      %p164 = por %p162, %p163
      %s166 = sadd.s32 %s165, 1
      %p169 = scmp.eq.s32.totalorder %s26, 1
      %p170 = scmp.ne.s32.totalorder %s165, %s167
      %p171 = scmp.eq.s32.totalorder %s26, 0
      %p172 = por %p170, %p171
      %p173 = scmp.ne.s32.totalorder %s165, %s167
      %p174 = scmp.eq.s32.totalorder %s31, 1
      %p175 = por %p173, %p174
      %p176 = scmp.ne.s32.totalorder %s167, %s168
      %p177 = scmp.eq.s32.totalorder %s31, 0
      %p178 = por %p176, %p177
      %p179 = scmp.ne.s32.totalorder %s167, %s168
      %p180 = scmp.eq.s32.totalorder %s32, 1
      %p181 = por %p179, %p180
      %p183 = scmp.ne.s32.totalorder %s168, %s182
      %p184 = scmp.eq.s32.totalorder %s32, 0
      %p185 = por %p183, %p184
      %s187 = sadd.s32 %s186, 1
      %p190 = scmp.eq.s32.totalorder %s26, 1
      %p191 = scmp.ne.s32.totalorder %s186, %s188
      %p192 = scmp.eq.s32.totalorder %s26, 0
      %p193 = por %p191, %p192
      %p194 = scmp.ne.s32.totalorder %s186, %s188
      %p195 = scmp.eq.s32.totalorder %s31, 1
      %p196 = por %p194, %p195
      %p197 = scmp.ne.s32.totalorder %s188, %s189
      %p198 = scmp.eq.s32.totalorder %s31, 0
      %p199 = por %p197, %p198
      %p200 = scmp.ne.s32.totalorder %s188, %s189
      %p201 = scmp.eq.s32.totalorder %s32, 1
      %p202 = por %p200, %p201
      %p204 = scmp.ne.s32.totalorder %s189, %s203
      %p205 = scmp.eq.s32.totalorder %s32, 0
      %p206 = por %p204, %p205
      %s208 = sadd.s32 %s207, 1
      %p211 = scmp.eq.s32.totalorder %s26, 1
      %p212 = scmp.ne.s32.totalorder %s207, %s209
      %p213 = scmp.eq.s32.totalorder %s26, 0
      %p214 = por %p212, %p213
      %p215 = scmp.ne.s32.totalorder %s207, %s209
      %p216 = scmp.eq.s32.totalorder %s31, 1
      %p217 = por %p215, %p216
      %p218 = scmp.ne.s32.totalorder %s209, %s210
      %p219 = scmp.eq.s32.totalorder %s31, 0
      %p220 = por %p218, %p219
      %p221 = scmp.ne.s32.totalorder %s209, %s210
      %p222 = scmp.eq.s32.totalorder %s32, 1
      %p223 = por %p221, %p222
      %p225 = scmp.ne.s32.totalorder %s210, %s224
      %p226 = scmp.eq.s32.totalorder %s32, 0
      %p227 = por %p225, %p226
      %s229 = sadd.s32 %s228, 1
      %p232 = scmp.eq.s32.totalorder %s26, 1
      %p233 = scmp.ne.s32.totalorder %s228, %s230
      %p234 = scmp.eq.s32.totalorder %s26, 0
      %p235 = por %p233, %p234
      %p236 = scmp.ne.s32.totalorder %s228, %s230
      %p237 = scmp.eq.s32.totalorder %s31, 1
      %p238 = por %p236, %p237
      %p239 = scmp.ne.s32.totalorder %s230, %s231
      %p240 = scmp.eq.s32.totalorder %s31, 0
      %p241 = por %p239, %p240
      %p242 = scmp.ne.s32.totalorder %s230, %s231
      %p243 = scmp.eq.s32.totalorder %s32, 1
      %p244 = por %p242, %p243
      %p246 = scmp.ne.s32.totalorder %s231, %s245
      %p247 = scmp.eq.s32.totalorder %s32, 0
      %p248 = por %p246, %p247
      %s250 = sadd.s32 %s249, 1
      %p253 = scmp.eq.s32.totalorder %s26, 1
      %p254 = scmp.ne.s32.totalorder %s249, %s251
      %p255 = scmp.eq.s32.totalorder %s26, 0
      %p256 = por %p254, %p255
      %p257 = scmp.ne.s32.totalorder %s249, %s251
      %p258 = scmp.eq.s32.totalorder %s31, 1
      %p259 = por %p257, %p258
      %p260 = scmp.ne.s32.totalorder %s251, %s252
      %p261 = scmp.eq.s32.totalorder %s31, 0
      %p262 = por %p260, %p261
      %p263 = scmp.ne.s32.totalorder %s251, %s252
      %p264 = scmp.eq.s32.totalorder %s32, 1
      %p265 = por %p263, %p264
      %p267 = scmp.ne.s32.totalorder %s252, %s266
      %p268 = scmp.eq.s32.totalorder %s32, 0
      %p269 = por %p267, %p268
      %s271 = sadd.s32 %s270, 1
      %p274 = scmp.eq.s32.totalorder %s26, 1
      %p275 = scmp.ne.s32.totalorder %s270, %s272
      %p276 = scmp.eq.s32.totalorder %s26, 0
      %p277 = por %p275, %p276
      %p278 = scmp.ne.s32.totalorder %s270, %s272
      %p279 = scmp.eq.s32.totalorder %s31, 1
      %p280 = por %p278, %p279
      %p281 = scmp.ne.s32.totalorder %s272, %s273
      %p282 = scmp.eq.s32.totalorder %s31, 0
      %p283 = por %p281, %p282
      %p284 = scmp.ne.s32.totalorder %s272, %s273
      %p285 = scmp.eq.s32.totalorder %s32, 1
      %p286 = por %p284, %p285
      %p288 = scmp.ne.s32.totalorder %s273, %s287
      %p289 = scmp.eq.s32.totalorder %s32, 0
      %p290 = por %p288, %p289
      %s292 = sadd.s32 %s291, 1
      %p295 = scmp.eq.s32.totalorder %s26, 1
      %p296 = scmp.ne.s32.totalorder %s291, %s293
      %p297 = scmp.eq.s32.totalorder %s26, 0
      %p298 = por %p296, %p297
      %p299 = scmp.ne.s32.totalorder %s291, %s293
      %p300 = scmp.eq.s32.totalorder %s31, 1
      %p301 = por %p299, %p300
      %p302 = scmp.ne.s32.totalorder %s293, %s294
      %p303 = scmp.eq.s32.totalorder %s31, 0
      %p304 = por %p302, %p303
      %p305 = scmp.ne.s32.totalorder %s293, %s294
      %p306 = scmp.eq.s32.totalorder %s32, 1
      %p307 = por %p305, %p306
      %p309 = scmp.ne.s32.totalorder %s294, %s308
      %p310 = scmp.eq.s32.totalorder %s32, 0
      %p311 = por %p309, %p310
      %s313 = sadd.s32 %s312, 1
      %p316 = scmp.eq.s32.totalorder %s26, 1
      %p317 = scmp.ne.s32.totalorder %s312, %s314
      %p318 = scmp.eq.s32.totalorder %s26, 0
      %p319 = por %p317, %p318
      %p320 = scmp.ne.s32.totalorder %s312, %s314
      %p321 = scmp.eq.s32.totalorder %s31, 1
      %p322 = por %p320, %p321
      %p323 = scmp.ne.s32.totalorder %s314, %s315
      %p324 = scmp.eq.s32.totalorder %s31, 0
      %p325 = por %p323, %p324
      %p326 = scmp.ne.s32.totalorder %s314, %s315
      %p327 = scmp.eq.s32.totalorder %s32, 1
      %p328 = por %p326, %p327
      %p330 = scmp.ne.s32.totalorder %s315, %s329
      %p331 = scmp.eq.s32.totalorder %s32, 0
      %p332 = por %p330, %p331
      %s334 = sadd.s32 %s333, 1
      %p337 = scmp.eq.s32.totalorder %s26, 1
      %p338 = scmp.ne.s32.totalorder %s333, %s335
      %p339 = scmp.eq.s32.totalorder %s26, 0
      %p340 = por %p338, %p339
      %p341 = scmp.ne.s32.totalorder %s333, %s335
      %p342 = scmp.eq.s32.totalorder %s31, 1
      %p343 = por %p341, %p342
      %p344 = scmp.ne.s32.totalorder %s335, %s336
      %p345 = scmp.eq.s32.totalorder %s31, 0
      %p346 = por %p344, %p345
      %p347 = scmp.ne.s32.totalorder %s335, %s336
      %p348 = scmp.eq.s32.totalorder %s32, 1
      %p349 = por %p347, %p348
      %p351 = scmp.ne.s32.totalorder %s336, %s350
      %p352 = scmp.eq.s32.totalorder %s32, 0
      %p353 = por %p351, %p352
      %s355 = sadd.s32 %s354, 1
      %p358 = scmp.eq.s32.totalorder %s26, 1
      %p359 = scmp.ne.s32.totalorder %s354, %s356
      %p360 = scmp.eq.s32.totalorder %s26, 0
      %p361 = por %p359, %p360
      %p362 = scmp.ne.s32.totalorder %s354, %s356
      %p363 = scmp.eq.s32.totalorder %s31, 1
      %p364 = por %p362, %p363
      %p365 = scmp.ne.s32.totalorder %s356, %s357
      %p366 = scmp.eq.s32.totalorder %s31, 0
      %p367 = por %p365, %p366
      %p368 = scmp.ne.s32.totalorder %s356, %s357
      %p369 = scmp.eq.s32.totalorder %s32, 1
      %p370 = por %p368, %p369
      %p372 = scmp.ne.s32.totalorder %s357, %s371
      %p373 = scmp.eq.s32.totalorder %s32, 0
      %p374 = por %p372, %p373
      %s376 = sadd.s32 %s375, 1
      %p379 = scmp.eq.s32.totalorder %s26, 1
      %p380 = scmp.ne.s32.totalorder %s375, %s377
      %p381 = scmp.eq.s32.totalorder %s26, 0
      %p382 = por %p380, %p381
      %p383 = scmp.ne.s32.totalorder %s375, %s377
      %p384 = scmp.eq.s32.totalorder %s31, 1
      %p385 = por %p383, %p384
      %p386 = scmp.ne.s32.totalorder %s377, %s378
      %p387 = scmp.eq.s32.totalorder %s31, 0
      %p388 = por %p386, %p387
      %p389 = scmp.ne.s32.totalorder %s377, %s378
      %p390 = scmp.eq.s32.totalorder %s32, 1
      %p391 = por %p389, %p390
      %p393 = scmp.ne.s32.totalorder %s378, %s392
      %p394 = scmp.eq.s32.totalorder %s32, 0
      %p395 = por %p393, %p394
      %s396 = ssub.s32 %s26, %s33
      %p397 = scmp.eq.s32.totalorder %s396, 0
      %s399 = sadd.s32 %s398, 1
      %s400 = scalar_select %p397, %s398, %s399
      %p403 = pneg %p397
      %p404 = scmp.eq.s32.totalorder %s26, 1
      %p405 = por %p403, %p404
      %p406 = scmp.ne.s32.totalorder %s398, %s401
      %p407 = scmp.eq.s32.totalorder %s26, 0
      %p408 = por %p406, %p407
      %p409 = scmp.ne.s32.totalorder %s398, %s401
      %p410 = scmp.eq.s32.totalorder %s31, 1
      %p411 = por %p409, %p410
      %p412 = scmp.ne.s32.totalorder %s401, %s402
      %p413 = scmp.eq.s32.totalorder %s31, 0
      %p414 = por %p412, %p413
      %p415 = scmp.ne.s32.totalorder %s401, %s402
      %p416 = scmp.eq.s32.totalorder %s32, 1
      %p417 = por %p415, %p416
      %p419 = scmp.ne.s32.totalorder %s402, %s418
      %p420 = scmp.eq.s32.totalorder %s32, 0
      %p421 = por %p419, %p420
      %p422 = scmp.le.s32.totalorder 1, %s26
      %p423 = scmp.lt.s32.totalorder %s26, 3
      %p424 = pnand %p422, %p423
      %p425 = pneg %p424
      // Predicated region
      $region9: #{conv_mod_forward.1} parent=5 // pred_check
        _
      $region10: #{conv_mod_forward.1} parent=5 // pred_check_branch
        %427 = sbr.rel (%p424) target = $region12
      $region11: #{conv_mod_forward.1} parent=5 // pred_region
        %s428 = ssub.s32 %s26, 1
        // Predicated region
        $region13: #{conv_mod_forward.1} parent=11 // pred_check
          %p429 = pneg %p73
        $region14: #{conv_mod_forward.1} parent=11 // pred_check_branch
          %431 = sbr.rel (%p429) target = $region16
        $region15: #{conv_mod_forward.1} parent=11 // pred_region
          _
        $region16: #{conv_mod_forward.1} parent=11 // pred_fallthru
          _
        // Predicated region
        $region17: #{conv_mod_forward.1} parent=11 // pred_check
          %p432 = pneg %p94
        $region18: #{conv_mod_forward.1} parent=11 // pred_check_branch
          %434 = sbr.rel (%p432) target = $region20
        $region19: #{conv_mod_forward.1} parent=11 // pred_region
          _
        $region20: #{conv_mod_forward.1} parent=11 // pred_fallthru
          _
        // Predicated region
        $region21: #{conv_mod_forward.1} parent=11 // pred_check
          %p435 = pneg %p115
        $region22: #{conv_mod_forward.1} parent=11 // pred_check_branch
          %437 = sbr.rel (%p435) target = $region24
        $region23: #{conv_mod_forward.1} parent=11 // pred_region
          _
        $region24: #{conv_mod_forward.1} parent=11 // pred_fallthru
          _
        // Predicated region
        $region25: #{conv_mod_forward.1} parent=11 // pred_check
          %p438 = pneg %p136
        $region26: #{conv_mod_forward.1} parent=11 // pred_check_branch
          %440 = sbr.rel (%p438) target = $region28
        $region27: #{conv_mod_forward.1} parent=11 // pred_region
          _
        $region28: #{conv_mod_forward.1} parent=11 // pred_fallthru
          _
        // Predicated region
        $region29: #{conv_mod_forward.1} parent=11 // pred_check
          %p441 = pneg %p157
        $region30: #{conv_mod_forward.1} parent=11 // pred_check_branch
          %443 = sbr.rel (%p441) target = $region32
        $region31: #{conv_mod_forward.1} parent=11 // pred_region
          _
        $region32: #{conv_mod_forward.1} parent=11 // pred_fallthru
          _
        // Predicated region
        $region33: #{conv_mod_forward.1} parent=11 // pred_check
          %p444 = pneg %p178
        $region34: #{conv_mod_forward.1} parent=11 // pred_check_branch
          %446 = sbr.rel (%p444) target = $region36
        $region35: #{conv_mod_forward.1} parent=11 // pred_region
          _
        $region36: #{conv_mod_forward.1} parent=11 // pred_fallthru
          _
        // Predicated region
        $region37: #{conv_mod_forward.1} parent=11 // pred_check
          %p447 = pneg %p199
        $region38: #{conv_mod_forward.1} parent=11 // pred_check_branch
          %449 = sbr.rel (%p447) target = $region40
        $region39: #{conv_mod_forward.1} parent=11 // pred_region
          _
        $region40: #{conv_mod_forward.1} parent=11 // pred_fallthru
          _
        // Predicated region
        $region41: #{conv_mod_forward.1} parent=11 // pred_check
          %p450 = pneg %p220
        $region42: #{conv_mod_forward.1} parent=11 // pred_check_branch
          %452 = sbr.rel (%p450) target = $region44
        $region43: #{conv_mod_forward.1} parent=11 // pred_region
          _
        $region44: #{conv_mod_forward.1} parent=11 // pred_fallthru
          _
        // Predicated region
        $region45: #{conv_mod_forward.1} parent=11 // pred_check
          %p453 = pneg %p241
        $region46: #{conv_mod_forward.1} parent=11 // pred_check_branch
          %455 = sbr.rel (%p453) target = $region48
        $region47: #{conv_mod_forward.1} parent=11 // pred_region
          _
        $region48: #{conv_mod_forward.1} parent=11 // pred_fallthru
          _
        // Predicated region
        $region49: #{conv_mod_forward.1} parent=11 // pred_check
          %p456 = pneg %p262
        $region50: #{conv_mod_forward.1} parent=11 // pred_check_branch
          %458 = sbr.rel (%p456) target = $region52
        $region51: #{conv_mod_forward.1} parent=11 // pred_region
          _
        $region52: #{conv_mod_forward.1} parent=11 // pred_fallthru
          _
        // Predicated region
        $region53: #{conv_mod_forward.1} parent=11 // pred_check
          %p459 = pneg %p283
        $region54: #{conv_mod_forward.1} parent=11 // pred_check_branch
          %461 = sbr.rel (%p459) target = $region56
        $region55: #{conv_mod_forward.1} parent=11 // pred_region
          _
        $region56: #{conv_mod_forward.1} parent=11 // pred_fallthru
          _
        // Predicated region
        $region57: #{conv_mod_forward.1} parent=11 // pred_check
          %p462 = pneg %p304
        $region58: #{conv_mod_forward.1} parent=11 // pred_check_branch
          %464 = sbr.rel (%p462) target = $region60
        $region59: #{conv_mod_forward.1} parent=11 // pred_region
          _
        $region60: #{conv_mod_forward.1} parent=11 // pred_fallthru
          _
        // Predicated region
        $region61: #{conv_mod_forward.1} parent=11 // pred_check
          %p465 = pneg %p325
        $region62: #{conv_mod_forward.1} parent=11 // pred_check_branch
          %467 = sbr.rel (%p465) target = $region64
        $region63: #{conv_mod_forward.1} parent=11 // pred_region
          _
        $region64: #{conv_mod_forward.1} parent=11 // pred_fallthru
          _
        // Predicated region
        $region65: #{conv_mod_forward.1} parent=11 // pred_check
          %p468 = pneg %p346
        $region66: #{conv_mod_forward.1} parent=11 // pred_check_branch
          %470 = sbr.rel (%p468) target = $region68
        $region67: #{conv_mod_forward.1} parent=11 // pred_region
          _
        $region68: #{conv_mod_forward.1} parent=11 // pred_fallthru
          _
        // Predicated region
        $region69: #{conv_mod_forward.1} parent=11 // pred_check
          %p471 = pneg %p367
        $region70: #{conv_mod_forward.1} parent=11 // pred_check_branch
          %473 = sbr.rel (%p471) target = $region72
        $region71: #{conv_mod_forward.1} parent=11 // pred_region
          _
        $region72: #{conv_mod_forward.1} parent=11 // pred_fallthru
          _
        // Predicated region
        $region73: #{conv_mod_forward.1} parent=11 // pred_check
          %p474 = pneg %p388
        $region74: #{conv_mod_forward.1} parent=11 // pred_check_branch
          %476 = sbr.rel (%p474) target = $region76
        $region75: #{conv_mod_forward.1} parent=11 // pred_region
          _
        $region76: #{conv_mod_forward.1} parent=11 // pred_fallthru
          _
      $region12: #{conv_mod_forward.1} parent=5 // pred_fallthru
        _
      %p477 = scmp.lt.s32.totalorder %s26, 2
      // Predicated region
      $region77: #{conv_mod_forward.1} parent=5 // pred_check
        %p478 = pneg %p477
      $region78: #{conv_mod_forward.1} parent=5 // pred_check_branch
        %480 = sbr.rel (%p478) target = $region80
      $region79: #{conv_mod_forward.1} parent=5 // pred_region
        // Predicated region
        $region81: #{conv_mod_forward.1} parent=79 // pred_check
          %p481 = pneg %p46
        $region82: #{conv_mod_forward.1} parent=79 // pred_check_branch
          %483 = sbr.rel (%p481) target = $region84
        $region83: #{conv_mod_forward.1} parent=79 // pred_region
          %s484 = smul.u32 8, %s26
          %p485 = scmp.lt.s32.totalorder %s484, 15
          %s486 = scalar_select %p485, %s484, 15
          %s487 = smul.addr %s486, 8
          %s488 = scalar_lea.vmem %s0, %s487
          %s489 = smul.u32 8, %s26
        $region84: #{conv_mod_forward.1} parent=79 // pred_fallthru
          _
      $region80: #{conv_mod_forward.1} parent=5 // pred_fallthru
        _
      %p490 = scmp.le.s32.totalorder 1, %s26
      %p491 = scmp.lt.s32.totalorder %s26, 3
      %p492 = pnand %p490, %p491
      %p493 = pneg %p492
      // Predicated region
      $region85: #{conv_mod_forward.1} parent=5 // pred_check
        _
      $region86: #{conv_mod_forward.1} parent=5 // pred_check_branch
        %495 = sbr.rel (%p492) target = $region88
      $region87: #{conv_mod_forward.1} parent=5 // pred_region
        %s496 = ssub.s32 %s26, 1
        %s497 = smul.u32 8, %s31
        %p498 = scmp.lt.s32.totalorder %s497, 15
        %s499 = scalar_select %p498, %s497, 15
        %s500 = smul.addr %s499, 8
        %s501 = scalar_lea.vmem %s0, %s500
        %p502 = pneg %p52
        %p503 = pneg %p49
        %p504 = pneg %p73
        %p505 = pneg %p70
        %p506 = pneg %p94
        %p507 = pneg %p91
        %p508 = pneg %p115
        %p509 = pneg %p112
        %p510 = pneg %p136
        %p511 = pneg %p133
        %p512 = pneg %p157
        %p513 = pneg %p154
        %p514 = pneg %p178
        %p515 = pneg %p175
        %p516 = pneg %p199
        %p517 = pneg %p196
        %p518 = pneg %p220
        %p519 = pneg %p217
        %p520 = pneg %p241
        %p521 = pneg %p238
        %p522 = pneg %p262
        %p523 = pneg %p259
        %p524 = pneg %p283
        %p525 = pneg %p280
        %p526 = pneg %p304
        %p527 = pneg %p301
        %p528 = pneg %p325
        %p529 = pneg %p322
        %p530 = pneg %p346
        %p531 = pneg %p343
        %p532 = pneg %p367
        %p533 = pneg %p364
        %p534 = pneg %p388
        %p535 = pneg %p385
        %p536 = pneg %p414
        %p537 = pneg %p411
        %s538 = sand.u32 %s401, 1
        %s539 = scalar_lea.sflag [#allocation3], %s538
        %s540 = sand.u32 %s401, 1
        %s541 = smul.addr %s540, 64
        %s542 = scalar_lea.vmem [#allocation2], %s541
        %s543 = smul.u32 8, %s31
        %p544 = scmp.lt.s32.totalorder %s543, 15
        %s545 = scalar_select %p544, %s543, 15
        %s546 = smul.addr %s545, 8
        %s547 = scalar_lea.vmem %s0, %s546
        %s548 = smul.u32 8, %s31
        %s549 = smul.u32 8, %s31
        %v551 = vld [vmem:[%s547] sm:$0xff]
        %v552 = vld [vmem:[%s547 + $0x8] sm:$0xff]
        %v553 = vld [vmem:[%s547 + $0x10] sm:$0xff]
        %v554 = vld [vmem:[%s547 + $0x18] sm:$0xff]
        %v555 = vld [vmem:[%s547 + $0x20] sm:$0xff]
        %v556 = vld [vmem:[%s547 + $0x28] sm:$0xff]
        %v557 = vld [vmem:[%s547 + $0x30] sm:$0xff]
        %v558 = vld [vmem:[%s547 + $0x38] sm:$0xff]
        %v559 = vld [vmem:[%s1] sm:$0xff]
        %v560 = vld [vmem:[%s1 + $0x8] sm:$0xff]
        %v561 = vld [vmem:[%s1 + $0x10] sm:$0xff]
        %v562 = vld [vmem:[%s1 + $0x18] sm:$0xff]
        %v563 = vld [vmem:[%s1 + $0x20] sm:$0xff]
        %v564 = vld [vmem:[%s1 + $0x28] sm:$0xff]
        %v565 = vld [vmem:[%s1 + $0x30] sm:$0xff]
        %v566 = vld [vmem:[%s1 + $0x38] sm:$0xff]
        %v567 = vld [vmem:[%s2] sm:$0xff]
        %v568 = vld [vmem:[%s2 + $0x8] sm:$0xff]
        %v569 = vld [vmem:[%s2 + $0x10] sm:$0xff]
        %v570 = vld [vmem:[%s2 + $0x18] sm:$0xff]
        %v571 = vld [vmem:[%s2 + $0x20] sm:$0xff]
        %v572 = vld [vmem:[%s2 + $0x28] sm:$0xff]
        %v573 = vld [vmem:[%s2 + $0x30] sm:$0xff]
        %v574 = vld [vmem:[%s2 + $0x38] sm:$0xff]
        %vm575 = vcmask 523264
        %v576 = vsel %vm575, %v551, 0.0
        %577 = vadd.xlane.f32.xlu0 %v576
        %v578 = vpop.xlane.xlu0 %577
        %v579 = vsel %vm575, %v552, 0.0
        %580 = vadd.xlane.f32.xlu0 %v579
        %v581 = vpop.xlane.xlu0 %580
        %v582 = vsel %vm575, %v553, 0.0
        %583 = vadd.xlane.f32.xlu0 %v582
        %v584 = vpop.xlane.xlu0 %583
        %v585 = vsel %vm575, %v554, 0.0
        %586 = vadd.xlane.f32.xlu0 %v585
        %v587 = vpop.xlane.xlu0 %586
        %v588 = vsel %vm575, %v555, 0.0
        %589 = vadd.xlane.f32.xlu0 %v588
        %v590 = vpop.xlane.xlu0 %589
        %v591 = vsel %vm575, %v556, 0.0
        %592 = vadd.xlane.f32.xlu0 %v591
        %v593 = vpop.xlane.xlu0 %592
        %v594 = vsel %vm575, %v557, 0.0
        %595 = vadd.xlane.f32.xlu0 %v594
        %v596 = vpop.xlane.xlu0 %595
        %v597 = vsel %vm575, %v558, 0.0
        %598 = vadd.xlane.f32.xlu0 %v597
        %v599 = vpop.xlane.xlu0 %598
        %v600 = vrcp.pop 64.0
        %v601 = vmul.f32 %v578, %v600
        %v602 = vmul.f32 %v581, %v600
        %v603 = vmul.f32 %v584, %v600
        %v604 = vmul.f32 %v587, %v600
        %v605 = vmul.f32 %v590, %v600
        %v606 = vmul.f32 %v593, %v600
        %v607 = vmul.f32 %v596, %v600
        %v608 = vmul.f32 %v599, %v600
        %v609 = vsub.f32 %v551, %v601
        %v610 = vsub.f32 %v552, %v602
        %v611 = vsub.f32 %v553, %v603
        %v612 = vsub.f32 %v554, %v604
        %v613 = vsub.f32 %v555, %v605
        %v614 = vsub.f32 %v556, %v606
        %v615 = vsub.f32 %v557, %v607
        %v616 = vsub.f32 %v558, %v608
        %v617 = vmul.f32 %v609, %v609
        %v618 = vmul.f32 %v610, %v610
        %v619 = vmul.f32 %v611, %v611
        %v620 = vmul.f32 %v612, %v612
        %v621 = vmul.f32 %v613, %v613
        %v622 = vmul.f32 %v614, %v614
        %v623 = vmul.f32 %v615, %v615
        %v624 = vmul.f32 %v616, %v616
        %v625 = vsel %vm575, %v617, 0.0
        %626 = vadd.xlane.f32.xlu0 %v625
        %v627 = vpop.xlane.xlu0 %626
        %v628 = vsel %vm575, %v618, 0.0
        %629 = vadd.xlane.f32.xlu0 %v628
        %v630 = vpop.xlane.xlu0 %629
        %v631 = vsel %vm575, %v619, 0.0
        %632 = vadd.xlane.f32.xlu0 %v631
        %v633 = vpop.xlane.xlu0 %632
        %v634 = vsel %vm575, %v620, 0.0
        %635 = vadd.xlane.f32.xlu0 %v634
        %v636 = vpop.xlane.xlu0 %635
        %v637 = vsel %vm575, %v621, 0.0
        %638 = vadd.xlane.f32.xlu0 %v637
        %v639 = vpop.xlane.xlu0 %638
        %v640 = vsel %vm575, %v622, 0.0
        %641 = vadd.xlane.f32.xlu0 %v640
        %v642 = vpop.xlane.xlu0 %641
        %v643 = vsel %vm575, %v623, 0.0
        %644 = vadd.xlane.f32.xlu0 %v643
        %v645 = vpop.xlane.xlu0 %644
        %v646 = vsel %vm575, %v624, 0.0
        %647 = vadd.xlane.f32.xlu0 %v646
        %v648 = vpop.xlane.xlu0 %647
        %v649 = vmul.f32 %v627, %v600
        %v650 = vmul.f32 %v630, %v600
        %v651 = vmul.f32 %v633, %v600
        %v652 = vmul.f32 %v636, %v600
        %v653 = vmul.f32 %v639, %v600
        %v654 = vmul.f32 %v642, %v600
        %v655 = vmul.f32 %v645, %v600
        %v656 = vmul.f32 %v648, %v600
        %v657 = vadd.f32 %v649, 1e-06
        %v658 = vadd.f32 %v650, 1e-06
        %v659 = vadd.f32 %v651, 1e-06
        %v660 = vadd.f32 %v652, 1e-06
        %v661 = vadd.f32 %v653, 1e-06
        %v662 = vadd.f32 %v654, 1e-06
        %v663 = vadd.f32 %v655, 1e-06
        %v664 = vadd.f32 %v656, 1e-06
        %v665 = vrsqrt.pop %v657
        %v666 = vrsqrt.pop %v658
        %v667 = vrsqrt.pop %v659
        %v668 = vrsqrt.pop %v660
        %v669 = vrsqrt.pop %v661
        %v670 = vrsqrt.pop %v662
        %v671 = vrsqrt.pop %v663
        %v672 = vrsqrt.pop %v664
        %v673 = vmul.f32 %v609, %v665
        %v674 = vmul.f32 %v610, %v666
        %v675 = vmul.f32 %v611, %v667
        %v676 = vmul.f32 %v612, %v668
        %v677 = vmul.f32 %v613, %v669
        %v678 = vmul.f32 %v614, %v670
        %v679 = vmul.f32 %v615, %v671
        %v680 = vmul.f32 %v616, %v672
        %v681 = vld [vmem:[%s3] sm:$0x1]
        %v683 = vlaneseq
        %v684 = vshrl.u32 %v683, 7
        %v685 = vsub.s32 0, %v684
        %v686 = vrot.slane %v681, %v685
        %v688 = vmul.f32 %v673, %v686
        %v689 = vmul.f32 %v674, %v686
        %v690 = vmul.f32 %v675, %v686
        %v691 = vmul.f32 %v676, %v686
        %v692 = vmul.f32 %v677, %v686
        %v693 = vmul.f32 %v678, %v686
        %v694 = vmul.f32 %v679, %v686
        %v695 = vmul.f32 %v680, %v686
        %v696 = vld [vmem:[%s4] sm:$0x1]
        %v698 = vlaneseq
        %v699 = vshrl.u32 %v698, 7
        %v700 = vsub.s32 0, %v699
        %v701 = vrot.slane %v696, %v700
        %v703 = vadd.f32 %v688, %v701
        %v704 = vadd.f32 %v689, %v701
        %v705 = vadd.f32 %v690, %v701
        %v706 = vadd.f32 %v691, %v701
        %v707 = vadd.f32 %v692, %v701
        %v708 = vadd.f32 %v693, %v701
        %v709 = vadd.f32 %v694, %v701
        %v710 = vadd.f32 %v695, %v701
        %v711 = vld [vmem:[%s5] sm:$0x1]
        %v713 = vlaneseq
        %v714 = vshrl.u32 %v713, 7
        %v715 = vsub.s32 0, %v714
        %v716 = vrot.slane %v711, %v715
        %v718 = vmul.f32 %v673, %v716
        %v719 = vmul.f32 %v674, %v716
        %v720 = vmul.f32 %v675, %v716
        %v721 = vmul.f32 %v676, %v716
        %v722 = vmul.f32 %v677, %v716
        %v723 = vmul.f32 %v678, %v716
        %v724 = vmul.f32 %v679, %v716
        %v725 = vmul.f32 %v680, %v716
        %v726 = vld [vmem:[%s6] sm:$0x1]
        %v728 = vlaneseq
        %v729 = vshrl.u32 %v728, 7
        %v730 = vsub.s32 0, %v729
        %v731 = vrot.slane %v726, %v730
        %v733 = vadd.f32 %v718, %v731
        %v734 = vadd.f32 %v719, %v731
        %v735 = vadd.f32 %v720, %v731
        %v736 = vadd.f32 %v721, %v731
        %v737 = vadd.f32 %v722, %v731
        %v738 = vadd.f32 %v723, %v731
        %v739 = vadd.f32 %v724, %v731
        %v740 = vadd.f32 %v725, %v731
        %v741 = vpack.c.bf16 %v704, %v703
        %v742 = vpack.c.bf16 %v706, %v705
        %v743 = vpack.c.bf16 %v708, %v707
        %v744 = vpack.c.bf16 %v710, %v709
        %v745 = vld [vmem:[%s7] sm:$0xf]
        %v746 = vld [vmem:[%s7 + $0x4] sm:$0xf]
        %v747 = vld [vmem:[%s7 + $0x8] sm:$0xf]
        %v748 = vld [vmem:[%s7 + $0xc] sm:$0xf]
        %v749 = vld [vmem:[%s7 + $0x10] sm:$0xf]
        %v750 = vld [vmem:[%s7 + $0x14] sm:$0xf]
        %v751 = vld [vmem:[%s7 + $0x18] sm:$0xf]
        %v752 = vld [vmem:[%s7 + $0x1c] sm:$0xf]
        %v753 = vld [vmem:[%s8] sm:$0x1]
        %v755 = vlaneseq
        %v756 = vshrl.u32 %v755, 7
        %v757 = vsub.s32 0, %v756
        %v758 = vrot.slane %v753, %v757
        %v768 = vunpack.c.l.b16 %v745
        %v769 = vunpack.c.l.b16 %v746
        %v770 = vunpack.c.l.b16 %v747
        %v771 = vunpack.c.l.b16 %v748
        %v772 = vunpack.c.l.b16 %v749
        %v773 = vunpack.c.l.b16 %v750
        %v774 = vunpack.c.l.b16 %v751
        %v775 = vunpack.c.l.b16 %v752
        %v776 = vpack.c.b16 %v769, %v768
        %v777 = vpack.c.b16 %v771, %v770
        %v778 = vpack.c.b16 %v773, %v772
        %v779 = vpack.c.b16 %v775, %v774
        %v785 = vsel %vm575, %v741, 0
        %v788 = vsel %vm575, %v742, 0
        %v791 = vsel %vm575, %v743, 0
        %v794 = vsel %vm575, %v744, 0
        %796 = vmatprep.subr.bf16.mxu0 0
        %797 = vmatpush1.bf16.msra.mxu0 0
        %798 = vmatprep.subr.bf16.mxu0 0
        %799 = vmatpush1.bf16.msra.mxu0 0
        %800 = vmatprep.subr.bf16.mxu0 0
        %801 = vmatpush1.bf16.msra.mxu0 0
        %802 = vmatprep.subr.bf16.mxu0 0
        %803 = vmatpush1.bf16.msra.mxu0 0
        %804 = vmatprep.subr.bf16.mxu0 0
        %805 = vmatpush1.bf16.msra.mxu0 %v779
        %806 = vmatprep.subr.bf16.mxu0 0
        %807 = vmatpush1.bf16.msra.mxu0 %v778
        %808 = vmatprep.subr.bf16.mxu0 0
        %809 = vmatpush1.bf16.msra.mxu0 %v777
        %810 = vmatprep.subr.bf16.mxu0 0
        %811 = vmatpush1.bf16.msra.mxu0 %v776
        %812 = vmatprep.subr.bf16.mxu0 0
        %813 = vmatpush2.bf16.msra.mxu0 0
        %814 = vmatprep.subr.bf16.mxu0 0
        %815 = vmatpush2.bf16.msra.mxu0 0
        %816 = vmatprep.subr.bf16.mxu0 0
        %817 = vmatpush2.bf16.msra.mxu0 0
        %818 = vmatprep.subr.bf16.mxu0 0
        %819 = vmatpush2.bf16.msra.mxu0 0
        %820 = vmatprep.subr.bf16.mxu0 0
        %821 = vmatpush2.bf16.msra.mxu0 0
        %822 = vmatprep.subr.bf16.mxu0 0
        %823 = vmatpush2.bf16.msra.mxu0 0
        %824 = vmatprep.subr.bf16.mxu0 0
        %825 = vmatpush2.bf16.msra.mxu0 0
        %826 = vmatprep.subr.bf16.mxu0 0
        %827 = vmatpush2.bf16.msra.mxu0 0
        %828 = vmatprep.mubr.bf16.mxu0 0
        %829 = vmatmul.mubr.bf16.gmra.mxu0 %v785
        %v830 = vpop.f32.mrf.mxu0
        %v831 = vadd.f32 %v758, %v830
        %v832 = vpop.f32.mrf.mxu0
        %v833 = vpop.f32.mrf.mxu0
        %v834 = vadd.f32 %v758, %v833
        %v835 = vpop.f32.mrf.mxu0
        %836 = vmatprep.mubr.bf16.mxu0 0
        %837 = vmatmul.mubr.bf16.gmra.mxu0 %v788
        %v838 = vpop.f32.mrf.mxu0
        %v839 = vadd.f32 %v758, %v838
        %v840 = vpop.f32.mrf.mxu0
        %v841 = vpop.f32.mrf.mxu0
        %v842 = vadd.f32 %v758, %v841
        %v843 = vpop.f32.mrf.mxu0
        %844 = vmatprep.mubr.bf16.mxu0 0
        %845 = vmatmul.mubr.bf16.gmra.mxu0 %v791
        %v846 = vpop.f32.mrf.mxu0
        %v847 = vadd.f32 %v758, %v846
        %v848 = vpop.f32.mrf.mxu0
        %v849 = vpop.f32.mrf.mxu0
        %v850 = vadd.f32 %v758, %v849
        %v851 = vpop.f32.mrf.mxu0
        %852 = vmatprep.mubr.bf16.mxu0 0
        %853 = vmatmul.mubr.bf16.gmra.mxu0 %v794
        %v854 = vpop.f32.mrf.mxu0
        %v855 = vadd.f32 %v758, %v854
        %v856 = vpop.f32.mrf.mxu0
        %v857 = vpop.f32.mrf.mxu0
        %v858 = vadd.f32 %v758, %v857
        %v859 = vpop.f32.mrf.mxu0
        %860 = vdwg.mxu0
        %v861 = vmax.f32 %v831, 0.0
        %v862 = vmax.f32 %v834, 0.0
        %v863 = vmax.f32 %v839, 0.0
        %v864 = vmax.f32 %v842, 0.0
        %v865 = vmax.f32 %v847, 0.0
        %v866 = vmax.f32 %v850, 0.0
        %v867 = vmax.f32 %v855, 0.0
        %v868 = vmax.f32 %v858, 0.0
        %v869 = vpack.c.bf16 %v862, %v861
        %v870 = vpack.c.bf16 %v864, %v863
        %v871 = vpack.c.bf16 %v866, %v865
        %v872 = vpack.c.bf16 %v868, %v867
        %v873 = vld [vmem:[%s9] sm:$0xf]
        %v874 = vld [vmem:[%s9 + $0x4] sm:$0xf]
        %v875 = vld [vmem:[%s10] sm:$0x1]
        %v876 = vlaneseq
        %v877 = vshrl.u32 %v876, 7
        %v878 = vsub.s32 0, %v877
        %v879 = vrot.slane %v875, %v878
        %v882 = vunpack.c.l.b16 %v873
        %v883 = vunpack.c.l.b16 %v874
        %v884 = vpack.c.b16 %v883, %v882
        %vm886 = vcmask 130048
        %v888 = vsel %vm886, %v869, 0
        %v891 = vsel %vm886, %v870, 0
        %v894 = vsel %vm886, %v871, 0
        %v897 = vsel %vm886, %v872, 0
        %899 = vmatprep.subr.bf16.mxu0 0
        %900 = vmatpush1.bf16.msra.mxu0 0
        %901 = vmatprep.subr.bf16.mxu0 0
        %902 = vmatpush1.bf16.msra.mxu0 0
        %903 = vmatprep.subr.bf16.mxu0 0
        %904 = vmatpush1.bf16.msra.mxu0 0
        %905 = vmatprep.subr.bf16.mxu0 0
        %906 = vmatpush1.bf16.msra.mxu0 0
        %907 = vmatprep.subr.bf16.mxu0 0
        %908 = vmatpush1.bf16.msra.mxu0 0
        %909 = vmatprep.subr.bf16.mxu0 0
        %910 = vmatpush1.bf16.msra.mxu0 0
        %911 = vmatprep.subr.bf16.mxu0 0
        %912 = vmatpush1.bf16.msra.mxu0 0
        %913 = vmatprep.subr.bf16.mxu0 0
        %914 = vmatpush1.bf16.msra.mxu0 %v884
        %915 = vmatprep.subr.bf16.mxu0 0
        %916 = vmatpush2.bf16.msra.mxu0 0
        %917 = vmatprep.subr.bf16.mxu0 0
        %918 = vmatpush2.bf16.msra.mxu0 0
        %919 = vmatprep.subr.bf16.mxu0 0
        %920 = vmatpush2.bf16.msra.mxu0 0
        %921 = vmatprep.subr.bf16.mxu0 0
        %922 = vmatpush2.bf16.msra.mxu0 0
        %923 = vmatprep.subr.bf16.mxu0 0
        %924 = vmatpush2.bf16.msra.mxu0 0
        %925 = vmatprep.subr.bf16.mxu0 0
        %926 = vmatpush2.bf16.msra.mxu0 0
        %927 = vmatprep.subr.bf16.mxu0 0
        %928 = vmatpush2.bf16.msra.mxu0 0
        %929 = vmatprep.subr.bf16.mxu0 0
        %930 = vmatpush2.bf16.msra.mxu0 0
        %931 = vmatprep.mubr.bf16.mxu0 0
        %932 = vmatmul.mubr.bf16.gmra.mxu0 %v888
        %v933 = vpop.f32.mrf.mxu0
        %v934 = vadd.f32 %v879, %v933
        %v935 = vpop.f32.mrf.mxu0
        %v936 = vpop.f32.mrf.mxu0
        %v937 = vadd.f32 %v879, %v936
        %v938 = vpop.f32.mrf.mxu0
        %939 = vmatprep.mubr.bf16.mxu0 0
        %940 = vmatmul.mubr.bf16.gmra.mxu0 %v891
        %v941 = vpop.f32.mrf.mxu0
        %v942 = vadd.f32 %v879, %v941
        %v943 = vpop.f32.mrf.mxu0
        %v944 = vpop.f32.mrf.mxu0
        %v945 = vadd.f32 %v879, %v944
        %v946 = vpop.f32.mrf.mxu0
        %947 = vmatprep.mubr.bf16.mxu0 0
        %948 = vmatmul.mubr.bf16.gmra.mxu0 %v894
        %v949 = vpop.f32.mrf.mxu0
        %v950 = vadd.f32 %v879, %v949
        %v951 = vpop.f32.mrf.mxu0
        %v952 = vpop.f32.mrf.mxu0
        %v953 = vadd.f32 %v879, %v952
        %v954 = vpop.f32.mrf.mxu0
        %955 = vmatprep.mubr.bf16.mxu0 0
        %956 = vmatmul.mubr.bf16.gmra.mxu0 %v897
        %v957 = vpop.f32.mrf.mxu0
        %v958 = vadd.f32 %v879, %v957
        %v959 = vpop.f32.mrf.mxu0
        %v960 = vpop.f32.mrf.mxu0
        %v961 = vadd.f32 %v879, %v960
        %v962 = vpop.f32.mrf.mxu0
        %963 = vdwg.mxu0
        %v964 = vrot.slane %v703, 7
        %v965 = vrot.slane %v704, 7
        %v966 = vrot.slane %v705, 7
        %v967 = vrot.slane %v706, 7
        %v968 = vrot.slane %v707, 7
        %v969 = vrot.slane %v708, 7
        %v970 = vrot.slane %v709, 7
        %v971 = vrot.slane %v710, 7
        %v972 = vlaneseq
        %v973 = vshrl.u32 %v972, 7
        %vm974 = vcmp.lt.s32.totalorder %v973, 1
        %v975 = vsel %vm974, %v970, %v971
        %v976 = vsel %vm974, %v969, %v970
        %v977 = vsel %vm974, %v968, %v969
        %v978 = vsel %vm974, %v967, %v968
        %v979 = vsel %vm974, %v966, %v967
        %v980 = vsel %vm974, %v965, %v966
        %v981 = vsel %vm974, %v964, %v965
        %v982 = vsel %vm974, %v971, %v964
        %vm983 = vcmp.ge.s32.totalorder %v559, 1
        %vm984 = vcmp.ge.s32.totalorder %v560, 1
        %vm985 = vcmp.ge.s32.totalorder %v561, 1
        %vm986 = vcmp.ge.s32.totalorder %v562, 1
        %vm987 = vcmp.ge.s32.totalorder %v563, 1
        %vm988 = vcmp.ge.s32.totalorder %v564, 1
        %vm989 = vcmp.ge.s32.totalorder %v565, 1
        %vm990 = vcmp.ge.s32.totalorder %v566, 1
        %vm991 = vcmp.ge.s32.totalorder %v567, 1
        %vm992 = vcmp.ge.s32.totalorder %v568, 1
        %vm993 = vcmp.ge.s32.totalorder %v569, 1
        %vm994 = vcmp.ge.s32.totalorder %v570, 1
        %vm995 = vcmp.ge.s32.totalorder %v571, 1
        %vm996 = vcmp.ge.s32.totalorder %v572, 1
        %vm997 = vcmp.ge.s32.totalorder %v573, 1
        %vm998 = vcmp.ge.s32.totalorder %v574, 1
        %vm999 = vmand %vm983, %vm991
        %vm1000 = vmand %vm984, %vm992
        %vm1001 = vmand %vm985, %vm993
        %vm1002 = vmand %vm986, %vm994
        %vm1003 = vmand %vm987, %vm995
        %vm1004 = vmand %vm988, %vm996
        %vm1005 = vmand %vm989, %vm997
        %vm1006 = vmand %vm990, %vm998
        %v1007 = vsel %vm999, %v975, 0.0
        %v1008 = vsel %vm1000, %v982, 0.0
        %v1009 = vsel %vm1001, %v981, 0.0
        %v1010 = vsel %vm1002, %v980, 0.0
        %v1011 = vsel %vm1003, %v979, 0.0
        %v1012 = vsel %vm1004, %v978, 0.0
        %v1013 = vsel %vm1005, %v977, 0.0
        %v1014 = vsel %vm1006, %v976, 0.0
        %v1015 = vmul.f32 %v1007, %v934
        %v1016 = vmul.f32 %v1008, %v937
        %v1017 = vmul.f32 %v1009, %v942
        %v1018 = vmul.f32 %v1010, %v945
        %v1019 = vmul.f32 %v1011, %v950
        %v1020 = vmul.f32 %v1012, %v953
        %v1021 = vmul.f32 %v1013, %v958
        %v1022 = vmul.f32 %v1014, %v961
        %v1023 = vadd.f32 %v1015, 0.0
        %v1024 = vadd.f32 %v1016, 0.0
        %v1025 = vadd.f32 %v1017, 0.0
        %v1026 = vadd.f32 %v1018, 0.0
        %v1027 = vadd.f32 %v1019, 0.0
        %v1028 = vadd.f32 %v1020, 0.0
        %v1029 = vadd.f32 %v1021, 0.0
        %v1030 = vadd.f32 %v1022, 0.0
        %s1031 = scalar_lea.vmem %s9, 8
        %v1032 = vld [vmem:[%s1031] sm:$0xf]
        %v1033 = vld [vmem:[%s1031 + $0x4] sm:$0xf]
        %v1034 = vld [vmem:[%s10 + $0x1] sm:$0x1]
        %v1035 = vlaneseq
        %v1036 = vshrl.u32 %v1035, 7
        %v1037 = vsub.s32 0, %v1036
        %v1038 = vrot.slane %v1034, %v1037
        %v1041 = vunpack.c.l.b16 %v1032
        %v1042 = vunpack.c.l.b16 %v1033
        %v1043 = vpack.c.b16 %v1042, %v1041
        %1045 = vmatprep.subr.bf16.mxu0 0
        %1046 = vmatpush1.bf16.msra.mxu0 0
        %1047 = vmatprep.subr.bf16.mxu0 0
        %1048 = vmatpush1.bf16.msra.mxu0 0
        %1049 = vmatprep.subr.bf16.mxu0 0
        %1050 = vmatpush1.bf16.msra.mxu0 0
        %1051 = vmatprep.subr.bf16.mxu0 0
        %1052 = vmatpush1.bf16.msra.mxu0 0
        %1053 = vmatprep.subr.bf16.mxu0 0
        %1054 = vmatpush1.bf16.msra.mxu0 0
        %1055 = vmatprep.subr.bf16.mxu0 0
        %1056 = vmatpush1.bf16.msra.mxu0 0
        %1057 = vmatprep.subr.bf16.mxu0 0
        %1058 = vmatpush1.bf16.msra.mxu0 0
        %1059 = vmatprep.subr.bf16.mxu0 0
        %1060 = vmatpush1.bf16.msra.mxu0 %v1043
        %1061 = vmatprep.subr.bf16.mxu0 0
        %1062 = vmatpush2.bf16.msra.mxu0 0
        %1063 = vmatprep.subr.bf16.mxu0 0
        %1064 = vmatpush2.bf16.msra.mxu0 0
        %1065 = vmatprep.subr.bf16.mxu0 0
        %1066 = vmatpush2.bf16.msra.mxu0 0
        %1067 = vmatprep.subr.bf16.mxu0 0
        %1068 = vmatpush2.bf16.msra.mxu0 0
        %1069 = vmatprep.subr.bf16.mxu0 0
        %1070 = vmatpush2.bf16.msra.mxu0 0
        %1071 = vmatprep.subr.bf16.mxu0 0
        %1072 = vmatpush2.bf16.msra.mxu0 0
        %1073 = vmatprep.subr.bf16.mxu0 0
        %1074 = vmatpush2.bf16.msra.mxu0 0
        %1075 = vmatprep.subr.bf16.mxu0 0
        %1076 = vmatpush2.bf16.msra.mxu0 0
        %1077 = vmatprep.mubr.bf16.mxu0 0
        %1078 = vmatmul.mubr.bf16.gmra.mxu0 %v888
        %v1079 = vpop.f32.mrf.mxu0
        %v1080 = vadd.f32 %v1038, %v1079
        %v1081 = vpop.f32.mrf.mxu0
        %v1082 = vpop.f32.mrf.mxu0
        %v1083 = vadd.f32 %v1038, %v1082
        %v1084 = vpop.f32.mrf.mxu0
        %1085 = vmatprep.mubr.bf16.mxu0 0
        %1086 = vmatmul.mubr.bf16.gmra.mxu0 %v891
        %v1087 = vpop.f32.mrf.mxu0
        %v1088 = vadd.f32 %v1038, %v1087
        %v1089 = vpop.f32.mrf.mxu0
        %v1090 = vpop.f32.mrf.mxu0
        %v1091 = vadd.f32 %v1038, %v1090
        %v1092 = vpop.f32.mrf.mxu0
        %1093 = vmatprep.mubr.bf16.mxu0 0
        %1094 = vmatmul.mubr.bf16.gmra.mxu0 %v894
        %v1095 = vpop.f32.mrf.mxu0
        %v1096 = vadd.f32 %v1038, %v1095
        %v1097 = vpop.f32.mrf.mxu0
        %v1098 = vpop.f32.mrf.mxu0
        %v1099 = vadd.f32 %v1038, %v1098
        %v1100 = vpop.f32.mrf.mxu0
        %1101 = vmatprep.mubr.bf16.mxu0 0
        %1102 = vmatmul.mubr.bf16.gmra.mxu0 %v897
        %v1103 = vpop.f32.mrf.mxu0
        %v1104 = vadd.f32 %v1038, %v1103
        %v1105 = vpop.f32.mrf.mxu0
        %v1106 = vpop.f32.mrf.mxu0
        %v1107 = vadd.f32 %v1038, %v1106
        %v1108 = vpop.f32.mrf.mxu0
        %1109 = vdwg.mxu0
        %v1110 = vsel %vm983, %v710, 0.0
        %v1111 = vsel %vm984, %v703, 0.0
        %v1112 = vsel %vm985, %v704, 0.0
        %v1113 = vsel %vm986, %v705, 0.0
        %v1114 = vsel %vm987, %v706, 0.0
        %v1115 = vsel %vm988, %v707, 0.0
        %v1116 = vsel %vm989, %v708, 0.0
        %v1117 = vsel %vm990, %v709, 0.0
        %v1118 = vmul.f32 %v1110, %v1080
        %v1119 = vmul.f32 %v1111, %v1083
        %v1120 = vmul.f32 %v1112, %v1088
        %v1121 = vmul.f32 %v1113, %v1091
        %v1122 = vmul.f32 %v1114, %v1096
        %v1123 = vmul.f32 %v1115, %v1099
        %v1124 = vmul.f32 %v1116, %v1104
        %v1125 = vmul.f32 %v1117, %v1107
        %v1126 = vadd.f32 %v1023, %v1118
        %v1127 = vadd.f32 %v1024, %v1119
        %v1128 = vadd.f32 %v1025, %v1120
        %v1129 = vadd.f32 %v1026, %v1121
        %v1130 = vadd.f32 %v1027, %v1122
        %v1131 = vadd.f32 %v1028, %v1123
        %v1132 = vadd.f32 %v1029, %v1124
        %v1133 = vadd.f32 %v1030, %v1125
        %s1134 = scalar_lea.vmem %s9, 16
        %v1135 = vld [vmem:[%s1134] sm:$0xf]
        %v1136 = vld [vmem:[%s1134 + $0x4] sm:$0xf]
        %v1137 = vld [vmem:[%s10 + $0x2] sm:$0x1]
        %v1138 = vlaneseq
        %v1139 = vshrl.u32 %v1138, 7
        %v1140 = vsub.s32 0, %v1139
        %v1141 = vrot.slane %v1137, %v1140
        %v1144 = vunpack.c.l.b16 %v1135
        %v1145 = vunpack.c.l.b16 %v1136
        %v1146 = vpack.c.b16 %v1145, %v1144
        %1148 = vmatprep.subr.bf16.mxu0 0
        %1149 = vmatpush1.bf16.msra.mxu0 0
        %1150 = vmatprep.subr.bf16.mxu0 0
        %1151 = vmatpush1.bf16.msra.mxu0 0
        %1152 = vmatprep.subr.bf16.mxu0 0
        %1153 = vmatpush1.bf16.msra.mxu0 0
        %1154 = vmatprep.subr.bf16.mxu0 0
        %1155 = vmatpush1.bf16.msra.mxu0 0
        %1156 = vmatprep.subr.bf16.mxu0 0
        %1157 = vmatpush1.bf16.msra.mxu0 0
        %1158 = vmatprep.subr.bf16.mxu0 0
        %1159 = vmatpush1.bf16.msra.mxu0 0
        %1160 = vmatprep.subr.bf16.mxu0 0
        %1161 = vmatpush1.bf16.msra.mxu0 0
        %1162 = vmatprep.subr.bf16.mxu0 0
        %1163 = vmatpush1.bf16.msra.mxu0 %v1146
        %1164 = vmatprep.subr.bf16.mxu0 0
        %1165 = vmatpush2.bf16.msra.mxu0 0
        %1166 = vmatprep.subr.bf16.mxu0 0
        %1167 = vmatpush2.bf16.msra.mxu0 0
        %1168 = vmatprep.subr.bf16.mxu0 0
        %1169 = vmatpush2.bf16.msra.mxu0 0
        %1170 = vmatprep.subr.bf16.mxu0 0
        %1171 = vmatpush2.bf16.msra.mxu0 0
        %1172 = vmatprep.subr.bf16.mxu0 0
        %1173 = vmatpush2.bf16.msra.mxu0 0
        %1174 = vmatprep.subr.bf16.mxu0 0
        %1175 = vmatpush2.bf16.msra.mxu0 0
        %1176 = vmatprep.subr.bf16.mxu0 0
        %1177 = vmatpush2.bf16.msra.mxu0 0
        %1178 = vmatprep.subr.bf16.mxu0 0
        %1179 = vmatpush2.bf16.msra.mxu0 0
        %1180 = vmatprep.mubr.bf16.mxu0 0
        %1181 = vmatmul.mubr.bf16.gmra.mxu0 %v888
        %v1182 = vpop.f32.mrf.mxu0
        %v1183 = vadd.f32 %v1141, %v1182
        %v1184 = vpop.f32.mrf.mxu0
        %v1185 = vpop.f32.mrf.mxu0
        %v1186 = vadd.f32 %v1141, %v1185
        %v1187 = vpop.f32.mrf.mxu0
        %1188 = vmatprep.mubr.bf16.mxu0 0
        %1189 = vmatmul.mubr.bf16.gmra.mxu0 %v891
        %v1190 = vpop.f32.mrf.mxu0
        %v1191 = vadd.f32 %v1141, %v1190
        %v1192 = vpop.f32.mrf.mxu0
        %v1193 = vpop.f32.mrf.mxu0
        %v1194 = vadd.f32 %v1141, %v1193
        %v1195 = vpop.f32.mrf.mxu0
        %1196 = vmatprep.mubr.bf16.mxu0 0
        %1197 = vmatmul.mubr.bf16.gmra.mxu0 %v894
        %v1198 = vpop.f32.mrf.mxu0
        %v1199 = vadd.f32 %v1141, %v1198
        %v1200 = vpop.f32.mrf.mxu0
        %v1201 = vpop.f32.mrf.mxu0
        %v1202 = vadd.f32 %v1141, %v1201
        %v1203 = vpop.f32.mrf.mxu0
        %1204 = vmatprep.mubr.bf16.mxu0 0
        %1205 = vmatmul.mubr.bf16.gmra.mxu0 %v897
        %v1206 = vpop.f32.mrf.mxu0
        %v1207 = vadd.f32 %v1141, %v1206
        %v1208 = vpop.f32.mrf.mxu0
        %v1209 = vpop.f32.mrf.mxu0
        %v1210 = vadd.f32 %v1141, %v1209
        %v1211 = vpop.f32.mrf.mxu0
        %1212 = vdwg.mxu0
        %v1213 = vrot.slane %v703, 1
        %v1214 = vrot.slane %v704, 1
        %v1215 = vrot.slane %v705, 1
        %v1216 = vrot.slane %v706, 1
        %v1217 = vrot.slane %v707, 1
        %v1218 = vrot.slane %v708, 1
        %v1219 = vrot.slane %v709, 1
        %v1220 = vrot.slane %v710, 1
        %vm1221 = vcmp.lt.s32.totalorder %v973, 7
        %v1222 = vsel %vm1221, %v1219, %v1220
        %v1223 = vsel %vm1221, %v1218, %v1219
        %v1224 = vsel %vm1221, %v1217, %v1218
        %v1225 = vsel %vm1221, %v1216, %v1217
        %v1226 = vsel %vm1221, %v1215, %v1216
        %v1227 = vsel %vm1221, %v1214, %v1215
        %v1228 = vsel %vm1221, %v1213, %v1214
        %v1229 = vsel %vm1221, %v1220, %v1213
        %vm1230 = vcmp.lt.s32.totalorder %v567, 7
        %vm1231 = vcmp.lt.s32.totalorder %v568, 7
        %vm1232 = vcmp.lt.s32.totalorder %v569, 7
        %vm1233 = vcmp.lt.s32.totalorder %v570, 7
        %vm1234 = vcmp.lt.s32.totalorder %v571, 7
        %vm1235 = vcmp.lt.s32.totalorder %v572, 7
        %vm1236 = vcmp.lt.s32.totalorder %v573, 7
        %vm1237 = vcmp.lt.s32.totalorder %v574, 7
        %vm1238 = vmand %vm983, %vm1230
        %vm1239 = vmand %vm984, %vm1231
        %vm1240 = vmand %vm985, %vm1232
        %vm1241 = vmand %vm986, %vm1233
        %vm1242 = vmand %vm987, %vm1234
        %vm1243 = vmand %vm988, %vm1235
        %vm1244 = vmand %vm989, %vm1236
        %vm1245 = vmand %vm990, %vm1237
        %v1246 = vsel %vm1238, %v1229, 0.0
        %v1247 = vsel %vm1239, %v1228, 0.0
        %v1248 = vsel %vm1240, %v1227, 0.0
        %v1249 = vsel %vm1241, %v1226, 0.0
        %v1250 = vsel %vm1242, %v1225, 0.0
        %v1251 = vsel %vm1243, %v1224, 0.0
        %v1252 = vsel %vm1244, %v1223, 0.0
        %v1253 = vsel %vm1245, %v1222, 0.0
        %v1254 = vmul.f32 %v1246, %v1183
        %v1255 = vmul.f32 %v1247, %v1186
        %v1256 = vmul.f32 %v1248, %v1191
        %v1257 = vmul.f32 %v1249, %v1194
        %v1258 = vmul.f32 %v1250, %v1199
        %v1259 = vmul.f32 %v1251, %v1202
        %v1260 = vmul.f32 %v1252, %v1207
        %v1261 = vmul.f32 %v1253, %v1210
        %v1262 = vadd.f32 %v1126, %v1254
        %v1263 = vadd.f32 %v1127, %v1255
        %v1264 = vadd.f32 %v1128, %v1256
        %v1265 = vadd.f32 %v1129, %v1257
        %v1266 = vadd.f32 %v1130, %v1258
        %v1267 = vadd.f32 %v1131, %v1259
        %v1268 = vadd.f32 %v1132, %v1260
        %v1269 = vadd.f32 %v1133, %v1261
        %s1270 = scalar_lea.vmem %s9, 24
        %v1271 = vld [vmem:[%s1270] sm:$0xf]
        %v1272 = vld [vmem:[%s1270 + $0x4] sm:$0xf]
        %v1273 = vld [vmem:[%s10 + $0x3] sm:$0x1]
        %v1274 = vlaneseq
        %v1275 = vshrl.u32 %v1274, 7
        %v1276 = vsub.s32 0, %v1275
        %v1277 = vrot.slane %v1273, %v1276
        %v1280 = vunpack.c.l.b16 %v1271
        %v1281 = vunpack.c.l.b16 %v1272
        %v1282 = vpack.c.b16 %v1281, %v1280
        %1284 = vmatprep.subr.bf16.mxu0 0
        %1285 = vmatpush1.bf16.msra.mxu0 0
        %1286 = vmatprep.subr.bf16.mxu0 0
        %1287 = vmatpush1.bf16.msra.mxu0 0
        %1288 = vmatprep.subr.bf16.mxu0 0
        %1289 = vmatpush1.bf16.msra.mxu0 0
        %1290 = vmatprep.subr.bf16.mxu0 0
        %1291 = vmatpush1.bf16.msra.mxu0 0
        %1292 = vmatprep.subr.bf16.mxu0 0
        %1293 = vmatpush1.bf16.msra.mxu0 0
        %1294 = vmatprep.subr.bf16.mxu0 0
        %1295 = vmatpush1.bf16.msra.mxu0 0
        %1296 = vmatprep.subr.bf16.mxu0 0
        %1297 = vmatpush1.bf16.msra.mxu0 0
        %1298 = vmatprep.subr.bf16.mxu0 0
        %1299 = vmatpush1.bf16.msra.mxu0 %v1282
        %1300 = vmatprep.subr.bf16.mxu0 0
        %1301 = vmatpush2.bf16.msra.mxu0 0
        %1302 = vmatprep.subr.bf16.mxu0 0
        %1303 = vmatpush2.bf16.msra.mxu0 0
        %1304 = vmatprep.subr.bf16.mxu0 0
        %1305 = vmatpush2.bf16.msra.mxu0 0
        %1306 = vmatprep.subr.bf16.mxu0 0
        %1307 = vmatpush2.bf16.msra.mxu0 0
        %1308 = vmatprep.subr.bf16.mxu0 0
        %1309 = vmatpush2.bf16.msra.mxu0 0
        %1310 = vmatprep.subr.bf16.mxu0 0
        %1311 = vmatpush2.bf16.msra.mxu0 0
        %1312 = vmatprep.subr.bf16.mxu0 0
        %1313 = vmatpush2.bf16.msra.mxu0 0
        %1314 = vmatprep.subr.bf16.mxu0 0
        %1315 = vmatpush2.bf16.msra.mxu0 0
        %1316 = vmatprep.mubr.bf16.mxu0 0
        %1317 = vmatmul.mubr.bf16.gmra.mxu0 %v888
        %v1318 = vpop.f32.mrf.mxu0
        %v1319 = vadd.f32 %v1277, %v1318
        %v1320 = vpop.f32.mrf.mxu0
        %v1321 = vpop.f32.mrf.mxu0
        %v1322 = vadd.f32 %v1277, %v1321
        %v1323 = vpop.f32.mrf.mxu0
        %1324 = vmatprep.mubr.bf16.mxu0 0
        %1325 = vmatmul.mubr.bf16.gmra.mxu0 %v891
        %v1326 = vpop.f32.mrf.mxu0
        %v1327 = vadd.f32 %v1277, %v1326
        %v1328 = vpop.f32.mrf.mxu0
        %v1329 = vpop.f32.mrf.mxu0
        %v1330 = vadd.f32 %v1277, %v1329
        %v1331 = vpop.f32.mrf.mxu0
        %1332 = vmatprep.mubr.bf16.mxu0 0
        %1333 = vmatmul.mubr.bf16.gmra.mxu0 %v894
        %v1334 = vpop.f32.mrf.mxu0
        %v1335 = vadd.f32 %v1277, %v1334
        %v1336 = vpop.f32.mrf.mxu0
        %v1337 = vpop.f32.mrf.mxu0
        %v1338 = vadd.f32 %v1277, %v1337
        %v1339 = vpop.f32.mrf.mxu0
        %1340 = vmatprep.mubr.bf16.mxu0 0
        %1341 = vmatmul.mubr.bf16.gmra.mxu0 %v897
        %v1342 = vpop.f32.mrf.mxu0
        %v1343 = vadd.f32 %v1277, %v1342
        %v1344 = vpop.f32.mrf.mxu0
        %v1345 = vpop.f32.mrf.mxu0
        %v1346 = vadd.f32 %v1277, %v1345
        %v1347 = vpop.f32.mrf.mxu0
        %1348 = vdwg.mxu0
        %v1349 = vsel %vm991, %v982, 0.0
        %v1350 = vsel %vm992, %v981, 0.0
        %v1351 = vsel %vm993, %v980, 0.0
        %v1352 = vsel %vm994, %v979, 0.0
        %v1353 = vsel %vm995, %v978, 0.0
        %v1354 = vsel %vm996, %v977, 0.0
        %v1355 = vsel %vm997, %v976, 0.0
        %v1356 = vsel %vm998, %v975, 0.0
        %v1357 = vmul.f32 %v1349, %v1319
        %v1358 = vmul.f32 %v1350, %v1322
        %v1359 = vmul.f32 %v1351, %v1327
        %v1360 = vmul.f32 %v1352, %v1330
        %v1361 = vmul.f32 %v1353, %v1335
        %v1362 = vmul.f32 %v1354, %v1338
        %v1363 = vmul.f32 %v1355, %v1343
        %v1364 = vmul.f32 %v1356, %v1346
        %v1365 = vadd.f32 %v1262, %v1357
        %v1366 = vadd.f32 %v1263, %v1358
        %v1367 = vadd.f32 %v1264, %v1359
        %v1368 = vadd.f32 %v1265, %v1360
        %v1369 = vadd.f32 %v1266, %v1361
        %v1370 = vadd.f32 %v1267, %v1362
        %v1371 = vadd.f32 %v1268, %v1363
        %v1372 = vadd.f32 %v1269, %v1364
        %s1373 = scalar_lea.vmem %s9, 32
        %v1374 = vld [vmem:[%s1373] sm:$0xf]
        %v1375 = vld [vmem:[%s1373 + $0x4] sm:$0xf]
        %v1376 = vld [vmem:[%s10 + $0x4] sm:$0x1]
        %v1377 = vlaneseq
        %v1378 = vshrl.u32 %v1377, 7
        %v1379 = vsub.s32 0, %v1378
        %v1380 = vrot.slane %v1376, %v1379
        %v1383 = vunpack.c.l.b16 %v1374
        %v1384 = vunpack.c.l.b16 %v1375
        %v1385 = vpack.c.b16 %v1384, %v1383
        %1387 = vmatprep.subr.bf16.mxu0 0
        %1388 = vmatpush1.bf16.msra.mxu0 0
        %1389 = vmatprep.subr.bf16.mxu0 0
        %1390 = vmatpush1.bf16.msra.mxu0 0
        %1391 = vmatprep.subr.bf16.mxu0 0
        %1392 = vmatpush1.bf16.msra.mxu0 0
        %1393 = vmatprep.subr.bf16.mxu0 0
        %1394 = vmatpush1.bf16.msra.mxu0 0
        %1395 = vmatprep.subr.bf16.mxu0 0
        %1396 = vmatpush1.bf16.msra.mxu0 0
        %1397 = vmatprep.subr.bf16.mxu0 0
        %1398 = vmatpush1.bf16.msra.mxu0 0
        %1399 = vmatprep.subr.bf16.mxu0 0
        %1400 = vmatpush1.bf16.msra.mxu0 0
        %1401 = vmatprep.subr.bf16.mxu0 0
        %1402 = vmatpush1.bf16.msra.mxu0 %v1385
        %1403 = vmatprep.subr.bf16.mxu0 0
        %1404 = vmatpush2.bf16.msra.mxu0 0
        %1405 = vmatprep.subr.bf16.mxu0 0
        %1406 = vmatpush2.bf16.msra.mxu0 0
        %1407 = vmatprep.subr.bf16.mxu0 0
        %1408 = vmatpush2.bf16.msra.mxu0 0
        %1409 = vmatprep.subr.bf16.mxu0 0
        %1410 = vmatpush2.bf16.msra.mxu0 0
        %1411 = vmatprep.subr.bf16.mxu0 0
        %1412 = vmatpush2.bf16.msra.mxu0 0
        %1413 = vmatprep.subr.bf16.mxu0 0
        %1414 = vmatpush2.bf16.msra.mxu0 0
        %1415 = vmatprep.subr.bf16.mxu0 0
        %1416 = vmatpush2.bf16.msra.mxu0 0
        %1417 = vmatprep.subr.bf16.mxu0 0
        %1418 = vmatpush2.bf16.msra.mxu0 0
        %1419 = vmatprep.mubr.bf16.mxu0 0
        %1420 = vmatmul.mubr.bf16.gmra.mxu0 %v888
        %v1421 = vpop.f32.mrf.mxu0
        %v1422 = vadd.f32 %v1380, %v1421
        %v1423 = vpop.f32.mrf.mxu0
        %v1424 = vpop.f32.mrf.mxu0
        %v1425 = vadd.f32 %v1380, %v1424
        %v1426 = vpop.f32.mrf.mxu0
        %1427 = vmatprep.mubr.bf16.mxu0 0
        %1428 = vmatmul.mubr.bf16.gmra.mxu0 %v891
        %v1429 = vpop.f32.mrf.mxu0
        %v1430 = vadd.f32 %v1380, %v1429
        %v1431 = vpop.f32.mrf.mxu0
        %v1432 = vpop.f32.mrf.mxu0
        %v1433 = vadd.f32 %v1380, %v1432
        %v1434 = vpop.f32.mrf.mxu0
        %1435 = vmatprep.mubr.bf16.mxu0 0
        %1436 = vmatmul.mubr.bf16.gmra.mxu0 %v894
        %v1437 = vpop.f32.mrf.mxu0
        %v1438 = vadd.f32 %v1380, %v1437
        %v1439 = vpop.f32.mrf.mxu0
        %v1440 = vpop.f32.mrf.mxu0
        %v1441 = vadd.f32 %v1380, %v1440
        %v1442 = vpop.f32.mrf.mxu0
        %1443 = vmatprep.mubr.bf16.mxu0 0
        %1444 = vmatmul.mubr.bf16.gmra.mxu0 %v897
        %v1445 = vpop.f32.mrf.mxu0
        %v1446 = vadd.f32 %v1380, %v1445
        %v1447 = vpop.f32.mrf.mxu0
        %v1448 = vpop.f32.mrf.mxu0
        %v1449 = vadd.f32 %v1380, %v1448
        %v1450 = vpop.f32.mrf.mxu0
        %1451 = vdwg.mxu0
        %v1452 = vmul.f32 %v703, %v1422
        %v1453 = vmul.f32 %v704, %v1425
        %v1454 = vmul.f32 %v705, %v1430
        %v1455 = vmul.f32 %v706, %v1433
        %v1456 = vmul.f32 %v707, %v1438
        %v1457 = vmul.f32 %v708, %v1441
        %v1458 = vmul.f32 %v709, %v1446
        %v1459 = vmul.f32 %v710, %v1449
        %v1460 = vadd.f32 %v1365, %v1452
        %v1461 = vadd.f32 %v1366, %v1453
        %v1462 = vadd.f32 %v1367, %v1454
        %v1463 = vadd.f32 %v1368, %v1455
        %v1464 = vadd.f32 %v1369, %v1456
        %v1465 = vadd.f32 %v1370, %v1457
        %v1466 = vadd.f32 %v1371, %v1458
        %v1467 = vadd.f32 %v1372, %v1459
        %s1468 = scalar_lea.vmem %s9, 40
        %v1469 = vld [vmem:[%s1468] sm:$0xf]
        %v1470 = vld [vmem:[%s1468 + $0x4] sm:$0xf]
        %v1471 = vld [vmem:[%s10 + $0x5] sm:$0x1]
        %v1472 = vlaneseq
        %v1473 = vshrl.u32 %v1472, 7
        %v1474 = vsub.s32 0, %v1473
        %v1475 = vrot.slane %v1471, %v1474
        %v1478 = vunpack.c.l.b16 %v1469
        %v1479 = vunpack.c.l.b16 %v1470
        %v1480 = vpack.c.b16 %v1479, %v1478
        %1482 = vmatprep.subr.bf16.mxu0 0
        %1483 = vmatpush1.bf16.msra.mxu0 0
        %1484 = vmatprep.subr.bf16.mxu0 0
        %1485 = vmatpush1.bf16.msra.mxu0 0
        %1486 = vmatprep.subr.bf16.mxu0 0
        %1487 = vmatpush1.bf16.msra.mxu0 0
        %1488 = vmatprep.subr.bf16.mxu0 0
        %1489 = vmatpush1.bf16.msra.mxu0 0
        %1490 = vmatprep.subr.bf16.mxu0 0
        %1491 = vmatpush1.bf16.msra.mxu0 0
        %1492 = vmatprep.subr.bf16.mxu0 0
        %1493 = vmatpush1.bf16.msra.mxu0 0
        %1494 = vmatprep.subr.bf16.mxu0 0
        %1495 = vmatpush1.bf16.msra.mxu0 0
        %1496 = vmatprep.subr.bf16.mxu0 0
        %1497 = vmatpush1.bf16.msra.mxu0 %v1480
        %1498 = vmatprep.subr.bf16.mxu0 0
        %1499 = vmatpush2.bf16.msra.mxu0 0
        %1500 = vmatprep.subr.bf16.mxu0 0
        %1501 = vmatpush2.bf16.msra.mxu0 0
        %1502 = vmatprep.subr.bf16.mxu0 0
        %1503 = vmatpush2.bf16.msra.mxu0 0
        %1504 = vmatprep.subr.bf16.mxu0 0
        %1505 = vmatpush2.bf16.msra.mxu0 0
        %1506 = vmatprep.subr.bf16.mxu0 0
        %1507 = vmatpush2.bf16.msra.mxu0 0
        %1508 = vmatprep.subr.bf16.mxu0 0
        %1509 = vmatpush2.bf16.msra.mxu0 0
        %1510 = vmatprep.subr.bf16.mxu0 0
        %1511 = vmatpush2.bf16.msra.mxu0 0
        %1512 = vmatprep.subr.bf16.mxu0 0
        %1513 = vmatpush2.bf16.msra.mxu0 0
        %1514 = vmatprep.mubr.bf16.mxu0 0
        %1515 = vmatmul.mubr.bf16.gmra.mxu0 %v888
        %v1516 = vpop.f32.mrf.mxu0
        %v1517 = vadd.f32 %v1475, %v1516
        %v1518 = vpop.f32.mrf.mxu0
        %v1519 = vpop.f32.mrf.mxu0
        %v1520 = vadd.f32 %v1475, %v1519
        %v1521 = vpop.f32.mrf.mxu0
        %1522 = vmatprep.mubr.bf16.mxu0 0
        %1523 = vmatmul.mubr.bf16.gmra.mxu0 %v891
        %v1524 = vpop.f32.mrf.mxu0
        %v1525 = vadd.f32 %v1475, %v1524
        %v1526 = vpop.f32.mrf.mxu0
        %v1527 = vpop.f32.mrf.mxu0
        %v1528 = vadd.f32 %v1475, %v1527
        %v1529 = vpop.f32.mrf.mxu0
        %1530 = vmatprep.mubr.bf16.mxu0 0
        %1531 = vmatmul.mubr.bf16.gmra.mxu0 %v894
        %v1532 = vpop.f32.mrf.mxu0
        %v1533 = vadd.f32 %v1475, %v1532
        %v1534 = vpop.f32.mrf.mxu0
        %v1535 = vpop.f32.mrf.mxu0
        %v1536 = vadd.f32 %v1475, %v1535
        %v1537 = vpop.f32.mrf.mxu0
        %1538 = vmatprep.mubr.bf16.mxu0 0
        %1539 = vmatmul.mubr.bf16.gmra.mxu0 %v897
        %v1540 = vpop.f32.mrf.mxu0
        %v1541 = vadd.f32 %v1475, %v1540
        %v1542 = vpop.f32.mrf.mxu0
        %v1543 = vpop.f32.mrf.mxu0
        %v1544 = vadd.f32 %v1475, %v1543
        %v1545 = vpop.f32.mrf.mxu0
        %1546 = vdwg.mxu0
        %v1547 = vsel %vm1230, %v1228, 0.0
        %v1548 = vsel %vm1231, %v1227, 0.0
        %v1549 = vsel %vm1232, %v1226, 0.0
        %v1550 = vsel %vm1233, %v1225, 0.0
        %v1551 = vsel %vm1234, %v1224, 0.0
        %v1552 = vsel %vm1235, %v1223, 0.0
        %v1553 = vsel %vm1236, %v1222, 0.0
        %v1554 = vsel %vm1237, %v1229, 0.0
        %v1555 = vmul.f32 %v1547, %v1517
        %v1556 = vmul.f32 %v1548, %v1520
        %v1557 = vmul.f32 %v1549, %v1525
        %v1558 = vmul.f32 %v1550, %v1528
        %v1559 = vmul.f32 %v1551, %v1533
        %v1560 = vmul.f32 %v1552, %v1536
        %v1561 = vmul.f32 %v1553, %v1541
        %v1562 = vmul.f32 %v1554, %v1544
        %v1563 = vadd.f32 %v1460, %v1555
        %v1564 = vadd.f32 %v1461, %v1556
        %v1565 = vadd.f32 %v1462, %v1557
        %v1566 = vadd.f32 %v1463, %v1558
        %v1567 = vadd.f32 %v1464, %v1559
        %v1568 = vadd.f32 %v1465, %v1560
        %v1569 = vadd.f32 %v1466, %v1561
        %v1570 = vadd.f32 %v1467, %v1562
        %s1571 = scalar_lea.vmem %s9, 48
        %v1572 = vld [vmem:[%s1571] sm:$0xf]
        %v1573 = vld [vmem:[%s1571 + $0x4] sm:$0xf]
        %v1574 = vld [vmem:[%s10 + $0x6] sm:$0x1]
        %v1575 = vlaneseq
        %v1576 = vshrl.u32 %v1575, 7
        %v1577 = vsub.s32 0, %v1576
        %v1578 = vrot.slane %v1574, %v1577
        %v1581 = vunpack.c.l.b16 %v1572
        %v1582 = vunpack.c.l.b16 %v1573
        %v1583 = vpack.c.b16 %v1582, %v1581
        %1585 = vmatprep.subr.bf16.mxu0 0
        %1586 = vmatpush1.bf16.msra.mxu0 0
        %1587 = vmatprep.subr.bf16.mxu0 0
        %1588 = vmatpush1.bf16.msra.mxu0 0
        %1589 = vmatprep.subr.bf16.mxu0 0
        %1590 = vmatpush1.bf16.msra.mxu0 0
        %1591 = vmatprep.subr.bf16.mxu0 0
        %1592 = vmatpush1.bf16.msra.mxu0 0
        %1593 = vmatprep.subr.bf16.mxu0 0
        %1594 = vmatpush1.bf16.msra.mxu0 0
        %1595 = vmatprep.subr.bf16.mxu0 0
        %1596 = vmatpush1.bf16.msra.mxu0 0
        %1597 = vmatprep.subr.bf16.mxu0 0
        %1598 = vmatpush1.bf16.msra.mxu0 0
        %1599 = vmatprep.subr.bf16.mxu0 0
        %1600 = vmatpush1.bf16.msra.mxu0 %v1583
        %1601 = vmatprep.subr.bf16.mxu0 0
        %1602 = vmatpush2.bf16.msra.mxu0 0
        %1603 = vmatprep.subr.bf16.mxu0 0
        %1604 = vmatpush2.bf16.msra.mxu0 0
        %1605 = vmatprep.subr.bf16.mxu0 0
        %1606 = vmatpush2.bf16.msra.mxu0 0
        %1607 = vmatprep.subr.bf16.mxu0 0
        %1608 = vmatpush2.bf16.msra.mxu0 0
        %1609 = vmatprep.subr.bf16.mxu0 0
        %1610 = vmatpush2.bf16.msra.mxu0 0
        %1611 = vmatprep.subr.bf16.mxu0 0
        %1612 = vmatpush2.bf16.msra.mxu0 0
        %1613 = vmatprep.subr.bf16.mxu0 0
        %1614 = vmatpush2.bf16.msra.mxu0 0
        %1615 = vmatprep.subr.bf16.mxu0 0
        %1616 = vmatpush2.bf16.msra.mxu0 0
        %1617 = vmatprep.mubr.bf16.mxu0 0
        %1618 = vmatmul.mubr.bf16.gmra.mxu0 %v888
        %v1619 = vpop.f32.mrf.mxu0
        %v1620 = vadd.f32 %v1578, %v1619
        %v1621 = vpop.f32.mrf.mxu0
        %v1622 = vpop.f32.mrf.mxu0
        %v1623 = vadd.f32 %v1578, %v1622
        %v1624 = vpop.f32.mrf.mxu0
        %1625 = vmatprep.mubr.bf16.mxu0 0
        %1626 = vmatmul.mubr.bf16.gmra.mxu0 %v891
        %v1627 = vpop.f32.mrf.mxu0
        %v1628 = vadd.f32 %v1578, %v1627
        %v1629 = vpop.f32.mrf.mxu0
        %v1630 = vpop.f32.mrf.mxu0
        %v1631 = vadd.f32 %v1578, %v1630
        %v1632 = vpop.f32.mrf.mxu0
        %1633 = vmatprep.mubr.bf16.mxu0 0
        %1634 = vmatmul.mubr.bf16.gmra.mxu0 %v894
        %v1635 = vpop.f32.mrf.mxu0
        %v1636 = vadd.f32 %v1578, %v1635
        %v1637 = vpop.f32.mrf.mxu0
        %v1638 = vpop.f32.mrf.mxu0
        %v1639 = vadd.f32 %v1578, %v1638
        %v1640 = vpop.f32.mrf.mxu0
        %1641 = vmatprep.mubr.bf16.mxu0 0
        %1642 = vmatmul.mubr.bf16.gmra.mxu0 %v897
        %v1643 = vpop.f32.mrf.mxu0
        %v1644 = vadd.f32 %v1578, %v1643
        %v1645 = vpop.f32.mrf.mxu0
        %v1646 = vpop.f32.mrf.mxu0
        %v1647 = vadd.f32 %v1578, %v1646
        %v1648 = vpop.f32.mrf.mxu0
        %1649 = vdwg.mxu0
        %vm1650 = vcmp.lt.s32.totalorder %v559, 7
        %vm1651 = vcmp.lt.s32.totalorder %v560, 7
        %vm1652 = vcmp.lt.s32.totalorder %v561, 7
        %vm1653 = vcmp.lt.s32.totalorder %v562, 7
        %vm1654 = vcmp.lt.s32.totalorder %v563, 7
        %vm1655 = vcmp.lt.s32.totalorder %v564, 7
        %vm1656 = vcmp.lt.s32.totalorder %v565, 7
        %vm1657 = vcmp.lt.s32.totalorder %v566, 7
        %vm1658 = vmand %vm1650, %vm991
        %vm1659 = vmand %vm1651, %vm992
        %vm1660 = vmand %vm1652, %vm993
        %vm1661 = vmand %vm1653, %vm994
        %vm1662 = vmand %vm1654, %vm995
        %vm1663 = vmand %vm1655, %vm996
        %vm1664 = vmand %vm1656, %vm997
        %vm1665 = vmand %vm1657, %vm998
        %v1666 = vsel %vm1658, %v981, 0.0
        %v1667 = vsel %vm1659, %v980, 0.0
        %v1668 = vsel %vm1660, %v979, 0.0
        %v1669 = vsel %vm1661, %v978, 0.0
        %v1670 = vsel %vm1662, %v977, 0.0
        %v1671 = vsel %vm1663, %v976, 0.0
        %v1672 = vsel %vm1664, %v975, 0.0
        %v1673 = vsel %vm1665, %v982, 0.0
        %v1674 = vmul.f32 %v1666, %v1620
        %v1675 = vmul.f32 %v1667, %v1623
        %v1676 = vmul.f32 %v1668, %v1628
        %v1677 = vmul.f32 %v1669, %v1631
        %v1678 = vmul.f32 %v1670, %v1636
        %v1679 = vmul.f32 %v1671, %v1639
        %v1680 = vmul.f32 %v1672, %v1644
        %v1681 = vmul.f32 %v1673, %v1647
        %v1682 = vadd.f32 %v1563, %v1674
        %v1683 = vadd.f32 %v1564, %v1675
        %v1684 = vadd.f32 %v1565, %v1676
        %v1685 = vadd.f32 %v1566, %v1677
        %v1686 = vadd.f32 %v1567, %v1678
        %v1687 = vadd.f32 %v1568, %v1679
        %v1688 = vadd.f32 %v1569, %v1680
        %v1689 = vadd.f32 %v1570, %v1681
        %s1690 = scalar_lea.vmem %s9, 56
        %v1691 = vld [vmem:[%s1690] sm:$0xf]
        %v1692 = vld [vmem:[%s1690 + $0x4] sm:$0xf]
        %v1693 = vld [vmem:[%s10 + $0x7] sm:$0x1]
        %v1694 = vlaneseq
        %v1695 = vshrl.u32 %v1694, 7
        %v1696 = vsub.s32 0, %v1695
        %v1697 = vrot.slane %v1693, %v1696
        %v1700 = vunpack.c.l.b16 %v1691
        %v1701 = vunpack.c.l.b16 %v1692
        %v1702 = vpack.c.b16 %v1701, %v1700
        %1704 = vmatprep.subr.bf16.mxu0 0
        %1705 = vmatpush1.bf16.msra.mxu0 0
        %1706 = vmatprep.subr.bf16.mxu0 0
        %1707 = vmatpush1.bf16.msra.mxu0 0
        %1708 = vmatprep.subr.bf16.mxu0 0
        %1709 = vmatpush1.bf16.msra.mxu0 0
        %1710 = vmatprep.subr.bf16.mxu0 0
        %1711 = vmatpush1.bf16.msra.mxu0 0
        %1712 = vmatprep.subr.bf16.mxu0 0
        %1713 = vmatpush1.bf16.msra.mxu0 0
        %1714 = vmatprep.subr.bf16.mxu0 0
        %1715 = vmatpush1.bf16.msra.mxu0 0
        %1716 = vmatprep.subr.bf16.mxu0 0
        %1717 = vmatpush1.bf16.msra.mxu0 0
        %1718 = vmatprep.subr.bf16.mxu0 0
        %1719 = vmatpush1.bf16.msra.mxu0 %v1702
        %1720 = vmatprep.subr.bf16.mxu0 0
        %1721 = vmatpush2.bf16.msra.mxu0 0
        %1722 = vmatprep.subr.bf16.mxu0 0
        %1723 = vmatpush2.bf16.msra.mxu0 0
        %1724 = vmatprep.subr.bf16.mxu0 0
        %1725 = vmatpush2.bf16.msra.mxu0 0
        %1726 = vmatprep.subr.bf16.mxu0 0
        %1727 = vmatpush2.bf16.msra.mxu0 0
        %1728 = vmatprep.subr.bf16.mxu0 0
        %1729 = vmatpush2.bf16.msra.mxu0 0
        %1730 = vmatprep.subr.bf16.mxu0 0
        %1731 = vmatpush2.bf16.msra.mxu0 0
        %1732 = vmatprep.subr.bf16.mxu0 0
        %1733 = vmatpush2.bf16.msra.mxu0 0
        %1734 = vmatprep.subr.bf16.mxu0 0
        %1735 = vmatpush2.bf16.msra.mxu0 0
        %1736 = vmatprep.mubr.bf16.mxu0 0
        %1737 = vmatmul.mubr.bf16.gmra.mxu0 %v888
        %v1738 = vpop.f32.mrf.mxu0
        %v1739 = vadd.f32 %v1697, %v1738
        %v1740 = vpop.f32.mrf.mxu0
        %v1741 = vpop.f32.mrf.mxu0
        %v1742 = vadd.f32 %v1697, %v1741
        %v1743 = vpop.f32.mrf.mxu0
        %1744 = vmatprep.mubr.bf16.mxu0 0
        %1745 = vmatmul.mubr.bf16.gmra.mxu0 %v891
        %v1746 = vpop.f32.mrf.mxu0
        %v1747 = vadd.f32 %v1697, %v1746
        %v1748 = vpop.f32.mrf.mxu0
        %v1749 = vpop.f32.mrf.mxu0
        %v1750 = vadd.f32 %v1697, %v1749
        %v1751 = vpop.f32.mrf.mxu0
        %1752 = vmatprep.mubr.bf16.mxu0 0
        %1753 = vmatmul.mubr.bf16.gmra.mxu0 %v894
        %v1754 = vpop.f32.mrf.mxu0
        %v1755 = vadd.f32 %v1697, %v1754
        %v1756 = vpop.f32.mrf.mxu0
        %v1757 = vpop.f32.mrf.mxu0
        %v1758 = vadd.f32 %v1697, %v1757
        %v1759 = vpop.f32.mrf.mxu0
        %1760 = vmatprep.mubr.bf16.mxu0 0
        %1761 = vmatmul.mubr.bf16.gmra.mxu0 %v897
        %v1762 = vpop.f32.mrf.mxu0
        %v1763 = vadd.f32 %v1697, %v1762
        %v1764 = vpop.f32.mrf.mxu0
        %v1765 = vpop.f32.mrf.mxu0
        %v1766 = vadd.f32 %v1697, %v1765
        %v1767 = vpop.f32.mrf.mxu0
        %1768 = vdwg.mxu0
        %v1769 = vsel %vm1650, %v704, 0.0
        %v1770 = vsel %vm1651, %v705, 0.0
        %v1771 = vsel %vm1652, %v706, 0.0
        %v1772 = vsel %vm1653, %v707, 0.0
        %v1773 = vsel %vm1654, %v708, 0.0
        %v1774 = vsel %vm1655, %v709, 0.0
        %v1775 = vsel %vm1656, %v710, 0.0
        %v1776 = vsel %vm1657, %v703, 0.0
        %v1777 = vmul.f32 %v1769, %v1739
        %v1778 = vmul.f32 %v1770, %v1742
        %v1779 = vmul.f32 %v1771, %v1747
        %v1780 = vmul.f32 %v1772, %v1750
        %v1781 = vmul.f32 %v1773, %v1755
        %v1782 = vmul.f32 %v1774, %v1758
        %v1783 = vmul.f32 %v1775, %v1763
        %v1784 = vmul.f32 %v1776, %v1766
        %v1785 = vadd.f32 %v1682, %v1777
        %v1786 = vadd.f32 %v1683, %v1778
        %v1787 = vadd.f32 %v1684, %v1779
        %v1788 = vadd.f32 %v1685, %v1780
        %v1789 = vadd.f32 %v1686, %v1781
        %v1790 = vadd.f32 %v1687, %v1782
        %v1791 = vadd.f32 %v1688, %v1783
        %v1792 = vadd.f32 %v1689, %v1784
        %s1793 = scalar_lea.vmem %s9, 64
        %v1794 = vld [vmem:[%s1793] sm:$0xf]
        %v1795 = vld [vmem:[%s1793 + $0x4] sm:$0xf]
        %v1796 = vld [vmem:[%s10 + $0x8] sm:$0x1]
        %v1797 = vlaneseq
        %v1798 = vshrl.u32 %v1797, 7
        %v1799 = vsub.s32 0, %v1798
        %v1800 = vrot.slane %v1796, %v1799
        %v1803 = vunpack.c.l.b16 %v1794
        %v1804 = vunpack.c.l.b16 %v1795
        %v1805 = vpack.c.b16 %v1804, %v1803
        %1807 = vmatprep.subr.bf16.mxu0 0
        %1808 = vmatpush1.bf16.msra.mxu0 0
        %1809 = vmatprep.subr.bf16.mxu0 0
        %1810 = vmatpush1.bf16.msra.mxu0 0
        %1811 = vmatprep.subr.bf16.mxu0 0
        %1812 = vmatpush1.bf16.msra.mxu0 0
        %1813 = vmatprep.subr.bf16.mxu0 0
        %1814 = vmatpush1.bf16.msra.mxu0 0
        %1815 = vmatprep.subr.bf16.mxu0 0
        %1816 = vmatpush1.bf16.msra.mxu0 0
        %1817 = vmatprep.subr.bf16.mxu0 0
        %1818 = vmatpush1.bf16.msra.mxu0 0
        %1819 = vmatprep.subr.bf16.mxu0 0
        %1820 = vmatpush1.bf16.msra.mxu0 0
        %1821 = vmatprep.subr.bf16.mxu0 0
        %1822 = vmatpush1.bf16.msra.mxu0 %v1805
        %1823 = vmatprep.subr.bf16.mxu0 0
        %1824 = vmatpush2.bf16.msra.mxu0 0
        %1825 = vmatprep.subr.bf16.mxu0 0
        %1826 = vmatpush2.bf16.msra.mxu0 0
        %1827 = vmatprep.subr.bf16.mxu0 0
        %1828 = vmatpush2.bf16.msra.mxu0 0
        %1829 = vmatprep.subr.bf16.mxu0 0
        %1830 = vmatpush2.bf16.msra.mxu0 0
        %1831 = vmatprep.subr.bf16.mxu0 0
        %1832 = vmatpush2.bf16.msra.mxu0 0
        %1833 = vmatprep.subr.bf16.mxu0 0
        %1834 = vmatpush2.bf16.msra.mxu0 0
        %1835 = vmatprep.subr.bf16.mxu0 0
        %1836 = vmatpush2.bf16.msra.mxu0 0
        %1837 = vmatprep.subr.bf16.mxu0 0
        %1838 = vmatpush2.bf16.msra.mxu0 0
        %1839 = vmatprep.mubr.bf16.mxu0 0
        %1840 = vmatmul.mubr.bf16.gmra.mxu0 %v888
        %v1841 = vpop.f32.mrf.mxu0
        %v1842 = vadd.f32 %v1800, %v1841
        %v1843 = vpop.f32.mrf.mxu0
        %v1844 = vpop.f32.mrf.mxu0
        %v1845 = vadd.f32 %v1800, %v1844
        %v1846 = vpop.f32.mrf.mxu0
        %1847 = vmatprep.mubr.bf16.mxu0 0
        %1848 = vmatmul.mubr.bf16.gmra.mxu0 %v891
        %v1849 = vpop.f32.mrf.mxu0
        %v1850 = vadd.f32 %v1800, %v1849
        %v1851 = vpop.f32.mrf.mxu0
        %v1852 = vpop.f32.mrf.mxu0
        %v1853 = vadd.f32 %v1800, %v1852
        %v1854 = vpop.f32.mrf.mxu0
        %1855 = vmatprep.mubr.bf16.mxu0 0
        %1856 = vmatmul.mubr.bf16.gmra.mxu0 %v894
        %v1857 = vpop.f32.mrf.mxu0
        %v1858 = vadd.f32 %v1800, %v1857
        %v1859 = vpop.f32.mrf.mxu0
        %v1860 = vpop.f32.mrf.mxu0
        %v1861 = vadd.f32 %v1800, %v1860
        %v1862 = vpop.f32.mrf.mxu0
        %1863 = vmatprep.mubr.bf16.mxu0 0
        %1864 = vmatmul.mubr.bf16.gmra.mxu0 %v897
        %v1865 = vpop.f32.mrf.mxu0
        %v1866 = vadd.f32 %v1800, %v1865
        %v1867 = vpop.f32.mrf.mxu0
        %v1868 = vpop.f32.mrf.mxu0
        %v1869 = vadd.f32 %v1800, %v1868
        %v1870 = vpop.f32.mrf.mxu0
        %1871 = vdwg.mxu0
        %vm1872 = vmand %vm1650, %vm1230
        %vm1873 = vmand %vm1651, %vm1231
        %vm1874 = vmand %vm1652, %vm1232
        %vm1875 = vmand %vm1653, %vm1233
        %vm1876 = vmand %vm1654, %vm1234
        %vm1877 = vmand %vm1655, %vm1235
        %vm1878 = vmand %vm1656, %vm1236
        %vm1879 = vmand %vm1657, %vm1237
        %v1880 = vsel %vm1872, %v1227, 0.0
        %v1881 = vsel %vm1873, %v1226, 0.0
        %v1882 = vsel %vm1874, %v1225, 0.0
        %v1883 = vsel %vm1875, %v1224, 0.0
        %v1884 = vsel %vm1876, %v1223, 0.0
        %v1885 = vsel %vm1877, %v1222, 0.0
        %v1886 = vsel %vm1878, %v1229, 0.0
        %v1887 = vsel %vm1879, %v1228, 0.0
        %v1888 = vmul.f32 %v1880, %v1842
        %v1889 = vmul.f32 %v1881, %v1845
        %v1890 = vmul.f32 %v1882, %v1850
        %v1891 = vmul.f32 %v1883, %v1853
        %v1892 = vmul.f32 %v1884, %v1858
        %v1893 = vmul.f32 %v1885, %v1861
        %v1894 = vmul.f32 %v1886, %v1866
        %v1895 = vmul.f32 %v1887, %v1869
        %v1896 = vadd.f32 %v1785, %v1888
        %v1897 = vadd.f32 %v1786, %v1889
        %v1898 = vadd.f32 %v1787, %v1890
        %v1899 = vadd.f32 %v1788, %v1891
        %v1900 = vadd.f32 %v1789, %v1892
        %v1901 = vadd.f32 %v1790, %v1893
        %v1902 = vadd.f32 %v1791, %v1894
        %v1903 = vadd.f32 %v1792, %v1895
        %v1904 = vrot.slane %v1896, 7
        %v1905 = vrot.slane %v1897, 7
        %v1906 = vrot.slane %v1898, 7
        %v1907 = vrot.slane %v1899, 7
        %v1908 = vrot.slane %v1900, 7
        %v1909 = vrot.slane %v1901, 7
        %v1910 = vrot.slane %v1902, 7
        %v1911 = vrot.slane %v1903, 7
        %v1912 = vsel %vm974, %v1910, %v1911
        %v1913 = vsel %vm974, %v1909, %v1910
        %v1914 = vsel %vm974, %v1908, %v1909
        %v1915 = vsel %vm974, %v1907, %v1908
        %v1916 = vsel %vm974, %v1906, %v1907
        %v1917 = vsel %vm974, %v1905, %v1906
        %v1918 = vsel %vm974, %v1904, %v1905
        %v1919 = vsel %vm974, %v1911, %v1904
        %v1920 = vsel %vm999, %v1912, 0.0
        %v1921 = vsel %vm1000, %v1919, 0.0
        %v1922 = vsel %vm1001, %v1918, 0.0
        %v1923 = vsel %vm1002, %v1917, 0.0
        %v1924 = vsel %vm1003, %v1916, 0.0
        %v1925 = vsel %vm1004, %v1915, 0.0
        %v1926 = vsel %vm1005, %v1914, 0.0
        %v1927 = vsel %vm1006, %v1913, 0.0
        %v1928 = vld [vmem:[%s11] sm:$0x1]
        %v1929 = vlaneseq
        %v1930 = vshrl.u32 %v1929, 7
        %v1931 = vsub.s32 0, %v1930
        %v1932 = vrot.slane %v1928, %v1931
        %v1933 = vmul.f32 %v1920, %v1932
        %v1934 = vmul.f32 %v1921, %v1932
        %v1935 = vmul.f32 %v1922, %v1932
        %v1936 = vmul.f32 %v1923, %v1932
        %v1937 = vmul.f32 %v1924, %v1932
        %v1938 = vmul.f32 %v1925, %v1932
        %v1939 = vmul.f32 %v1926, %v1932
        %v1940 = vmul.f32 %v1927, %v1932
        %v1941 = vadd.f32 %v1933, 0.0
        %v1942 = vadd.f32 %v1934, 0.0
        %v1943 = vadd.f32 %v1935, 0.0
        %v1944 = vadd.f32 %v1936, 0.0
        %v1945 = vadd.f32 %v1937, 0.0
        %v1946 = vadd.f32 %v1938, 0.0
        %v1947 = vadd.f32 %v1939, 0.0
        %v1948 = vadd.f32 %v1940, 0.0
        %v1949 = vsel %vm983, %v1903, 0.0
        %v1950 = vsel %vm984, %v1896, 0.0
        %v1951 = vsel %vm985, %v1897, 0.0
        %v1952 = vsel %vm986, %v1898, 0.0
        %v1953 = vsel %vm987, %v1899, 0.0
        %v1954 = vsel %vm988, %v1900, 0.0
        %v1955 = vsel %vm989, %v1901, 0.0
        %v1956 = vsel %vm990, %v1902, 0.0
        %v1957 = vld [vmem:[%s11 + $0x1] sm:$0x1]
        %v1958 = vlaneseq
        %v1959 = vshrl.u32 %v1958, 7
        %v1960 = vsub.s32 0, %v1959
        %v1961 = vrot.slane %v1957, %v1960
        %v1962 = vmul.f32 %v1949, %v1961
        %v1963 = vmul.f32 %v1950, %v1961
        %v1964 = vmul.f32 %v1951, %v1961
        %v1965 = vmul.f32 %v1952, %v1961
        %v1966 = vmul.f32 %v1953, %v1961
        %v1967 = vmul.f32 %v1954, %v1961
        %v1968 = vmul.f32 %v1955, %v1961
        %v1969 = vmul.f32 %v1956, %v1961
        %v1970 = vadd.f32 %v1941, %v1962
        %v1971 = vadd.f32 %v1942, %v1963
        %v1972 = vadd.f32 %v1943, %v1964
        %v1973 = vadd.f32 %v1944, %v1965
        %v1974 = vadd.f32 %v1945, %v1966
        %v1975 = vadd.f32 %v1946, %v1967
        %v1976 = vadd.f32 %v1947, %v1968
        %v1977 = vadd.f32 %v1948, %v1969
        %v1978 = vrot.slane %v1896, 1
        %v1979 = vrot.slane %v1897, 1
        %v1980 = vrot.slane %v1898, 1
        %v1981 = vrot.slane %v1899, 1
        %v1982 = vrot.slane %v1900, 1
        %v1983 = vrot.slane %v1901, 1
        %v1984 = vrot.slane %v1902, 1
        %v1985 = vrot.slane %v1903, 1
        %v1986 = vsel %vm1221, %v1984, %v1985
        %v1987 = vsel %vm1221, %v1983, %v1984
        %v1988 = vsel %vm1221, %v1982, %v1983
        %v1989 = vsel %vm1221, %v1981, %v1982
        %v1990 = vsel %vm1221, %v1980, %v1981
        %v1991 = vsel %vm1221, %v1979, %v1980
        %v1992 = vsel %vm1221, %v1978, %v1979
        %v1993 = vsel %vm1221, %v1985, %v1978
        %v1994 = vsel %vm1238, %v1993, 0.0
        %v1995 = vsel %vm1239, %v1992, 0.0
        %v1996 = vsel %vm1240, %v1991, 0.0
        %v1997 = vsel %vm1241, %v1990, 0.0
        %v1998 = vsel %vm1242, %v1989, 0.0
        %v1999 = vsel %vm1243, %v1988, 0.0
        %v2000 = vsel %vm1244, %v1987, 0.0
        %v2001 = vsel %vm1245, %v1986, 0.0
        %v2002 = vld [vmem:[%s11 + $0x2] sm:$0x1]
        %v2003 = vlaneseq
        %v2004 = vshrl.u32 %v2003, 7
        %v2005 = vsub.s32 0, %v2004
        %v2006 = vrot.slane %v2002, %v2005
        %v2007 = vmul.f32 %v1994, %v2006
        %v2008 = vmul.f32 %v1995, %v2006
        %v2009 = vmul.f32 %v1996, %v2006
        %v2010 = vmul.f32 %v1997, %v2006
        %v2011 = vmul.f32 %v1998, %v2006
        %v2012 = vmul.f32 %v1999, %v2006
        %v2013 = vmul.f32 %v2000, %v2006
        %v2014 = vmul.f32 %v2001, %v2006
        %v2015 = vadd.f32 %v1970, %v2007
        %v2016 = vadd.f32 %v1971, %v2008
        %v2017 = vadd.f32 %v1972, %v2009
        %v2018 = vadd.f32 %v1973, %v2010
        %v2019 = vadd.f32 %v1974, %v2011
        %v2020 = vadd.f32 %v1975, %v2012
        %v2021 = vadd.f32 %v1976, %v2013
        %v2022 = vadd.f32 %v1977, %v2014
        %v2023 = vsel %vm991, %v1919, 0.0
        %v2024 = vsel %vm992, %v1918, 0.0
        %v2025 = vsel %vm993, %v1917, 0.0
        %v2026 = vsel %vm994, %v1916, 0.0
        %v2027 = vsel %vm995, %v1915, 0.0
        %v2028 = vsel %vm996, %v1914, 0.0
        %v2029 = vsel %vm997, %v1913, 0.0
        %v2030 = vsel %vm998, %v1912, 0.0
        %v2031 = vld [vmem:[%s11 + $0x3] sm:$0x1]
        %v2032 = vlaneseq
        %v2033 = vshrl.u32 %v2032, 7
        %v2034 = vsub.s32 0, %v2033
        %v2035 = vrot.slane %v2031, %v2034
        %v2036 = vmul.f32 %v2023, %v2035
        %v2037 = vmul.f32 %v2024, %v2035
        %v2038 = vmul.f32 %v2025, %v2035
        %v2039 = vmul.f32 %v2026, %v2035
        %v2040 = vmul.f32 %v2027, %v2035
        %v2041 = vmul.f32 %v2028, %v2035
        %v2042 = vmul.f32 %v2029, %v2035
        %v2043 = vmul.f32 %v2030, %v2035
        %v2044 = vadd.f32 %v2015, %v2036
        %v2045 = vadd.f32 %v2016, %v2037
        %v2046 = vadd.f32 %v2017, %v2038
        %v2047 = vadd.f32 %v2018, %v2039
        %v2048 = vadd.f32 %v2019, %v2040
        %v2049 = vadd.f32 %v2020, %v2041
        %v2050 = vadd.f32 %v2021, %v2042
        %v2051 = vadd.f32 %v2022, %v2043
        %v2052 = vld [vmem:[%s11 + $0x4] sm:$0x1]
        %v2053 = vlaneseq
        %v2054 = vshrl.u32 %v2053, 7
        %v2055 = vsub.s32 0, %v2054
        %v2056 = vrot.slane %v2052, %v2055
        %v2057 = vmul.f32 %v1896, %v2056
        %v2058 = vmul.f32 %v1897, %v2056
        %v2059 = vmul.f32 %v1898, %v2056
        %v2060 = vmul.f32 %v1899, %v2056
        %v2061 = vmul.f32 %v1900, %v2056
        %v2062 = vmul.f32 %v1901, %v2056
        %v2063 = vmul.f32 %v1902, %v2056
        %v2064 = vmul.f32 %v1903, %v2056
        %v2065 = vadd.f32 %v2044, %v2057
        %v2066 = vadd.f32 %v2045, %v2058
        %v2067 = vadd.f32 %v2046, %v2059
        %v2068 = vadd.f32 %v2047, %v2060
        %v2069 = vadd.f32 %v2048, %v2061
        %v2070 = vadd.f32 %v2049, %v2062
        %v2071 = vadd.f32 %v2050, %v2063
        %v2072 = vadd.f32 %v2051, %v2064
        %v2073 = vsel %vm1230, %v1992, 0.0
        %v2074 = vsel %vm1231, %v1991, 0.0
        %v2075 = vsel %vm1232, %v1990, 0.0
        %v2076 = vsel %vm1233, %v1989, 0.0
        %v2077 = vsel %vm1234, %v1988, 0.0
        %v2078 = vsel %vm1235, %v1987, 0.0
        %v2079 = vsel %vm1236, %v1986, 0.0
        %v2080 = vsel %vm1237, %v1993, 0.0
        %v2081 = vld [vmem:[%s11 + $0x5] sm:$0x1]
        %v2082 = vlaneseq
        %v2083 = vshrl.u32 %v2082, 7
        %v2084 = vsub.s32 0, %v2083
        %v2085 = vrot.slane %v2081, %v2084
        %v2086 = vmul.f32 %v2073, %v2085
        %v2087 = vmul.f32 %v2074, %v2085
        %v2088 = vmul.f32 %v2075, %v2085
        %v2089 = vmul.f32 %v2076, %v2085
        %v2090 = vmul.f32 %v2077, %v2085
        %v2091 = vmul.f32 %v2078, %v2085
        %v2092 = vmul.f32 %v2079, %v2085
        %v2093 = vmul.f32 %v2080, %v2085
        %v2094 = vadd.f32 %v2065, %v2086
        %v2095 = vadd.f32 %v2066, %v2087
        %v2096 = vadd.f32 %v2067, %v2088
        %v2097 = vadd.f32 %v2068, %v2089
        %v2098 = vadd.f32 %v2069, %v2090
        %v2099 = vadd.f32 %v2070, %v2091
        %v2100 = vadd.f32 %v2071, %v2092
        %v2101 = vadd.f32 %v2072, %v2093
        %v2102 = vsel %vm1658, %v1918, 0.0
        %v2103 = vsel %vm1659, %v1917, 0.0
        %v2104 = vsel %vm1660, %v1916, 0.0
        %v2105 = vsel %vm1661, %v1915, 0.0
        %v2106 = vsel %vm1662, %v1914, 0.0
        %v2107 = vsel %vm1663, %v1913, 0.0
        %v2108 = vsel %vm1664, %v1912, 0.0
        %v2109 = vsel %vm1665, %v1919, 0.0
        %v2110 = vld [vmem:[%s11 + $0x6] sm:$0x1]
        %v2111 = vlaneseq
        %v2112 = vshrl.u32 %v2111, 7
        %v2113 = vsub.s32 0, %v2112
        %v2114 = vrot.slane %v2110, %v2113
        %v2115 = vmul.f32 %v2102, %v2114
        %v2116 = vmul.f32 %v2103, %v2114
        %v2117 = vmul.f32 %v2104, %v2114
        %v2118 = vmul.f32 %v2105, %v2114
        %v2119 = vmul.f32 %v2106, %v2114
        %v2120 = vmul.f32 %v2107, %v2114
        %v2121 = vmul.f32 %v2108, %v2114
        %v2122 = vmul.f32 %v2109, %v2114
        %v2123 = vadd.f32 %v2094, %v2115
        %v2124 = vadd.f32 %v2095, %v2116
        %v2125 = vadd.f32 %v2096, %v2117
        %v2126 = vadd.f32 %v2097, %v2118
        %v2127 = vadd.f32 %v2098, %v2119
        %v2128 = vadd.f32 %v2099, %v2120
        %v2129 = vadd.f32 %v2100, %v2121
        %v2130 = vadd.f32 %v2101, %v2122
        %v2131 = vsel %vm1650, %v1897, 0.0
        %v2132 = vsel %vm1651, %v1898, 0.0
        %v2133 = vsel %vm1652, %v1899, 0.0
        %v2134 = vsel %vm1653, %v1900, 0.0
        %v2135 = vsel %vm1654, %v1901, 0.0
        %v2136 = vsel %vm1655, %v1902, 0.0
        %v2137 = vsel %vm1656, %v1903, 0.0
        %v2138 = vsel %vm1657, %v1896, 0.0
        %v2139 = vld [vmem:[%s11 + $0x7] sm:$0x1]
        %v2140 = vlaneseq
        %v2141 = vshrl.u32 %v2140, 7
        %v2142 = vsub.s32 0, %v2141
        %v2143 = vrot.slane %v2139, %v2142
        %v2144 = vmul.f32 %v2131, %v2143
        %v2145 = vmul.f32 %v2132, %v2143
        %v2146 = vmul.f32 %v2133, %v2143
        %v2147 = vmul.f32 %v2134, %v2143
        %v2148 = vmul.f32 %v2135, %v2143
        %v2149 = vmul.f32 %v2136, %v2143
        %v2150 = vmul.f32 %v2137, %v2143
        %v2151 = vmul.f32 %v2138, %v2143
        %v2152 = vadd.f32 %v2123, %v2144
        %v2153 = vadd.f32 %v2124, %v2145
        %v2154 = vadd.f32 %v2125, %v2146
        %v2155 = vadd.f32 %v2126, %v2147
        %v2156 = vadd.f32 %v2127, %v2148
        %v2157 = vadd.f32 %v2128, %v2149
        %v2158 = vadd.f32 %v2129, %v2150
        %v2159 = vadd.f32 %v2130, %v2151
        %v2160 = vsel %vm1872, %v1991, 0.0
        %v2161 = vsel %vm1873, %v1990, 0.0
        %v2162 = vsel %vm1874, %v1989, 0.0
        %v2163 = vsel %vm1875, %v1988, 0.0
        %v2164 = vsel %vm1876, %v1987, 0.0
        %v2165 = vsel %vm1877, %v1986, 0.0
        %v2166 = vsel %vm1878, %v1993, 0.0
        %v2167 = vsel %vm1879, %v1992, 0.0
        %v2168 = vld [vmem:[%s11 + $0x8] sm:$0x1]
        %v2169 = vlaneseq
        %v2170 = vshrl.u32 %v2169, 7
        %v2171 = vsub.s32 0, %v2170
        %v2172 = vrot.slane %v2168, %v2171
        %v2173 = vmul.f32 %v2160, %v2172
        %v2174 = vmul.f32 %v2161, %v2172
        %v2175 = vmul.f32 %v2162, %v2172
        %v2176 = vmul.f32 %v2163, %v2172
        %v2177 = vmul.f32 %v2164, %v2172
        %v2178 = vmul.f32 %v2165, %v2172
        %v2179 = vmul.f32 %v2166, %v2172
        %v2180 = vmul.f32 %v2167, %v2172
        %v2181 = vadd.f32 %v2152, %v2173
        %v2182 = vadd.f32 %v2153, %v2174
        %v2183 = vadd.f32 %v2154, %v2175
        %v2184 = vadd.f32 %v2155, %v2176
        %v2185 = vadd.f32 %v2156, %v2177
        %v2186 = vadd.f32 %v2157, %v2178
        %v2187 = vadd.f32 %v2158, %v2179
        %v2188 = vadd.f32 %v2159, %v2180
        %v2189 = vld [vmem:[%s12] sm:$0x1]
        %v2191 = vlaneseq
        %v2192 = vshrl.u32 %v2191, 7
        %v2193 = vsub.s32 0, %v2192
        %v2194 = vrot.slane %v2189, %v2193
        %v2196 = vadd.f32 %v2181, %v2194
        %v2197 = vadd.f32 %v2182, %v2194
        %v2198 = vadd.f32 %v2183, %v2194
        %v2199 = vadd.f32 %v2184, %v2194
        %v2200 = vadd.f32 %v2185, %v2194
        %v2201 = vadd.f32 %v2186, %v2194
        %v2202 = vadd.f32 %v2187, %v2194
        %v2203 = vadd.f32 %v2188, %v2194
        %v2204 = vpack.c.bf16 %v734, %v733
        %v2205 = vpack.c.bf16 %v736, %v735
        %v2206 = vpack.c.bf16 %v738, %v737
        %v2207 = vpack.c.bf16 %v740, %v739
        %v2208 = vld [vmem:[%s13] sm:$0xf]
        %v2209 = vld [vmem:[%s13 + $0x4] sm:$0xf]
        %v2210 = vld [vmem:[%s13 + $0x8] sm:$0xf]
        %v2211 = vld [vmem:[%s13 + $0xc] sm:$0xf]
        %v2212 = vld [vmem:[%s13 + $0x10] sm:$0xf]
        %v2213 = vld [vmem:[%s13 + $0x14] sm:$0xf]
        %v2214 = vld [vmem:[%s13 + $0x18] sm:$0xf]
        %v2215 = vld [vmem:[%s13 + $0x1c] sm:$0xf]
        %v2216 = vld [vmem:[%s14] sm:$0x1]
        %v2218 = vlaneseq
        %v2219 = vshrl.u32 %v2218, 7
        %v2220 = vsub.s32 0, %v2219
        %v2221 = vrot.slane %v2216, %v2220
        %v2231 = vunpack.c.l.b16 %v2208
        %v2232 = vunpack.c.l.b16 %v2209
        %v2233 = vunpack.c.l.b16 %v2210
        %v2234 = vunpack.c.l.b16 %v2211
        %v2235 = vunpack.c.l.b16 %v2212
        %v2236 = vunpack.c.l.b16 %v2213
        %v2237 = vunpack.c.l.b16 %v2214
        %v2238 = vunpack.c.l.b16 %v2215
        %v2239 = vpack.c.b16 %v2232, %v2231
        %v2240 = vpack.c.b16 %v2234, %v2233
        %v2241 = vpack.c.b16 %v2236, %v2235
        %v2242 = vpack.c.b16 %v2238, %v2237
        %v2248 = vsel %vm575, %v2204, 0
        %v2251 = vsel %vm575, %v2205, 0
        %v2254 = vsel %vm575, %v2206, 0
        %v2257 = vsel %vm575, %v2207, 0
        %2259 = vmatprep.subr.bf16.mxu0 0
        %2260 = vmatpush1.bf16.msra.mxu0 0
        %2261 = vmatprep.subr.bf16.mxu0 0
        %2262 = vmatpush1.bf16.msra.mxu0 0
        %2263 = vmatprep.subr.bf16.mxu0 0
        %2264 = vmatpush1.bf16.msra.mxu0 0
        %2265 = vmatprep.subr.bf16.mxu0 0
        %2266 = vmatpush1.bf16.msra.mxu0 0
        %2267 = vmatprep.subr.bf16.mxu0 0
        %2268 = vmatpush1.bf16.msra.mxu0 %v2242
        %2269 = vmatprep.subr.bf16.mxu0 0
        %2270 = vmatpush1.bf16.msra.mxu0 %v2241
        %2271 = vmatprep.subr.bf16.mxu0 0
        %2272 = vmatpush1.bf16.msra.mxu0 %v2240
        %2273 = vmatprep.subr.bf16.mxu0 0
        %2274 = vmatpush1.bf16.msra.mxu0 %v2239
        %2275 = vmatprep.subr.bf16.mxu0 0
        %2276 = vmatpush2.bf16.msra.mxu0 0
        %2277 = vmatprep.subr.bf16.mxu0 0
        %2278 = vmatpush2.bf16.msra.mxu0 0
        %2279 = vmatprep.subr.bf16.mxu0 0
        %2280 = vmatpush2.bf16.msra.mxu0 0
        %2281 = vmatprep.subr.bf16.mxu0 0
        %2282 = vmatpush2.bf16.msra.mxu0 0
        %2283 = vmatprep.subr.bf16.mxu0 0
        %2284 = vmatpush2.bf16.msra.mxu0 0
        %2285 = vmatprep.subr.bf16.mxu0 0
        %2286 = vmatpush2.bf16.msra.mxu0 0
        %2287 = vmatprep.subr.bf16.mxu0 0
        %2288 = vmatpush2.bf16.msra.mxu0 0
        %2289 = vmatprep.subr.bf16.mxu0 0
        %2290 = vmatpush2.bf16.msra.mxu0 0
        %2291 = vmatprep.mubr.bf16.mxu0 0
        %2292 = vmatmul.mubr.bf16.gmra.mxu0 %v2248
        %v2293 = vpop.f32.mrf.mxu0
        %v2294 = vadd.f32 %v2221, %v2293
        %v2295 = vpop.f32.mrf.mxu0
        %v2296 = vpop.f32.mrf.mxu0
        %v2297 = vadd.f32 %v2221, %v2296
        %v2298 = vpop.f32.mrf.mxu0
        %2299 = vmatprep.mubr.bf16.mxu0 0
        %2300 = vmatmul.mubr.bf16.gmra.mxu0 %v2251
        %v2301 = vpop.f32.mrf.mxu0
        %v2302 = vadd.f32 %v2221, %v2301
        %v2303 = vpop.f32.mrf.mxu0
        %v2304 = vpop.f32.mrf.mxu0
        %v2305 = vadd.f32 %v2221, %v2304
        %v2306 = vpop.f32.mrf.mxu0
        %2307 = vmatprep.mubr.bf16.mxu0 0
        %2308 = vmatmul.mubr.bf16.gmra.mxu0 %v2254
        %v2309 = vpop.f32.mrf.mxu0
        %v2310 = vadd.f32 %v2221, %v2309
        %v2311 = vpop.f32.mrf.mxu0
        %v2312 = vpop.f32.mrf.mxu0
        %v2313 = vadd.f32 %v2221, %v2312
        %v2314 = vpop.f32.mrf.mxu0
        %2315 = vmatprep.mubr.bf16.mxu0 0
        %2316 = vmatmul.mubr.bf16.gmra.mxu0 %v2257
        %v2317 = vpop.f32.mrf.mxu0
        %v2318 = vadd.f32 %v2221, %v2317
        %v2319 = vpop.f32.mrf.mxu0
        %v2320 = vpop.f32.mrf.mxu0
        %v2321 = vadd.f32 %v2221, %v2320
        %v2322 = vpop.f32.mrf.mxu0
        %2323 = vdwg.mxu0
        %v2324 = vmul.f32 %v2196, %v2294
        %v2325 = vmul.f32 %v2197, %v2297
        %v2326 = vmul.f32 %v2198, %v2302
        %v2327 = vmul.f32 %v2199, %v2305
        %v2328 = vmul.f32 %v2200, %v2310
        %v2329 = vmul.f32 %v2201, %v2313
        %v2330 = vmul.f32 %v2202, %v2318
        %v2331 = vmul.f32 %v2203, %v2321
        %v2332 = vpack.c.bf16 %v2325, %v2324
        %v2333 = vpack.c.bf16 %v2327, %v2326
        %v2334 = vpack.c.bf16 %v2329, %v2328
        %v2335 = vpack.c.bf16 %v2331, %v2330
        %v2336 = vld [vmem:[%s15] sm:$0xf]
        %v2337 = vld [vmem:[%s15 + $0x4] sm:$0xf]
        %v2338 = vld [vmem:[%s15 + $0x8] sm:$0xf]
        %v2339 = vld [vmem:[%s15 + $0xc] sm:$0xf]
        %v2340 = vld [vmem:[%s15 + $0x10] sm:$0xf]
        %v2341 = vld [vmem:[%s15 + $0x14] sm:$0xf]
        %v2342 = vld [vmem:[%s15 + $0x18] sm:$0xf]
        %v2343 = vld [vmem:[%s15 + $0x1c] sm:$0xf]
        %v2344 = vld [vmem:[%s16] sm:$0x1]
        %v2346 = vlaneseq
        %v2347 = vshrl.u32 %v2346, 7
        %v2348 = vsub.s32 0, %v2347
        %v2349 = vrot.slane %v2344, %v2348
        %v2359 = vunpack.c.l.b16 %v2336
        %v2360 = vunpack.c.l.b16 %v2337
        %v2361 = vunpack.c.l.b16 %v2338
        %v2362 = vunpack.c.l.b16 %v2339
        %v2363 = vunpack.c.l.b16 %v2340
        %v2364 = vunpack.c.l.b16 %v2341
        %v2365 = vunpack.c.l.b16 %v2342
        %v2366 = vunpack.c.l.b16 %v2343
        %v2367 = vpack.c.b16 %v2360, %v2359
        %v2368 = vpack.c.b16 %v2362, %v2361
        %v2369 = vpack.c.b16 %v2364, %v2363
        %v2370 = vpack.c.b16 %v2366, %v2365
        %v2376 = vsel %vm575, %v2332, 0
        %v2379 = vsel %vm575, %v2333, 0
        %v2382 = vsel %vm575, %v2334, 0
        %v2385 = vsel %vm575, %v2335, 0
        %2387 = vmatprep.subr.bf16.mxu0 0
        %2388 = vmatpush1.bf16.msra.mxu0 0
        %2389 = vmatprep.subr.bf16.mxu0 0
        %2390 = vmatpush1.bf16.msra.mxu0 0
        %2391 = vmatprep.subr.bf16.mxu0 0
        %2392 = vmatpush1.bf16.msra.mxu0 0
        %2393 = vmatprep.subr.bf16.mxu0 0
        %2394 = vmatpush1.bf16.msra.mxu0 0
        %2395 = vmatprep.subr.bf16.mxu0 0
        %2396 = vmatpush1.bf16.msra.mxu0 %v2370
        %2397 = vmatprep.subr.bf16.mxu0 0
        %2398 = vmatpush1.bf16.msra.mxu0 %v2369
        %2399 = vmatprep.subr.bf16.mxu0 0
        %2400 = vmatpush1.bf16.msra.mxu0 %v2368
        %2401 = vmatprep.subr.bf16.mxu0 0
        %2402 = vmatpush1.bf16.msra.mxu0 %v2367
        %2403 = vmatprep.subr.bf16.mxu0 0
        %2404 = vmatpush2.bf16.msra.mxu0 0
        %2405 = vmatprep.subr.bf16.mxu0 0
        %2406 = vmatpush2.bf16.msra.mxu0 0
        %2407 = vmatprep.subr.bf16.mxu0 0
        %2408 = vmatpush2.bf16.msra.mxu0 0
        %2409 = vmatprep.subr.bf16.mxu0 0
        %2410 = vmatpush2.bf16.msra.mxu0 0
        %2411 = vmatprep.subr.bf16.mxu0 0
        %2412 = vmatpush2.bf16.msra.mxu0 0
        %2413 = vmatprep.subr.bf16.mxu0 0
        %2414 = vmatpush2.bf16.msra.mxu0 0
        %2415 = vmatprep.subr.bf16.mxu0 0
        %2416 = vmatpush2.bf16.msra.mxu0 0
        %2417 = vmatprep.subr.bf16.mxu0 0
        %2418 = vmatpush2.bf16.msra.mxu0 0
        %2419 = vmatprep.mubr.bf16.mxu0 0
        %2420 = vmatmul.mubr.bf16.gmra.mxu0 %v2376
        %v2421 = vpop.f32.mrf.mxu0
        %v2422 = vadd.f32 %v2349, %v2421
        %v2423 = vpop.f32.mrf.mxu0
        %v2424 = vpop.f32.mrf.mxu0
        %v2425 = vadd.f32 %v2349, %v2424
        %v2426 = vpop.f32.mrf.mxu0
        %2427 = vmatprep.mubr.bf16.mxu0 0
        %2428 = vmatmul.mubr.bf16.gmra.mxu0 %v2379
        %v2429 = vpop.f32.mrf.mxu0
        %v2430 = vadd.f32 %v2349, %v2429
        %v2431 = vpop.f32.mrf.mxu0
        %v2432 = vpop.f32.mrf.mxu0
        %v2433 = vadd.f32 %v2349, %v2432
        %v2434 = vpop.f32.mrf.mxu0
        %2435 = vmatprep.mubr.bf16.mxu0 0
        %2436 = vmatmul.mubr.bf16.gmra.mxu0 %v2382
        %v2437 = vpop.f32.mrf.mxu0
        %v2438 = vadd.f32 %v2349, %v2437
        %v2439 = vpop.f32.mrf.mxu0
        %v2440 = vpop.f32.mrf.mxu0
        %v2441 = vadd.f32 %v2349, %v2440
        %v2442 = vpop.f32.mrf.mxu0
        %2443 = vmatprep.mubr.bf16.mxu0 0
        %2444 = vmatmul.mubr.bf16.gmra.mxu0 %v2385
        %v2445 = vpop.f32.mrf.mxu0
        %v2446 = vadd.f32 %v2349, %v2445
        %v2447 = vpop.f32.mrf.mxu0
        %v2448 = vpop.f32.mrf.mxu0
        %v2449 = vadd.f32 %v2349, %v2448
        %v2450 = vpop.f32.mrf.mxu0
        %2451 = vdwg.mxu0
        %2452 = vst.msk [vmem:[%s542] sm:$0xff] %vm575, %v2422
        %2453 = vst.msk [vmem:[%s542 + $0x8] sm:$0xff] %vm575, %v2425
        %2454 = vst.msk [vmem:[%s542 + $0x10] sm:$0xff] %vm575, %v2430
        %2455 = vst.msk [vmem:[%s542 + $0x18] sm:$0xff] %vm575, %v2433
        %2456 = vst.msk [vmem:[%s542 + $0x20] sm:$0xff] %vm575, %v2438
        %2457 = vst.msk [vmem:[%s542 + $0x28] sm:$0xff] %vm575, %v2441
        %2458 = vst.msk [vmem:[%s542 + $0x30] sm:$0xff] %vm575, %v2446
        %2459 = vst.msk [vmem:[%s542 + $0x38] sm:$0xff] %vm575, %v2449
        %s2460 = sand.u32 %s401, 1
        %s2461 = scalar_lea.sflag [#allocation3], %s2460
        %s2462 = sand.u32 %s401, 1
        %s2463 = smul.addr %s2462, 64
        %s2464 = scalar_lea.vmem [#allocation2], %s2463
        // Predicated region
        $region89: #{conv_mod_forward.1} parent=87 // pred_check
          %p2465 = pneg %p411
        $region90: #{conv_mod_forward.1} parent=87 // pred_check_branch
          %2467 = sbr.rel (%p2465) target = $region92
        $region91: #{conv_mod_forward.1} parent=87 // pred_region
          %s2468 = smul.u32 8, %s31
          %s2470 = ssub.s32 1024, 1024
          %2471 = vsyncadd %s2461, %s2470
          %s2472 = smul.addr %s2468, 128
          %s2473 = scalar_lea.hbm %s17, %s2472
          %s2474 = sshll.u32 %s2464, 4
          %s2475 = int_to_ptr.vmem [resolvable:$true] %s2474
          %2480 = dma.vmem_to_hbm [thread:$0]  %s2475, 1024, %s2473, %s2461, 128, 128, 8
        $region92: #{conv_mod_forward.1} parent=87 // pred_fallthru
          _
      $region88: #{conv_mod_forward.1} parent=5 // pred_fallthru
        _
      %p2481 = scmp.le.s32.totalorder 2, %s26
      // Predicated region
      $region93: #{conv_mod_forward.1} parent=5 // pred_check
        %p2482 = pneg %p2481
      $region94: #{conv_mod_forward.1} parent=5 // pred_check_branch
        %2484 = sbr.rel (%p2482) target = $region96
      $region95: #{conv_mod_forward.1} parent=5 // pred_region
        %s2485 = ssub.s32 %s26, 2
        // Predicated region
        $region97: #{conv_mod_forward.1} parent=95 // pred_check
          %p2486 = pneg %p417
        $region98: #{conv_mod_forward.1} parent=95 // pred_check_branch
          %2488 = sbr.rel (%p2486) target = $region100
        $region99: #{conv_mod_forward.1} parent=95 // pred_region
          %s2489 = sand.u32 %s402, 1
          %s2490 = scalar_lea.sflag [#allocation3], %s2489
          %s2491 = sand.u32 %s402, 1
          %s2492 = smul.addr %s2491, 64
          %s2493 = scalar_lea.vmem [#allocation2], %s2492
          %2494 = dma.done %s2490, 1024
        $region100: #{conv_mod_forward.1} parent=95 // pred_fallthru
          _
      $region96: #{conv_mod_forward.1} parent=5 // pred_fallthru
        _
    $region6: #{conv_mod_forward.1} parent=1 // loop_footer
      %s30 = sadd.s32 1, %s26
    $region7: #{conv_mod_forward.1} parent=1 // loop_footer_branch
      %25 = sbr.rel target = $region3
    $region8: #{conv_mod_forward.1} parent=1 // loop_exit
      _
    %2495 = vsyncpa [#allocation3], 1
    %s2496 = scalar_lea.sflag [#allocation3], 1
    %2497 = vsyncpa %s2496, 1

</llo_original>
